<compile_context>
chip_gen: v5e
topology: v5e:2x2
jax: 0.10.0
libtpu: 0.0.40
codegen_flags: <defaults>
</compile_context>

<pallas_src>
import functools

import numpy as np
import jax
import jax.numpy as jnp
from jax.experimental import pallas as pl
from jax.experimental.pallas import tpu as pltpu

EXPANSION = 4


def _bottleneck_aff_kernel(
    x_ref,              # (C, L)    bf16  activations, L = nb*H*W (sample-major lanes)
    m_ref,              # (9, 1, L) bf16  conv-tap boundary masks
    pool_ref,           # (L, nb)   bf16  per-sample sum-pool matrix (entries 1.0)
    bcast_ref,          # (nb, L)   bf16  per-sample broadcast matrix (entries 1.0)
    w1_ref, b1_ref,     # conv1+bn1: (P, C)   bf16, (P, 1)  f32
    w2_ref, b2_ref,     # conv2+bn2: (P, 9P)  bf16, (P, 1)  f32
    w3_ref, b3_ref,     # conv3+bn3: (C4, P)  bf16, (C4, 1) f32
    wl1_ref, bl1_ref,   # AFF local att conv1: (I, C4) bf16, (I, 1) f32
    wl2_ref, bl2_ref,   # AFF local att conv2: (C4, I) bf16, (C4, 1) f32
    wg1_ref, bg1_ref,   # AFF global att conv1
    wg2_ref, bg2_ref,   # AFF global att conv2
    o_ref,              # (C4, L)   f32
    tap_ref,            # VMEM scratch (9P, L) bf16 -- conv2 operand slab
    *, H, W, P, inv_hw,
):
    bf16 = jnp.bfloat16
    f32 = jnp.float32
    L = x_ref.shape[1]

    x_bf = x_ref[...]                              # (C, L) bf16, lane-dense
    res = x_bf.astype(f32)                         # identity shortcut (f32 blend math)

    # ---- conv1 (1x1) + bn1 + relu -------------------------------------------
    h1 = jnp.dot(w1_ref[...], x_bf, preferred_element_type=f32)
    h1 = jnp.maximum(h1 + b1_ref[...], 0.0)        # (P, L) f32

    # ---- conv2 (3x3, stride 1, pad 1) + bn2 + relu --------------------------
    # Nine lane-rolled taps written directly into a bf16 VMEM scratch slab.
    # Boundary positions (including rolls that cross a sample boundary) are
    # zeroed by the masks, so the circular roll is exact.  Mask multiply runs
    # in bf16 (bf16 VALU path on v6e/v7x); masks are 0/1 so it is lossless.
    k = 0
    for dy in (-1, 0, 1):
        for dx in (-1, 0, 1):
            s = dy * W + dx
            tap = h1 if s == 0 else pltpu.roll(h1, (-s) % L, axis=1)
            tap_bf = tap.astype(bf16)
            if s != 0:
                tap_bf = tap_bf * m_ref[k]
            tap_ref[pl.ds(k * P, P), :] = tap_bf   # 16-row aligned bf16 store
            k += 1
    h2 = jnp.dot(w2_ref[...], tap_ref[...], preferred_element_type=f32)
    h2 = jnp.maximum(h2 + b2_ref[...], 0.0)        # (P, L)

    # ---- conv3 (1x1) + bn3 ---------------------------------------------------
    h3 = jnp.dot(w3_ref[...], h2.astype(bf16), preferred_element_type=f32)
    h3 = h3 + b3_ref[...]                          # (C4, L)

    # ---- AFF fuse ------------------------------------------------------------
    xa = h3 + res
    xa_bf = xa.astype(bf16)

    # local attention (per-pixel channel MLP)
    l1 = jnp.dot(wl1_ref[...], xa_bf, preferred_element_type=f32)
    l1 = jnp.maximum(l1 + bl1_ref[...], 0.0)       # (I, L)
    xl = jnp.dot(wl2_ref[...], l1.astype(bf16), preferred_element_type=f32)
    xl = xl + bl2_ref[...]                         # (C4, L)

    # global attention: per-sample segmented mean via pooling matmul,
    # MLP on nb lanes, broadcast back to full lanes via an MXU matmul.
    ga = jnp.dot(xa_bf, pool_ref[...], preferred_element_type=f32) * inv_hw   # (C4, nb)
    g1 = jnp.dot(wg1_ref[...], ga.astype(bf16), preferred_element_type=f32)
    g1 = jnp.maximum(g1 + bg1_ref[...], 0.0)       # (I, nb)
    xg = jnp.dot(wg2_ref[...], g1.astype(bf16), preferred_element_type=f32)
    xg = xg + bg2_ref[...]                         # (C4, nb)
    xg_full = jnp.dot(xg.astype(bf16), bcast_ref[...], preferred_element_type=f32)  # (C4, L)

    # sigmoid on the EUP: exp + approx reciprocal (no VALU Newton divide)
    wei = pl.reciprocal(1.0 + jnp.exp(-(xl + xg_full)), approx=True)

    # 2*h3*wei + 2*res*(1-wei) == 2*(res + wei*(h3 - res))
    out = 2.0 * (res + wei * (h3 - res))
    o_ref[...] = jnp.maximum(out, 0.0)             # final ReLU, lane-dense f32 store


def prepare_kernel_params(params):
    """Fold BN scale into conv weights, transpose to channels-first matmul
    layout, flatten the 3x3 taps into (P, 9P), and cast weights to bf16."""
    (w1, s1, b1, w2, s2, b2, w3, s3, b3,
     wl1, sl1, bl1, wl2, sl2, bl2,
     wg1, sg1, bg1, wg2, sg2, bg2) = params
    bf16 = jnp.bfloat16

    def fold_t(w, s):                 # (Cin, Cout), (1, Cout) -> bf16 (Cout, Cin)
        return jnp.transpose(w * s).astype(bf16)

    def col(b):                       # (1, Cout) -> f32 (Cout, 1)
        return jnp.transpose(b).astype(jnp.float32)

    cout = w2.shape[3]
    cin = w2.shape[2]
    # (3,3,Cin,Cout)*scale -> (Cout, ky, kx, Cin) -> (Cout, 9*Cin); row order
    # matches the (dy, dx) tap concatenation order in the kernel.
    w2cf = jnp.transpose(w2 * s2, (3, 0, 1, 2)).reshape(cout, 9 * cin)
    return (fold_t(w1, s1), col(b1),
            w2cf.astype(bf16), col(b2),
            fold_t(w3, s3), col(b3),
            fold_t(wl1, sl1), col(bl1),
            fold_t(wl2, sl2), col(bl2),
            fold_t(wg1, sg1), col(bg1),
            fold_t(wg2, sg2), col(bg2))


def _conv_tap_masks(H, W):
    """(9, 1, H*W) f32 masks: 1.0 where the (dy,dx)-shifted tap is in-bounds."""
    yy = np.arange(H).reshape(H, 1)
    xx = np.arange(W).reshape(1, W)
    mlist = []
    for dy in (-1, 0, 1):
        for dx in (-1, 0, 1):
            ok = ((yy + dy >= 0) & (yy + dy < H) &
                  (xx + dx >= 0) & (xx + dx < W))
            mlist.append(ok.astype(np.float32).reshape(1, H * W))
    return np.stack(mlist, axis=0)


def bottleneck_aff(x_nchw, params, samples_per_step=None):
    """x_nchw: (N, C, H, W) f32, PyTorch layout.  Returns (N, C, H, W) f32."""
    N, C, H, W = x_nchw.shape
    HW = H * W
    kparams = prepare_kernel_params(params)
    P = kparams[0].shape[0]
    C4 = kparams[4].shape[0]
    inter = kparams[6].shape[0]
    assert C4 == C, "identity shortcut requires inplanes == planes * expansion"
    # bf16 sublane tile is (16, 128): 16-row tap granularity keeps the bf16
    # scratch writes tile-aligned on v6e/v7x.
    assert P % 16 == 0, "planes must be a multiple of 16 for the bf16 tap scratch"
    assert HW % 128 == 0, "H*W must be a multiple of 128 for lane-dense stores"
    # TODO(synk): pad HW to a multiple of 128 (and exclude pad columns from the
    # global mean) for spatial sizes that are not already 128-aligned.

    # Samples folded into lanes per grid step (amortizes per-step overhead).
    if samples_per_step is None:
        samples_per_step = max(1, min(N, 2048 // HW))
    nb = samples_per_step
    while N % nb:
        nb -= 1
    L = nb * HW
    steps = N // nb

    bf16 = jnp.bfloat16
    masks = jnp.asarray(np.tile(_conv_tap_masks(H, W), (1, 1, nb)), bf16)   # (9,1,L)
    seg = np.zeros((L, nb), np.float32)
    for s in range(nb):
        seg[s * HW:(s + 1) * HW, s] = 1.0
    pool = jnp.asarray(seg, bf16)          # (L, nb)  sum-pool (divide by HW in-kernel)
    bcast = jnp.asarray(seg.T, bf16)       # (nb, L)  per-sample broadcast

    # channels-first, batch folded into lanes, bf16 HBM I/O for the input
    x_cf = jnp.transpose(x_nchw.reshape(N, C, HW), (1, 0, 2)).reshape(C, N * HW)
    x_cf = x_cf.astype(bf16)

    # VMEM budgeting (explicit limit; matters on v7x with 64 MiB physical).
    weight_bytes = sum(int(p.size) * p.dtype.itemsize for p in kparams)
    block_bytes = C * L * 2 + C4 * L * 4 + masks.size * 2 + pool.size * 2 + bcast.size * 2
    scratch_bytes = 9 * P * L * 2
    vmem_need = 2 * (block_bytes + weight_bytes) + scratch_bytes + (8 << 20)
    vmem_limit = int(min(100 * 1024 * 1024, max(32 * 1024 * 1024, vmem_need)))

    # Advisory cost estimate for XLA's scheduler.
    L_tot = N * HW
    flops = (2 * L_tot * (C * P + 9 * P * P + P * C4 + C4 * inter + inter * C4)
             + 2 * L_tot * C4 * nb * 2           # pool + broadcast matmuls
             + 2 * N * (C4 * inter + inter * C4))
    transcendentals = 2 * C4 * L_tot             # exp + reciprocal per output element
    bytes_accessed = int(x_cf.size * 2 + C4 * L_tot * 4
                         + masks.size * 2 + pool.size * 2 + bcast.size * 2
                         + weight_bytes)

    kernel = functools.partial(_bottleneck_aff_kernel, H=H, W=W, P=P, inv_hw=1.0 / HW)

    in_specs = [pl.BlockSpec((C, L), lambda i: (0, i)),
                pl.BlockSpec(masks.shape, lambda i: (0, 0, 0)),
                pl.BlockSpec(pool.shape, lambda i: (0, 0)),
                pl.BlockSpec(bcast.shape, lambda i: (0, 0))]
    in_specs += [pl.BlockSpec(p.shape, lambda i, _nd=p.ndim: (0,) * _nd)
                 for p in kparams]

    out = pl.pallas_call(
        kernel,
        out_shape=jax.ShapeDtypeStruct((C4, N * HW), jnp.float32),
        grid_spec=pltpu.PrefetchScalarGridSpec(
            num_scalar_prefetch=0,
            grid=(steps,),
            in_specs=in_specs,
            out_specs=pl.BlockSpec((C4, L), lambda i: (0, i)),
            scratch_shapes=[pltpu.VMEM((9 * P, L), bf16)],
        ),
        compiler_params=pltpu.CompilerParams(
            dimension_semantics=("parallel",),
            vmem_limit_bytes=vmem_limit),
        cost_estimate=pl.CostEstimate(
            flops=int(flops),
            transcendentals=int(transcendentals),
            bytes_accessed=bytes_accessed),
    )(x_cf, masks, pool, bcast, *kparams)

    return jnp.transpose(out.reshape(C4, N, HW), (1, 0, 2)).reshape(N, C4, H, W)


def make_params(key, inplanes, planes):
    c4 = planes * EXPANSION
    inter = c4 // 4            # AFF uses r=4
    keys = iter(jax.random.split(key, 64))

    def conv_w(shape):
        return jax.random.normal(next(keys), shape, jnp.float32) * 0.1

    def bn(c):
        gamma = jax.random.uniform(next(keys), (c,), jnp.float32, 0.5, 1.5)
        beta = jax.random.normal(next(keys), (c,), jnp.float32) * 0.1
        mean = jax.random.normal(next(keys), (c,), jnp.float32) * 0.1
        var = jax.random.uniform(next(keys), (c,), jnp.float32, 0.5, 1.5)
        return gamma, beta, mean, var

    def fold(bn_params, conv_bias=None, eps=1e-5):
        gamma, beta, mean, var = bn_params
        scale = gamma / jnp.sqrt(var + eps)
        bias = beta - mean * scale
        if conv_bias is not None:
            bias = bias + conv_bias * scale
        return scale.reshape(1, -1), bias.reshape(1, -1)

    # main path (convs are bias-free in the Bottleneck)
    w1 = conv_w((inplanes, planes))
    s1, b1 = fold(bn(planes))
    w2 = conv_w((3, 3, planes, planes))
    s2, b2 = fold(bn(planes))
    w3 = conv_w((planes, c4))
    s3, b3 = fold(bn(c4))

    # AFF local attention (1x1 convs with bias, folded through the BN)
    wl1 = conv_w((c4, inter))
    bl1_conv = jax.random.normal(next(keys), (inter,), jnp.float32) * 0.1
    sl1, bl1 = fold(bn(inter), bl1_conv)
    wl2 = conv_w((inter, c4))
    bl2_conv = jax.random.normal(next(keys), (c4,), jnp.float32) * 0.1
    sl2, bl2 = fold(bn(c4), bl2_conv)

    # AFF global attention
    wg1 = conv_w((c4, inter))
    bg1_conv = jax.random.normal(next(keys), (inter,), jnp.float32) * 0.1
    sg1, bg1 = fold(bn(inter), bg1_conv)
    wg2 = conv_w((inter, c4))
    bg2_conv = jax.random.normal(next(keys), (c4,), jnp.float32) * 0.1
    sg2, bg2 = fold(bn(c4), bg2_conv)

    return (w1, s1, b1, w2, s2, b2, w3, s3, b3,
            wl1, sl1, bl1, wl2, sl2, bl2,
            wg1, sg1, bg1, wg2, sg2, bg2)


def reference(x_nchw, params):
    """Pure-JAX reference (channels-last, padded-slab conv) mirroring the
    kernel's bf16-operand / f32-accumulate matmul precision, the bf16
    activation input, and the bf16-quantized global-attention path."""
    (w1, s1, b1, w2, s2, b2, w3, s3, b3,
     wl1, sl1, bl1, wl2, sl2, bl2,
     wg1, sg1, bg1, wg2, sg2, bg2) = params
    bf16 = jnp.bfloat16
    f32 = jnp.float32
    N, C, H, W = x_nchw.shape
    P = w1.shape[1]
    C4 = w3.shape[1]
    # mirror the kernel's bf16 activation input
    x2 = jnp.transpose(x_nchw.reshape(N, C, H * W), (0, 2, 1)).astype(bf16).astype(f32)

    def mm(a, w):
        return jnp.dot(a.astype(bf16), w.astype(bf16), preferred_element_type=f32)

    h1 = jnp.maximum(mm(x2, w1 * s1) + b1, 0.0)
    h1p = jnp.pad(h1.reshape(N, H, W, P), ((0, 0), (1, 1), (1, 1), (0, 0)))
    w2f = w2 * s2
    acc = jnp.zeros((N, H * W, P), f32)
    for ky in range(3):
        for kx in range(3):
            tap = h1p[:, ky:ky + H, kx:kx + W, :].reshape(N, H * W, P)
            acc = acc + mm(tap, w2f[ky, kx])
    h2 = jnp.maximum(acc + b2, 0.0)
    h3 = mm(h2, w3 * s3) + b3
    res = x2
    xa = h3 + res
    xl = mm(jnp.maximum(mm(xa, wl1 * sl1) + bl1, 0.0), wl2 * sl2) + bl2
    ga = jnp.mean(xa.astype(bf16).astype(f32), axis=1, keepdims=True)   # bf16 pooled operand
    xg = mm(jnp.maximum(mm(ga, wg1 * sg1) + bg1, 0.0), wg2 * sg2) + bg2
    xg = xg.astype(bf16).astype(f32)                                    # bf16 broadcast matmul
    wei = jax.nn.sigmoid(xl + xg)
    out = jnp.maximum(2.0 * (res + wei * (h3 - res)), 0.0)
    return jnp.transpose(out, (0, 2, 1)).reshape(N, C4, H, W)


if __name__ == "__main__":
    key = jax.random.PRNGKey(0)
    kx, kp = jax.random.split(key)

    N, H, W = 2, 16, 16
    planes = 16                        # multiple of 16 -> aligned bf16 tap scratch
    inplanes = planes * EXPANSION      # identity shortcut => inplanes == planes*4

    x = jax.random.normal(kx, (N, inplanes, H, W), jnp.float32)   # NCHW like PyTorch
    params = make_params(kp, inplanes, planes)

    out = jax.block_until_ready(bottleneck_aff(x, params))
    ref = jax.block_until_ready(reference(x, params))

    assert out.shape == (N, inplanes, H, W)
    # Tolerance covers bf16-operand rounding / accumulation-order differences
    # and the EUP approximate reciprocal in the sigmoid.
    if not np.allclose(np.asarray(out), np.asarray(ref), atol=3e-2, rtol=3e-2):
        err = float(np.max(np.abs(np.asarray(out) - np.asarray(ref))))
        raise AssertionError(f"Pallas kernel does not match reference (max abs err {err})")
    print("KERNEL_OK")
</pallas_src>

<mosaic_0001>
module attributes {stable_mosaic.version = 11 : i64} {
  func.func @_bottleneck_aff_kernel(%arg0: i32, %arg1: memref<64x512xbf16, #tpu.memory_space<vmem>>, %arg2: memref<9x1x512xbf16, #tpu.memory_space<vmem>>, %arg3: memref<512x2xbf16, #tpu.memory_space<vmem>>, %arg4: memref<2x512xbf16, #tpu.memory_space<vmem>>, %arg5: memref<16x64xbf16, #tpu.memory_space<vmem>>, %arg6: memref<16x1xf32, #tpu.memory_space<vmem>>, %arg7: memref<16x144xbf16, #tpu.memory_space<vmem>>, %arg8: memref<16x1xf32, #tpu.memory_space<vmem>>, %arg9: memref<64x16xbf16, #tpu.memory_space<vmem>>, %arg10: memref<64x1xf32, #tpu.memory_space<vmem>>, %arg11: memref<16x64xbf16, #tpu.memory_space<vmem>>, %arg12: memref<16x1xf32, #tpu.memory_space<vmem>>, %arg13: memref<64x16xbf16, #tpu.memory_space<vmem>>, %arg14: memref<64x1xf32, #tpu.memory_space<vmem>>, %arg15: memref<16x64xbf16, #tpu.memory_space<vmem>>, %arg16: memref<16x1xf32, #tpu.memory_space<vmem>>, %arg17: memref<64x16xbf16, #tpu.memory_space<vmem>>, %arg18: memref<64x1xf32, #tpu.memory_space<vmem>>, %arg19: memref<64x512xf32, #tpu.memory_space<vmem>>, %arg20: memref<144x512xbf16, #tpu.memory_space<vmem>>) attributes {dimension_semantics = [#tpu.dimension_semantics<parallel>], iteration_bounds = array<i64: 1>, scalar_prefetch = 0 : i64, scratch_operands = 1 : i64, tpu.core_type = #tpu.core_type<tc>, window_params = [{transform_indices = @transform_0, window_bounds = array<i64: 64, 512>}, {pipeline_mode = #tpu.pipeline_mode<synchronous>, transform_indices = @transform_1, window_bounds = array<i64: 9, 1, 512>}, {pipeline_mode = #tpu.pipeline_mode<synchronous>, transform_indices = @transform_2, window_bounds = array<i64: 512, 2>}, {pipeline_mode = #tpu.pipeline_mode<synchronous>, transform_indices = @transform_3, window_bounds = array<i64: 2, 512>}, {pipeline_mode = #tpu.pipeline_mode<synchronous>, transform_indices = @transform_4, window_bounds = array<i64: 16, 64>}, {pipeline_mode = #tpu.pipeline_mode<synchronous>, transform_indices = @transform_5, window_bounds = array<i64: 16, 1>}, {pipeline_mode = #tpu.pipeline_mode<synchronous>, transform_indices = @transform_6, window_bounds = array<i64: 16, 144>}, {pipeline_mode = #tpu.pipeline_mode<synchronous>, transform_indices = @transform_7, window_bounds = array<i64: 16, 1>}, {pipeline_mode = #tpu.pipeline_mode<synchronous>, transform_indices = @transform_8, window_bounds = array<i64: 64, 16>}, {pipeline_mode = #tpu.pipeline_mode<synchronous>, transform_indices = @transform_9, window_bounds = array<i64: 64, 1>}, {pipeline_mode = #tpu.pipeline_mode<synchronous>, transform_indices = @transform_10, window_bounds = array<i64: 16, 64>}, {pipeline_mode = #tpu.pipeline_mode<synchronous>, transform_indices = @transform_11, window_bounds = array<i64: 16, 1>}, {pipeline_mode = #tpu.pipeline_mode<synchronous>, transform_indices = @transform_12, window_bounds = array<i64: 64, 16>}, {pipeline_mode = #tpu.pipeline_mode<synchronous>, transform_indices = @transform_13, window_bounds = array<i64: 64, 1>}, {pipeline_mode = #tpu.pipeline_mode<synchronous>, transform_indices = @transform_14, window_bounds = array<i64: 16, 64>}, {pipeline_mode = #tpu.pipeline_mode<synchronous>, transform_indices = @transform_15, window_bounds = array<i64: 16, 1>}, {pipeline_mode = #tpu.pipeline_mode<synchronous>, transform_indices = @transform_16, window_bounds = array<i64: 64, 16>}, {pipeline_mode = #tpu.pipeline_mode<synchronous>, transform_indices = @transform_17, window_bounds = array<i64: 64, 1>}, {transform_indices = @transform_18, window_bounds = array<i64: 64, 512>}]} {
    %c0 = arith.constant 0 : index
    %c0_0 = arith.constant 0 : index
    %0 = vector.load %arg1[%c0, %c0_0] : memref<64x512xbf16, #tpu.memory_space<vmem>>, vector<64x512xbf16>
    %1 = arith.extf %0 : vector<64x512xbf16> to vector<64x512xf32>
    %c0_1 = arith.constant 0 : index
    %c0_2 = arith.constant 0 : index
    %2 = vector.load %arg5[%c0_1, %c0_2] : memref<16x64xbf16, #tpu.memory_space<vmem>>, vector<16x64xbf16>
    %cst = arith.constant dense<0.000000e+00> : vector<16x512xf32>
    %3 = tpu.matmul %2, %0, %cst {dimension_numbers = #tpu.dot_dimension_numbers<[1], [0], [0], [1], [0, 0, 1, 1], [], []>} : vector<16x64xbf16>, vector<64x512xbf16>, vector<16x512xf32> -> vector<16x512xf32>
    %c0_3 = arith.constant 0 : index
    %c0_4 = arith.constant 0 : index
    %4 = vector.load %arg6[%c0_3, %c0_4] : memref<16x1xf32, #tpu.memory_space<vmem>>, vector<16x1xf32>
    %5 = vector.broadcast %4 : vector<16x1xf32> to vector<16x512xf32>
    %6 = arith.addf %3, %5 : vector<16x512xf32>
    %cst_5 = arith.constant 0.000000e+00 : f32
    %7 = vector.broadcast %cst_5 : f32 to vector<16x512xf32>
    %8 = arith.maximumf %6, %7 : vector<16x512xf32>
    %c17_i32 = arith.constant 17 : i32
    %9 = tpu.dynamic_rotate %8 by %c17_i32 dim 1 : vector<16x512xf32>, i32 -> vector<16x512xf32>
    %10 = arith.truncf %9 : vector<16x512xf32> to vector<16x512xbf16>
    %c0_6 = arith.constant 0 : index
    %c0_7 = arith.constant 0 : index
    %c0_8 = arith.constant 0 : index
    %11 = vector.load %arg2[%c0_6, %c0_7, %c0_8] : memref<9x1x512xbf16, #tpu.memory_space<vmem>>, vector<1x1x512xbf16>
    %12 = vector.shape_cast %11 : vector<1x1x512xbf16> to vector<1x512xbf16>
    %13 = vector.broadcast %12 : vector<1x512xbf16> to vector<16x512xbf16>
    %14 = arith.mulf %10, %13 : vector<16x512xbf16>
    %c0_9 = arith.constant 0 : index
    %c0_10 = arith.constant 0 : index
    %15 = vector.load %arg20[%c0_9, %c0_10] : memref<144x512xbf16, #tpu.memory_space<vmem>>, vector<16x512xbf16>
    tpu.vector_store %arg20[%c0_9, %c0_10], %14 {strides = array<i32>} : memref<144x512xbf16, #tpu.memory_space<vmem>>, vector<16x512xbf16>,
    %c16_i32 = arith.constant 16 : i32
    %16 = tpu.dynamic_rotate %8 by %c16_i32 dim 1 : vector<16x512xf32>, i32 -> vector<16x512xf32>
    %17 = arith.truncf %16 : vector<16x512xf32> to vector<16x512xbf16>
    %c1 = arith.constant 1 : index
    %c0_11 = arith.constant 0 : index
    %c0_12 = arith.constant 0 : index
    %18 = vector.load %arg2[%c1, %c0_11, %c0_12] : memref<9x1x512xbf16, #tpu.memory_space<vmem>>, vector<1x1x512xbf16>
    %19 = vector.shape_cast %18 : vector<1x1x512xbf16> to vector<1x512xbf16>
    %20 = vector.broadcast %19 : vector<1x512xbf16> to vector<16x512xbf16>
    %21 = arith.mulf %17, %20 : vector<16x512xbf16>
    %c16 = arith.constant 16 : index
    %c0_13 = arith.constant 0 : index
    %22 = vector.load %arg20[%c16, %c0_13] : memref<144x512xbf16, #tpu.memory_space<vmem>>, vector<16x512xbf16>
    tpu.vector_store %arg20[%c16, %c0_13], %21 {strides = array<i32>} : memref<144x512xbf16, #tpu.memory_space<vmem>>, vector<16x512xbf16>,
    %c15_i32 = arith.constant 15 : i32
    %23 = tpu.dynamic_rotate %8 by %c15_i32 dim 1 : vector<16x512xf32>, i32 -> vector<16x512xf32>
    %24 = arith.truncf %23 : vector<16x512xf32> to vector<16x512xbf16>
    %c2 = arith.constant 2 : index
    %c0_14 = arith.constant 0 : index
    %c0_15 = arith.constant 0 : index
    %25 = vector.load %arg2[%c2, %c0_14, %c0_15] : memref<9x1x512xbf16, #tpu.memory_space<vmem>>, vector<1x1x512xbf16>
    %26 = vector.shape_cast %25 : vector<1x1x512xbf16> to vector<1x512xbf16>
    %27 = vector.broadcast %26 : vector<1x512xbf16> to vector<16x512xbf16>
    %28 = arith.mulf %24, %27 : vector<16x512xbf16>
    %c32 = arith.constant 32 : index
    %c0_16 = arith.constant 0 : index
    %29 = vector.load %arg20[%c32, %c0_16] : memref<144x512xbf16, #tpu.memory_space<vmem>>, vector<16x512xbf16>
    tpu.vector_store %arg20[%c32, %c0_16], %28 {strides = array<i32>} : memref<144x512xbf16, #tpu.memory_space<vmem>>, vector<16x512xbf16>,
    %c1_i32 = arith.constant 1 : i32
    %30 = tpu.dynamic_rotate %8 by %c1_i32 dim 1 : vector<16x512xf32>, i32 -> vector<16x512xf32>
    %31 = arith.truncf %30 : vector<16x512xf32> to vector<16x512xbf16>
    %c3 = arith.constant 3 : index
    %c0_17 = arith.constant 0 : index
    %c0_18 = arith.constant 0 : index
    %32 = vector.load %arg2[%c3, %c0_17, %c0_18] : memref<9x1x512xbf16, #tpu.memory_space<vmem>>, vector<1x1x512xbf16>
    %33 = vector.shape_cast %32 : vector<1x1x512xbf16> to vector<1x512xbf16>
    %34 = vector.broadcast %33 : vector<1x512xbf16> to vector<16x512xbf16>
    %35 = arith.mulf %31, %34 : vector<16x512xbf16>
    %c48 = arith.constant 48 : index
    %c0_19 = arith.constant 0 : index
    %36 = vector.load %arg20[%c48, %c0_19] : memref<144x512xbf16, #tpu.memory_space<vmem>>, vector<16x512xbf16>
    tpu.vector_store %arg20[%c48, %c0_19], %35 {strides = array<i32>} : memref<144x512xbf16, #tpu.memory_space<vmem>>, vector<16x512xbf16>,
    %37 = arith.truncf %8 : vector<16x512xf32> to vector<16x512xbf16>
    %c64 = arith.constant 64 : index
    %c0_20 = arith.constant 0 : index
    %38 = vector.load %arg20[%c64, %c0_20] : memref<144x512xbf16, #tpu.memory_space<vmem>>, vector<16x512xbf16>
    tpu.vector_store %arg20[%c64, %c0_20], %37 {strides = array<i32>} : memref<144x512xbf16, #tpu.memory_space<vmem>>, vector<16x512xbf16>,
    %c511_i32 = arith.constant 511 : i32
    %39 = tpu.dynamic_rotate %8 by %c511_i32 dim 1 : vector<16x512xf32>, i32 -> vector<16x512xf32>
    %40 = arith.truncf %39 : vector<16x512xf32> to vector<16x512xbf16>
    %c5 = arith.constant 5 : index
    %c0_21 = arith.constant 0 : index
    %c0_22 = arith.constant 0 : index
    %41 = vector.load %arg2[%c5, %c0_21, %c0_22] : memref<9x1x512xbf16, #tpu.memory_space<vmem>>, vector<1x1x512xbf16>
    %42 = vector.shape_cast %41 : vector<1x1x512xbf16> to vector<1x512xbf16>
    %43 = vector.broadcast %42 : vector<1x512xbf16> to vector<16x512xbf16>
    %44 = arith.mulf %40, %43 : vector<16x512xbf16>
    %c80 = arith.constant 80 : index
    %c0_23 = arith.constant 0 : index
    %45 = vector.load %arg20[%c80, %c0_23] : memref<144x512xbf16, #tpu.memory_space<vmem>>, vector<16x512xbf16>
    tpu.vector_store %arg20[%c80, %c0_23], %44 {strides = array<i32>} : memref<144x512xbf16, #tpu.memory_space<vmem>>, vector<16x512xbf16>,
    %c497_i32 = arith.constant 497 : i32
    %46 = tpu.dynamic_rotate %8 by %c497_i32 dim 1 : vector<16x512xf32>, i32 -> vector<16x512xf32>
    %47 = arith.truncf %46 : vector<16x512xf32> to vector<16x512xbf16>
    %c6 = arith.constant 6 : index
    %c0_24 = arith.constant 0 : index
    %c0_25 = arith.constant 0 : index
    %48 = vector.load %arg2[%c6, %c0_24, %c0_25] : memref<9x1x512xbf16, #tpu.memory_space<vmem>>, vector<1x1x512xbf16>
    %49 = vector.shape_cast %48 : vector<1x1x512xbf16> to vector<1x512xbf16>
    %50 = vector.broadcast %49 : vector<1x512xbf16> to vector<16x512xbf16>
    %51 = arith.mulf %47, %50 : vector<16x512xbf16>
    %c96 = arith.constant 96 : index
    %c0_26 = arith.constant 0 : index
    %52 = vector.load %arg20[%c96, %c0_26] : memref<144x512xbf16, #tpu.memory_space<vmem>>, vector<16x512xbf16>
    tpu.vector_store %arg20[%c96, %c0_26], %51 {strides = array<i32>} : memref<144x512xbf16, #tpu.memory_space<vmem>>, vector<16x512xbf16>,
    %c496_i32 = arith.constant 496 : i32
    %53 = tpu.dynamic_rotate %8 by %c496_i32 dim 1 : vector<16x512xf32>, i32 -> vector<16x512xf32>
    %54 = arith.truncf %53 : vector<16x512xf32> to vector<16x512xbf16>
    %c7 = arith.constant 7 : index
    %c0_27 = arith.constant 0 : index
    %c0_28 = arith.constant 0 : index
    %55 = vector.load %arg2[%c7, %c0_27, %c0_28] : memref<9x1x512xbf16, #tpu.memory_space<vmem>>, vector<1x1x512xbf16>
    %56 = vector.shape_cast %55 : vector<1x1x512xbf16> to vector<1x512xbf16>
    %57 = vector.broadcast %56 : vector<1x512xbf16> to vector<16x512xbf16>
    %58 = arith.mulf %54, %57 : vector<16x512xbf16>
    %c112 = arith.constant 112 : index
    %c0_29 = arith.constant 0 : index
    %59 = vector.load %arg20[%c112, %c0_29] : memref<144x512xbf16, #tpu.memory_space<vmem>>, vector<16x512xbf16>
    tpu.vector_store %arg20[%c112, %c0_29], %58 {strides = array<i32>} : memref<144x512xbf16, #tpu.memory_space<vmem>>, vector<16x512xbf16>,
    %c495_i32 = arith.constant 495 : i32
    %60 = tpu.dynamic_rotate %8 by %c495_i32 dim 1 : vector<16x512xf32>, i32 -> vector<16x512xf32>
    %61 = arith.truncf %60 : vector<16x512xf32> to vector<16x512xbf16>
    %c8 = arith.constant 8 : index
    %c0_30 = arith.constant 0 : index
    %c0_31 = arith.constant 0 : index
    %62 = vector.load %arg2[%c8, %c0_30, %c0_31] : memref<9x1x512xbf16, #tpu.memory_space<vmem>>, vector<1x1x512xbf16>
    %63 = vector.shape_cast %62 : vector<1x1x512xbf16> to vector<1x512xbf16>
    %64 = vector.broadcast %63 : vector<1x512xbf16> to vector<16x512xbf16>
    %65 = arith.mulf %61, %64 : vector<16x512xbf16>
    %c128 = arith.constant 128 : index
    %c0_32 = arith.constant 0 : index
    %66 = vector.load %arg20[%c128, %c0_32] : memref<144x512xbf16, #tpu.memory_space<vmem>>, vector<16x512xbf16>
    tpu.vector_store %arg20[%c128, %c0_32], %65 {strides = array<i32>} : memref<144x512xbf16, #tpu.memory_space<vmem>>, vector<16x512xbf16>,
    %c0_33 = arith.constant 0 : index
    %c0_34 = arith.constant 0 : index
    %67 = vector.load %arg7[%c0_33, %c0_34] : memref<16x144xbf16, #tpu.memory_space<vmem>>, vector<16x144xbf16>
    %c0_35 = arith.constant 0 : index
    %c0_36 = arith.constant 0 : index
    %68 = vector.load %arg20[%c0_35, %c0_36] : memref<144x512xbf16, #tpu.memory_space<vmem>>, vector<144x512xbf16>
    %cst_37 = arith.constant dense<0.000000e+00> : vector<16x512xf32>
    %69 = tpu.matmul %67, %68, %cst_37 {dimension_numbers = #tpu.dot_dimension_numbers<[1], [0], [0], [1], [0, 0, 1, 1], [], []>} : vector<16x144xbf16>, vector<144x512xbf16>, vector<16x512xf32> -> vector<16x512xf32>
    %c0_38 = arith.constant 0 : index
    %c0_39 = arith.constant 0 : index
    %70 = vector.load %arg8[%c0_38, %c0_39] : memref<16x1xf32, #tpu.memory_space<vmem>>, vector<16x1xf32>
    %71 = vector.broadcast %70 : vector<16x1xf32> to vector<16x512xf32>
    %72 = arith.addf %69, %71 : vector<16x512xf32>
    %cst_40 = arith.constant 0.000000e+00 : f32
    %73 = vector.broadcast %cst_40 : f32 to vector<16x512xf32>
    %74 = arith.maximumf %72, %73 : vector<16x512xf32>
    %c0_41 = arith.constant 0 : index
    %c0_42 = arith.constant 0 : index
    %75 = vector.load %arg9[%c0_41, %c0_42] : memref<64x16xbf16, #tpu.memory_space<vmem>>, vector<64x16xbf16>
    %76 = arith.truncf %74 : vector<16x512xf32> to vector<16x512xbf16>
    %cst_43 = arith.constant dense<0.000000e+00> : vector<64x512xf32>
    %77 = tpu.matmul %75, %76, %cst_43 {dimension_numbers = #tpu.dot_dimension_numbers<[1], [0], [0], [1], [0, 0, 1, 1], [], []>} : vector<64x16xbf16>, vector<16x512xbf16>, vector<64x512xf32> -> vector<64x512xf32>
    %c0_44 = arith.constant 0 : index
    %c0_45 = arith.constant 0 : index
    %78 = vector.load %arg10[%c0_44, %c0_45] : memref<64x1xf32, #tpu.memory_space<vmem>>, vector<64x1xf32>
    %79 = vector.broadcast %78 : vector<64x1xf32> to vector<64x512xf32>
    %80 = arith.addf %77, %79 : vector<64x512xf32>
    %81 = arith.addf %80, %1 : vector<64x512xf32>
    %82 = arith.truncf %81 : vector<64x512xf32> to vector<64x512xbf16>
    %c0_46 = arith.constant 0 : index
    %c0_47 = arith.constant 0 : index
    %83 = vector.load %arg11[%c0_46, %c0_47] : memref<16x64xbf16, #tpu.memory_space<vmem>>, vector<16x64xbf16>
    %cst_48 = arith.constant dense<0.000000e+00> : vector<16x512xf32>
    %84 = tpu.matmul %83, %82, %cst_48 {dimension_numbers = #tpu.dot_dimension_numbers<[1], [0], [0], [1], [0, 0, 1, 1], [], []>} : vector<16x64xbf16>, vector<64x512xbf16>, vector<16x512xf32> -> vector<16x512xf32>
    %c0_49 = arith.constant 0 : index
    %c0_50 = arith.constant 0 : index
    %85 = vector.load %arg12[%c0_49, %c0_50] : memref<16x1xf32, #tpu.memory_space<vmem>>, vector<16x1xf32>
    %86 = vector.broadcast %85 : vector<16x1xf32> to vector<16x512xf32>
    %87 = arith.addf %84, %86 : vector<16x512xf32>
    %cst_51 = arith.constant 0.000000e+00 : f32
    %88 = vector.broadcast %cst_51 : f32 to vector<16x512xf32>
    %89 = arith.maximumf %87, %88 : vector<16x512xf32>
    %c0_52 = arith.constant 0 : index
    %c0_53 = arith.constant 0 : index
    %90 = vector.load %arg13[%c0_52, %c0_53] : memref<64x16xbf16, #tpu.memory_space<vmem>>, vector<64x16xbf16>
    %91 = arith.truncf %89 : vector<16x512xf32> to vector<16x512xbf16>
    %cst_54 = arith.constant dense<0.000000e+00> : vector<64x512xf32>
    %92 = tpu.matmul %90, %91, %cst_54 {dimension_numbers = #tpu.dot_dimension_numbers<[1], [0], [0], [1], [0, 0, 1, 1], [], []>} : vector<64x16xbf16>, vector<16x512xbf16>, vector<64x512xf32> -> vector<64x512xf32>
    %c0_55 = arith.constant 0 : index
    %c0_56 = arith.constant 0 : index
    %93 = vector.load %arg14[%c0_55, %c0_56] : memref<64x1xf32, #tpu.memory_space<vmem>>, vector<64x1xf32>
    %94 = vector.broadcast %93 : vector<64x1xf32> to vector<64x512xf32>
    %95 = arith.addf %92, %94 : vector<64x512xf32>
    %c0_57 = arith.constant 0 : index
    %c0_58 = arith.constant 0 : index
    %96 = vector.load %arg3[%c0_57, %c0_58] : memref<512x2xbf16, #tpu.memory_space<vmem>>, vector<512x2xbf16>
    %cst_59 = arith.constant dense<0.000000e+00> : vector<64x2xf32>
    %97 = tpu.matmul %82, %96, %cst_59 {dimension_numbers = #tpu.dot_dimension_numbers<[1], [0], [0], [1], [0, 0, 1, 1], [], []>} : vector<64x512xbf16>, vector<512x2xbf16>, vector<64x2xf32> -> vector<64x2xf32>
    %cst_60 = arith.constant 3.906250e-03 : f32
    %98 = vector.broadcast %cst_60 : f32 to vector<64x2xf32>
    %99 = arith.mulf %97, %98 : vector<64x2xf32>
    %c0_61 = arith.constant 0 : index
    %c0_62 = arith.constant 0 : index
    %100 = vector.load %arg15[%c0_61, %c0_62] : memref<16x64xbf16, #tpu.memory_space<vmem>>, vector<16x64xbf16>
    %101 = arith.truncf %99 : vector<64x2xf32> to vector<64x2xbf16>
    %cst_63 = arith.constant dense<0.000000e+00> : vector<16x2xf32>
    %102 = tpu.matmul %100, %101, %cst_63 {dimension_numbers = #tpu.dot_dimension_numbers<[1], [0], [0], [1], [0, 0, 1, 1], [], []>} : vector<16x64xbf16>, vector<64x2xbf16>, vector<16x2xf32> -> vector<16x2xf32>
    %c0_64 = arith.constant 0 : index
    %c0_65 = arith.constant 0 : index
    %103 = vector.load %arg16[%c0_64, %c0_65] : memref<16x1xf32, #tpu.memory_space<vmem>>, vector<16x1xf32>
    %104 = vector.broadcast %103 : vector<16x1xf32> to vector<16x2xf32>
    %105 = arith.addf %102, %104 : vector<16x2xf32>
    %cst_66 = arith.constant 0.000000e+00 : f32
    %106 = vector.broadcast %cst_66 : f32 to vector<16x2xf32>
    %107 = arith.maximumf %105, %106 : vector<16x2xf32>
    %c0_67 = arith.constant 0 : index
    %c0_68 = arith.constant 0 : index
    %108 = vector.load %arg17[%c0_67, %c0_68] : memref<64x16xbf16, #tpu.memory_space<vmem>>, vector<64x16xbf16>
    %109 = arith.truncf %107 : vector<16x2xf32> to vector<16x2xbf16>
    %cst_69 = arith.constant dense<0.000000e+00> : vector<64x2xf32>
    %110 = tpu.matmul %108, %109, %cst_69 {dimension_numbers = #tpu.dot_dimension_numbers<[1], [0], [0], [1], [0, 0, 1, 1], [], []>} : vector<64x16xbf16>, vector<16x2xbf16>, vector<64x2xf32> -> vector<64x2xf32>
    %c0_70 = arith.constant 0 : index
    %c0_71 = arith.constant 0 : index
    %111 = vector.load %arg18[%c0_70, %c0_71] : memref<64x1xf32, #tpu.memory_space<vmem>>, vector<64x1xf32>
    %112 = vector.broadcast %111 : vector<64x1xf32> to vector<64x2xf32>
    %113 = arith.addf %110, %112 : vector<64x2xf32>
    %114 = arith.truncf %113 : vector<64x2xf32> to vector<64x2xbf16>
    %c0_72 = arith.constant 0 : index
    %c0_73 = arith.constant 0 : index
    %115 = vector.load %arg4[%c0_72, %c0_73] : memref<2x512xbf16, #tpu.memory_space<vmem>>, vector<2x512xbf16>
    %cst_74 = arith.constant dense<0.000000e+00> : vector<64x512xf32>
    %116 = tpu.matmul %114, %115, %cst_74 {dimension_numbers = #tpu.dot_dimension_numbers<[1], [0], [0], [1], [0, 0, 1, 1], [], []>} : vector<64x2xbf16>, vector<2x512xbf16>, vector<64x512xf32> -> vector<64x512xf32>
    %117 = arith.addf %95, %116 : vector<64x512xf32>
    %cst_75 = arith.constant 0.000000e+00 : f32
    %118 = vector.broadcast %cst_75 : f32 to vector<64x512xf32>
    %119 = arith.subf %118, %117 : vector<64x512xf32>
    %120 = math.exp %119 : vector<64x512xf32>
    %cst_76 = arith.constant 1.000000e+00 : f32
    %121 = vector.broadcast %cst_76 : f32 to vector<64x512xf32>
    %122 = arith.addf %121, %120 : vector<64x512xf32>
    %123 = tpu.reciprocal %122 {approx = true} : vector<64x512xf32> -> vector<64x512xf32>
    %124 = arith.subf %80, %1 : vector<64x512xf32>
    %125 = arith.mulf %123, %124 : vector<64x512xf32>
    %126 = arith.addf %1, %125 : vector<64x512xf32>
    %cst_77 = arith.constant 2.000000e+00 : f32
    %127 = vector.broadcast %cst_77 : f32 to vector<64x512xf32>
    %128 = arith.mulf %127, %126 : vector<64x512xf32>
    %cst_78 = arith.constant 0.000000e+00 : f32
    %129 = vector.broadcast %cst_78 : f32 to vector<64x512xf32>
    %130 = arith.maximumf %128, %129 : vector<64x512xf32>
    %c0_79 = arith.constant 0 : index
    %c0_80 = arith.constant 0 : index
    %131 = vector.load %arg19[%c0_79, %c0_80] : memref<64x512xf32, #tpu.memory_space<vmem>>, vector<64x512xf32>
    tpu.vector_store %arg19[%c0_79, %c0_80], %130 {strides = array<i32>} : memref<64x512xf32, #tpu.memory_space<vmem>>, vector<64x512xf32>,
    return
  }
  func.func @transform_0(%arg0: i32) -> (i32, i32) {
    %c0_i32 = arith.constant 0 : i32
    %c0_i32_0 = arith.constant 0 : i32
    return %c0_i32, %arg0 : i32, i32
  }
  func.func @transform_1(%arg0: i32) -> (i32, i32, i32) {
    %c0_i32 = arith.constant 0 : i32
    %c0_i32_0 = arith.constant 0 : i32
    %c0_i32_1 = arith.constant 0 : i32
    %c0_i32_2 = arith.constant 0 : i32
    return %c0_i32, %c0_i32_0, %c0_i32_1 : i32, i32, i32
  }
  func.func @transform_2(%arg0: i32) -> (i32, i32) {
    %c0_i32 = arith.constant 0 : i32
    %c0_i32_0 = arith.constant 0 : i32
    %c0_i32_1 = arith.constant 0 : i32
    return %c0_i32, %c0_i32_0 : i32, i32
  }
  func.func @transform_3(%arg0: i32) -> (i32, i32) {
    %c0_i32 = arith.constant 0 : i32
    %c0_i32_0 = arith.constant 0 : i32
    %c0_i32_1 = arith.constant 0 : i32
    return %c0_i32, %c0_i32_0 : i32, i32
  }
  func.func @transform_4(%arg0: i32) -> (i32, i32) {
    %c0_i32 = arith.constant 0 : i32
    %c0_i32_0 = arith.constant 0 : i32
    %c0_i32_1 = arith.constant 0 : i32
    return %c0_i32, %c0_i32_0 : i32, i32
  }
  func.func @transform_5(%arg0: i32) -> (i32, i32) {
    %c0_i32 = arith.constant 0 : i32
    %c0_i32_0 = arith.constant 0 : i32
    %c0_i32_1 = arith.constant 0 : i32
    return %c0_i32, %c0_i32_0 : i32, i32
  }
  func.func @transform_6(%arg0: i32) -> (i32, i32) {
    %c0_i32 = arith.constant 0 : i32
    %c0_i32_0 = arith.constant 0 : i32
    %c0_i32_1 = arith.constant 0 : i32
    return %c0_i32, %c0_i32_0 : i32, i32
  }
  func.func @transform_7(%arg0: i32) -> (i32, i32) {
    %c0_i32 = arith.constant 0 : i32
    %c0_i32_0 = arith.constant 0 : i32
    %c0_i32_1 = arith.constant 0 : i32
    return %c0_i32, %c0_i32_0 : i32, i32
  }
  func.func @transform_8(%arg0: i32) -> (i32, i32) {
    %c0_i32 = arith.constant 0 : i32
    %c0_i32_0 = arith.constant 0 : i32
    %c0_i32_1 = arith.constant 0 : i32
    return %c0_i32, %c0_i32_0 : i32, i32
  }
  func.func @transform_9(%arg0: i32) -> (i32, i32) {
    %c0_i32 = arith.constant 0 : i32
    %c0_i32_0 = arith.constant 0 : i32
    %c0_i32_1 = arith.constant 0 : i32
    return %c0_i32, %c0_i32_0 : i32, i32
  }
  func.func @transform_10(%arg0: i32) -> (i32, i32) {
    %c0_i32 = arith.constant 0 : i32
    %c0_i32_0 = arith.constant 0 : i32
    %c0_i32_1 = arith.constant 0 : i32
    return %c0_i32, %c0_i32_0 : i32, i32
  }
  func.func @transform_11(%arg0: i32) -> (i32, i32) {
    %c0_i32 = arith.constant 0 : i32
    %c0_i32_0 = arith.constant 0 : i32
    %c0_i32_1 = arith.constant 0 : i32
    return %c0_i32, %c0_i32_0 : i32, i32
  }
  func.func @transform_12(%arg0: i32) -> (i32, i32) {
    %c0_i32 = arith.constant 0 : i32
    %c0_i32_0 = arith.constant 0 : i32
    %c0_i32_1 = arith.constant 0 : i32
    return %c0_i32, %c0_i32_0 : i32, i32
  }
  func.func @transform_13(%arg0: i32) -> (i32, i32) {
    %c0_i32 = arith.constant 0 : i32
    %c0_i32_0 = arith.constant 0 : i32
    %c0_i32_1 = arith.constant 0 : i32
    return %c0_i32, %c0_i32_0 : i32, i32
  }
  func.func @transform_14(%arg0: i32) -> (i32, i32) {
    %c0_i32 = arith.constant 0 : i32
    %c0_i32_0 = arith.constant 0 : i32
    %c0_i32_1 = arith.constant 0 : i32
    return %c0_i32, %c0_i32_0 : i32, i32
  }
  func.func @transform_15(%arg0: i32) -> (i32, i32) {
    %c0_i32 = arith.constant 0 : i32
    %c0_i32_0 = arith.constant 0 : i32
    %c0_i32_1 = arith.constant 0 : i32
    return %c0_i32, %c0_i32_0 : i32, i32
  }
  func.func @transform_16(%arg0: i32) -> (i32, i32) {
    %c0_i32 = arith.constant 0 : i32
    %c0_i32_0 = arith.constant 0 : i32
    %c0_i32_1 = arith.constant 0 : i32
    return %c0_i32, %c0_i32_0 : i32, i32
  }
  func.func @transform_17(%arg0: i32) -> (i32, i32) {
    %c0_i32 = arith.constant 0 : i32
    %c0_i32_0 = arith.constant 0 : i32
    %c0_i32_1 = arith.constant 0 : i32
    return %c0_i32, %c0_i32_0 : i32, i32
  }
  func.func @transform_18(%arg0: i32) -> (i32, i32) {
    %c0_i32 = arith.constant 0 : i32
    %c0_i32_0 = arith.constant 0 : i32
    return %c0_i32, %arg0 : i32, i32
  }
}

</mosaic_0001>

<llo_original>
// kernel: tpu_custom_call.1
$region0: #{tpu_custom_call.1}
  #allocation0 [shape = 'u32[]', space=smem, size = 0x4, offset = 0x4, fixed_abs, tag = 'smem constant byte address 0x4 - core index']
  #allocation1 [shape = 'u32[72,128]{1,0:T(1,128)}', space=vmem, size = 0x9000, scoped, tag = 'internal scratch']
  #allocation2 [shape = 'bf16[144,512]{1,0:T(8,128)(2,1)}', space=vmem, size = 0x24000, scoped, tag = 'scratch operand']
  %s0 = inlined_call_operand.vmem [shape: bf16[64,512], index: 0, kind: input, shape index: {}]
  %s1 = inlined_call_operand.vmem [shape: bf16[9,1,512], index: 1, kind: input, shape index: {}]
  %s2 = inlined_call_operand.vmem [shape: bf16[512,2], index: 2, kind: input, shape index: {}]
  %s3 = inlined_call_operand.vmem [shape: bf16[2,512], index: 3, kind: input, shape index: {}]
  %s4 = inlined_call_operand.vmem [shape: bf16[16,64], index: 4, kind: input, shape index: {}]
  %s5 = inlined_call_operand.vmem [shape: f32[16,1], index: 5, kind: input, shape index: {}]
  %s6 = inlined_call_operand.vmem [shape: bf16[16,144], index: 6, kind: input, shape index: {}]
  %s7 = inlined_call_operand.vmem [shape: f32[16,1], index: 7, kind: input, shape index: {}]
  %s8 = inlined_call_operand.vmem [shape: bf16[64,16], index: 8, kind: input, shape index: {}]
  %s9 = inlined_call_operand.vmem [shape: f32[64,1], index: 9, kind: input, shape index: {}]
  %s10 = inlined_call_operand.vmem [shape: bf16[16,64], index: 10, kind: input, shape index: {}]
  %s11 = inlined_call_operand.vmem [shape: f32[16,1], index: 11, kind: input, shape index: {}]
  %s12 = inlined_call_operand.vmem [shape: bf16[64,16], index: 12, kind: input, shape index: {}]
  %s13 = inlined_call_operand.vmem [shape: f32[64,1], index: 13, kind: input, shape index: {}]
  %s14 = inlined_call_operand.vmem [shape: bf16[16,64], index: 14, kind: input, shape index: {}]
  %s15 = inlined_call_operand.vmem [shape: f32[16,1], index: 15, kind: input, shape index: {}]
  %s16 = inlined_call_operand.vmem [shape: bf16[64,16], index: 16, kind: input, shape index: {}]
  %s17 = inlined_call_operand.vmem [shape: f32[64,1], index: 17, kind: input, shape index: {}]
  %s18 = inlined_call_operand.hbm [shape: f32[64,512], index: 18, kind: output, shape index: {}]
  %s19 = sld [smem:[#allocation0]]
  $region82: #{tpu_custom_call.1} parent=0
    _
  %s21 = ssub.s32 1, %s19
  %s22 = scalar_select 0, %s21, %s19
  $region1: #{tpu_custom_call.1} parent=0
    #allocation3 [shape = 'u8[131072]{0}', space=vmem, size = 0x20000, scoped, tag = 'output window, operand 0, single buffered']
    #allocation4 [shape = 's32[1]{0}', space=sflag, size = 0x4, scoped, tag = 'scoped memory for tpu_custom_call.1']
    %23 = vsyncpa [#allocation4], 0
    // Predicated region
    $region2: #{tpu_custom_call.1} parent=1 // pred_check
      _
    $region3: #{tpu_custom_call.1} parent=1 // pred_check_branch
      %25 = sbr.rel (0) target = $region5
    $region4: #{tpu_custom_call.1} parent=1 // pred_region
      _
    $region5: #{tpu_custom_call.1} parent=1 // pred_fallthru
      _
    // Predicated region
    $region6: #{tpu_custom_call.1} parent=1 // pred_check
      _
    $region7: #{tpu_custom_call.1} parent=1 // pred_check_branch
      %27 = sbr.rel (0) target = $region9
    $region8: #{tpu_custom_call.1} parent=1 // pred_region
      _
    $region9: #{tpu_custom_call.1} parent=1 // pred_fallthru
      _
    // Predicated region
    $region10: #{tpu_custom_call.1} parent=1 // pred_check
      _
    $region11: #{tpu_custom_call.1} parent=1 // pred_check_branch
      %29 = sbr.rel (0) target = $region13
    $region12: #{tpu_custom_call.1} parent=1 // pred_region
      _
    $region13: #{tpu_custom_call.1} parent=1 // pred_fallthru
      _
    // Predicated region
    $region14: #{tpu_custom_call.1} parent=1 // pred_check
      _
    $region15: #{tpu_custom_call.1} parent=1 // pred_check_branch
      %31 = sbr.rel (0) target = $region17
    $region16: #{tpu_custom_call.1} parent=1 // pred_region
      _
    $region17: #{tpu_custom_call.1} parent=1 // pred_fallthru
      _
    // Predicated region
    $region18: #{tpu_custom_call.1} parent=1 // pred_check
      _
    $region19: #{tpu_custom_call.1} parent=1 // pred_check_branch
      %33 = sbr.rel (0) target = $region21
    $region20: #{tpu_custom_call.1} parent=1 // pred_region
      _
    $region21: #{tpu_custom_call.1} parent=1 // pred_fallthru
      _
    // Predicated region
    $region22: #{tpu_custom_call.1} parent=1 // pred_check
      _
    $region23: #{tpu_custom_call.1} parent=1 // pred_check_branch
      %35 = sbr.rel (0) target = $region25
    $region24: #{tpu_custom_call.1} parent=1 // pred_region
      _
    $region25: #{tpu_custom_call.1} parent=1 // pred_fallthru
      _
    // Predicated region
    $region26: #{tpu_custom_call.1} parent=1 // pred_check
      _
    $region27: #{tpu_custom_call.1} parent=1 // pred_check_branch
      %37 = sbr.rel (0) target = $region29
    $region28: #{tpu_custom_call.1} parent=1 // pred_region
      _
    $region29: #{tpu_custom_call.1} parent=1 // pred_fallthru
      _
    // Predicated region
    $region30: #{tpu_custom_call.1} parent=1 // pred_check
      _
    $region31: #{tpu_custom_call.1} parent=1 // pred_check_branch
      %39 = sbr.rel (0) target = $region33
    $region32: #{tpu_custom_call.1} parent=1 // pred_region
      _
    $region33: #{tpu_custom_call.1} parent=1 // pred_fallthru
      _
    // Predicated region
    $region34: #{tpu_custom_call.1} parent=1 // pred_check
      _
    $region35: #{tpu_custom_call.1} parent=1 // pred_check_branch
      %41 = sbr.rel (0) target = $region37
    $region36: #{tpu_custom_call.1} parent=1 // pred_region
      _
    $region37: #{tpu_custom_call.1} parent=1 // pred_fallthru
      _
    // Predicated region
    $region38: #{tpu_custom_call.1} parent=1 // pred_check
      _
    $region39: #{tpu_custom_call.1} parent=1 // pred_check_branch
      %43 = sbr.rel (0) target = $region41
    $region40: #{tpu_custom_call.1} parent=1 // pred_region
      _
    $region41: #{tpu_custom_call.1} parent=1 // pred_fallthru
      _
    // Predicated region
    $region42: #{tpu_custom_call.1} parent=1 // pred_check
      _
    $region43: #{tpu_custom_call.1} parent=1 // pred_check_branch
      %45 = sbr.rel (0) target = $region45
    $region44: #{tpu_custom_call.1} parent=1 // pred_region
      _
    $region45: #{tpu_custom_call.1} parent=1 // pred_fallthru
      _
    // Predicated region
    $region46: #{tpu_custom_call.1} parent=1 // pred_check
      _
    $region47: #{tpu_custom_call.1} parent=1 // pred_check_branch
      %47 = sbr.rel (0) target = $region49
    $region48: #{tpu_custom_call.1} parent=1 // pred_region
      _
    $region49: #{tpu_custom_call.1} parent=1 // pred_fallthru
      _
    // Predicated region
    $region50: #{tpu_custom_call.1} parent=1 // pred_check
      _
    $region51: #{tpu_custom_call.1} parent=1 // pred_check_branch
      %49 = sbr.rel (0) target = $region53
    $region52: #{tpu_custom_call.1} parent=1 // pred_region
      _
    $region53: #{tpu_custom_call.1} parent=1 // pred_fallthru
      _
    // Predicated region
    $region54: #{tpu_custom_call.1} parent=1 // pred_check
      _
    $region55: #{tpu_custom_call.1} parent=1 // pred_check_branch
      %51 = sbr.rel (0) target = $region57
    $region56: #{tpu_custom_call.1} parent=1 // pred_region
      _
    $region57: #{tpu_custom_call.1} parent=1 // pred_fallthru
      _
    // Predicated region
    $region58: #{tpu_custom_call.1} parent=1 // pred_check
      _
    $region59: #{tpu_custom_call.1} parent=1 // pred_check_branch
      %53 = sbr.rel (0) target = $region61
    $region60: #{tpu_custom_call.1} parent=1 // pred_region
      _
    $region61: #{tpu_custom_call.1} parent=1 // pred_fallthru
      _
    // Predicated region
    $region62: #{tpu_custom_call.1} parent=1 // pred_check
      _
    $region63: #{tpu_custom_call.1} parent=1 // pred_check_branch
      %55 = sbr.rel (0) target = $region65
    $region64: #{tpu_custom_call.1} parent=1 // pred_region
      _
    $region65: #{tpu_custom_call.1} parent=1 // pred_fallthru
      _
    // Predicated region
    $region66: #{tpu_custom_call.1} parent=1 // pred_check
      _
    $region67: #{tpu_custom_call.1} parent=1 // pred_check_branch
      %57 = sbr.rel (0) target = $region69
    $region68: #{tpu_custom_call.1} parent=1 // pred_region
      _
    $region69: #{tpu_custom_call.1} parent=1 // pred_fallthru
      _
    // Predicated region
    $region70: #{tpu_custom_call.1} parent=1 // pred_check
      _
    $region71: #{tpu_custom_call.1} parent=1 // pred_check_branch
      %59 = sbr.rel (0) target = $region73
    $region72: #{tpu_custom_call.1} parent=1 // pred_region
      _
    $region73: #{tpu_custom_call.1} parent=1 // pred_fallthru
      _
    %v61 = vld [vmem:[%s0] sm:$0xff]
    %v62 = vld [vmem:[%s0 + $0x8] sm:$0xff]
    %v63 = vld [vmem:[%s0 + $0x10] sm:$0xff]
    %v64 = vld [vmem:[%s0 + $0x18] sm:$0xff]
    %v65 = vld [vmem:[%s0 + $0x20] sm:$0xff]
    %v66 = vld [vmem:[%s0 + $0x28] sm:$0xff]
    %v67 = vld [vmem:[%s0 + $0x30] sm:$0xff]
    %v68 = vld [vmem:[%s0 + $0x38] sm:$0xff]
    %v69 = vld [vmem:[%s0 + $0x40] sm:$0xff]
    %v70 = vld [vmem:[%s0 + $0x48] sm:$0xff]
    %v71 = vld [vmem:[%s0 + $0x50] sm:$0xff]
    %v72 = vld [vmem:[%s0 + $0x58] sm:$0xff]
    %v73 = vld [vmem:[%s0 + $0x60] sm:$0xff]
    %v74 = vld [vmem:[%s0 + $0x68] sm:$0xff]
    %v75 = vld [vmem:[%s0 + $0x70] sm:$0xff]
    %v76 = vld [vmem:[%s0 + $0x78] sm:$0xff]
    %v77 = vunpack.c.l.bf16 %v61
    %v78 = vunpack.c.h.bf16 %v61
    %v79 = vunpack.c.l.bf16 %v62
    %v80 = vunpack.c.h.bf16 %v62
    %v81 = vunpack.c.l.bf16 %v63
    %v82 = vunpack.c.h.bf16 %v63
    %v83 = vunpack.c.l.bf16 %v64
    %v84 = vunpack.c.h.bf16 %v64
    %v85 = vunpack.c.l.bf16 %v65
    %v86 = vunpack.c.h.bf16 %v65
    %v87 = vunpack.c.l.bf16 %v66
    %v88 = vunpack.c.h.bf16 %v66
    %v89 = vunpack.c.l.bf16 %v67
    %v90 = vunpack.c.h.bf16 %v67
    %v91 = vunpack.c.l.bf16 %v68
    %v92 = vunpack.c.h.bf16 %v68
    %v93 = vunpack.c.l.bf16 %v69
    %v94 = vunpack.c.h.bf16 %v69
    %v95 = vunpack.c.l.bf16 %v70
    %v96 = vunpack.c.h.bf16 %v70
    %v97 = vunpack.c.l.bf16 %v71
    %v98 = vunpack.c.h.bf16 %v71
    %v99 = vunpack.c.l.bf16 %v72
    %v100 = vunpack.c.h.bf16 %v72
    %v101 = vunpack.c.l.bf16 %v73
    %v102 = vunpack.c.h.bf16 %v73
    %v103 = vunpack.c.l.bf16 %v74
    %v104 = vunpack.c.h.bf16 %v74
    %v105 = vunpack.c.l.bf16 %v75
    %v106 = vunpack.c.h.bf16 %v75
    %v107 = vunpack.c.l.bf16 %v76
    %v108 = vunpack.c.h.bf16 %v76
    %v109 = vld [vmem:[%s4] sm:$0xf]
    %v110 = vld [vmem:[%s4 + $0x4] sm:$0xf]
    %v111 = vld [vmem:[%s5] sm:$0xff]
    %v112 = vld [vmem:[%s5 + $0x8] sm:$0xff]
    %114 = vset.pattern.permute.xlu0 0
    %115 = vperm.xlu0 %114, %v111
    %v116 = vpop.permute.xlu0 %115
    %119 = vset.pattern.permute.xlu0 0
    %120 = vperm.xlu0 %119, %v112
    %v121 = vpop.permute.xlu0 %120
    %v125 = vunpack.c.l.b16 %v109
    %v126 = vunpack.c.l.b16 %v110
    %v127 = vpack.c.b16 %v126, %v125
    %v144 = vunpack.c.l.b16 %v61
    %v145 = vunpack.c.h.b16 %v61
    %v146 = vunpack.c.l.b16 %v62
    %v147 = vunpack.c.h.b16 %v62
    %v148 = vunpack.c.l.b16 %v63
    %v149 = vunpack.c.h.b16 %v63
    %v150 = vunpack.c.l.b16 %v64
    %v151 = vunpack.c.h.b16 %v64
    %v152 = vunpack.c.l.b16 %v65
    %v153 = vunpack.c.h.b16 %v65
    %v154 = vunpack.c.l.b16 %v66
    %v155 = vunpack.c.h.b16 %v66
    %v156 = vunpack.c.l.b16 %v67
    %v157 = vunpack.c.h.b16 %v67
    %v158 = vunpack.c.l.b16 %v68
    %v159 = vunpack.c.h.b16 %v68
    %v160 = vunpack.c.l.b16 %v69
    %v161 = vunpack.c.h.b16 %v69
    %v162 = vunpack.c.l.b16 %v70
    %v163 = vunpack.c.h.b16 %v70
    %v164 = vunpack.c.l.b16 %v71
    %v165 = vunpack.c.h.b16 %v71
    %v166 = vunpack.c.l.b16 %v72
    %v167 = vunpack.c.h.b16 %v72
    %v168 = vunpack.c.l.b16 %v73
    %v169 = vunpack.c.h.b16 %v73
    %v170 = vunpack.c.l.b16 %v74
    %v171 = vunpack.c.h.b16 %v74
    %v172 = vunpack.c.l.b16 %v75
    %v173 = vunpack.c.h.b16 %v75
    %v174 = vunpack.c.l.b16 %v76
    %v175 = vunpack.c.h.b16 %v76
    %v176 = vpack.c.b16 %v148, %v144
    %v177 = vpack.c.b16 %v149, %v145
    %v178 = vpack.c.b16 %v150, %v146
    %v179 = vpack.c.b16 %v151, %v147
    %v180 = vpack.c.b16 %v156, %v152
    %v181 = vpack.c.b16 %v157, %v153
    %v182 = vpack.c.b16 %v158, %v154
    %v183 = vpack.c.b16 %v159, %v155
    %v184 = vpack.c.b16 %v164, %v160
    %v185 = vpack.c.b16 %v165, %v161
    %v186 = vpack.c.b16 %v166, %v162
    %v187 = vpack.c.b16 %v167, %v163
    %v188 = vpack.c.b16 %v172, %v168
    %v189 = vpack.c.b16 %v173, %v169
    %v190 = vpack.c.b16 %v174, %v170
    %v191 = vpack.c.b16 %v175, %v171
    %vm208 = vcmask 523264
    %v210 = vsel %vm208, %v127, 0
    %212 = vmatpush.bf16.msra.mxu0 0
    %213 = vmatpush.bf16.msra.mxu0 0
    %214 = vmatpush.bf16.msra.mxu0 0
    %215 = vmatpush.bf16.msra.mxu0 0
    %216 = vmatpush.bf16.msra.mxu0 %v188
    %217 = vmatpush.bf16.msra.mxu0 %v184
    %218 = vmatpush.bf16.msra.mxu0 %v180
    %219 = vmatpush.bf16.msra.mxu0 %v176
    %220 = vmatmul.bf16.gmra.mxu0 %v210
    %v221 = vpop.f32.mrf.mxu0
    %v222 = vadd.f32 %v116, %v221
    %v223 = vpop.f32.mrf.mxu0
    %v224 = vadd.f32 %v121, %v223
    %225 = vdwg.mxu0
    %226 = vmatpush.bf16.msra.mxu0 0
    %227 = vmatpush.bf16.msra.mxu0 0
    %228 = vmatpush.bf16.msra.mxu0 0
    %229 = vmatpush.bf16.msra.mxu0 0
    %230 = vmatpush.bf16.msra.mxu0 %v189
    %231 = vmatpush.bf16.msra.mxu0 %v185
    %232 = vmatpush.bf16.msra.mxu0 %v181
    %233 = vmatpush.bf16.msra.mxu0 %v177
    %234 = vmatmul.bf16.gmra.mxu0 %v210
    %v235 = vpop.f32.mrf.mxu0
    %v236 = vadd.f32 %v116, %v235
    %v237 = vpop.f32.mrf.mxu0
    %v238 = vadd.f32 %v121, %v237
    %239 = vdwg.mxu0
    %240 = vmatpush.bf16.msra.mxu0 0
    %241 = vmatpush.bf16.msra.mxu0 0
    %242 = vmatpush.bf16.msra.mxu0 0
    %243 = vmatpush.bf16.msra.mxu0 0
    %244 = vmatpush.bf16.msra.mxu0 %v190
    %245 = vmatpush.bf16.msra.mxu0 %v186
    %246 = vmatpush.bf16.msra.mxu0 %v182
    %247 = vmatpush.bf16.msra.mxu0 %v178
    %248 = vmatmul.bf16.gmra.mxu0 %v210
    %v249 = vpop.f32.mrf.mxu0
    %v250 = vadd.f32 %v116, %v249
    %v251 = vpop.f32.mrf.mxu0
    %v252 = vadd.f32 %v121, %v251
    %253 = vdwg.mxu0
    %254 = vmatpush.bf16.msra.mxu0 0
    %255 = vmatpush.bf16.msra.mxu0 0
    %256 = vmatpush.bf16.msra.mxu0 0
    %257 = vmatpush.bf16.msra.mxu0 0
    %258 = vmatpush.bf16.msra.mxu0 %v191
    %259 = vmatpush.bf16.msra.mxu0 %v187
    %260 = vmatpush.bf16.msra.mxu0 %v183
    %261 = vmatpush.bf16.msra.mxu0 %v179
    %262 = vmatmul.bf16.gmra.mxu0 %v210
    %v263 = vpop.f32.mrf.mxu0
    %v264 = vadd.f32 %v116, %v263
    %v265 = vpop.f32.mrf.mxu0
    %v266 = vadd.f32 %v121, %v265
    %267 = vdwg.mxu0
    %v268 = vmax.f32 %v222, 0.0
    %v269 = vmax.f32 %v236, 0.0
    %v270 = vmax.f32 %v250, 0.0
    %v271 = vmax.f32 %v264, 0.0
    %v272 = vmax.f32 %v224, 0.0
    %v273 = vmax.f32 %v238, 0.0
    %v274 = vmax.f32 %v252, 0.0
    %v275 = vmax.f32 %v266, 0.0
    %276 = vrot.lane.b32.xlu0 %v268, 17
    %v277 = vpop.permute.xlu0 %276
    %278 = vrot.lane.b32.xlu0 %v272, 17
    %v279 = vpop.permute.xlu0 %278
    %280 = vrot.lane.b32.xlu0 %v269, 17
    %v281 = vpop.permute.xlu0 %280
    %282 = vrot.lane.b32.xlu0 %v273, 17
    %v283 = vpop.permute.xlu0 %282
    %284 = vrot.lane.b32.xlu0 %v270, 17
    %v285 = vpop.permute.xlu0 %284
    %286 = vrot.lane.b32.xlu0 %v274, 17
    %v287 = vpop.permute.xlu0 %286
    %288 = vrot.lane.b32.xlu0 %v271, 17
    %v289 = vpop.permute.xlu0 %288
    %290 = vrot.lane.b32.xlu0 %v275, 17
    %v291 = vpop.permute.xlu0 %290
    %v292 = vlaneseq
    %v293 = vand.u32 %v292, 127
    %vm294 = vcmp.lt.s32.totalorder %v293, 17
    %v295 = vsel %vm294, %v285, %v289
    %v296 = vsel %vm294, %v287, %v291
    %v297 = vsel %vm294, %v281, %v285
    %v298 = vsel %vm294, %v283, %v287
    %v299 = vsel %vm294, %v277, %v281
    %v300 = vsel %vm294, %v279, %v283
    %v301 = vsel %vm294, %v289, %v277
    %v302 = vsel %vm294, %v291, %v279
    %v303 = vpack.c.bf16 %v299, %v301
    %v304 = vpack.c.bf16 %v295, %v297
    %v305 = vpack.c.bf16 %v300, %v302
    %v306 = vpack.c.bf16 %v296, %v298
    %v307 = vld [vmem:[%s1] sm:$0xf]
    %309 = vst [vmem:[#allocation1] ss:$9 sm:$0xff] %v307
    %v310 = vld [vmem:[#allocation1] sm:$0xff]
    %v311 = vld [vmem:[#allocation1 + $0x9] sm:$0xff]
    %v312 = vld [vmem:[#allocation1 + $0x12] sm:$0xff]
    %v313 = vld [vmem:[#allocation1 + $0x1b] sm:$0xff]
    %v314 = vpack.i.b16 %v310, %v310
    %v316 = vperm.slane %v314, 0
    %v317 = vpack.i.b16 %v311, %v311
    %v319 = vperm.slane %v317, 0
    %v320 = vpack.i.b16 %v312, %v312
    %v322 = vperm.slane %v320, 0
    %v323 = vpack.i.b16 %v313, %v313
    %v325 = vperm.slane %v323, 0
    %v326 = vunpack.c.l.bf16 %v303
    %v327 = vunpack.c.h.bf16 %v303
    %v328 = vunpack.c.l.bf16 %v304
    %v329 = vunpack.c.h.bf16 %v304
    %v330 = vunpack.c.l.bf16 %v305
    %v331 = vunpack.c.h.bf16 %v305
    %v332 = vunpack.c.l.bf16 %v306
    %v333 = vunpack.c.h.bf16 %v306
    %v334 = vunpack.c.l.bf16 %v316
    %v335 = vunpack.c.l.bf16 %v319
    %v336 = vunpack.c.l.bf16 %v322
    %v337 = vunpack.c.l.bf16 %v325
    %v338 = vmul.f32 %v326, %v334
    %v339 = vmul.f32 %v327, %v335
    %v340 = vmul.f32 %v328, %v336
    %v341 = vmul.f32 %v329, %v337
    %v342 = vmul.f32 %v330, %v334
    %v343 = vmul.f32 %v331, %v335
    %v344 = vmul.f32 %v332, %v336
    %v345 = vmul.f32 %v333, %v337
    %v346 = vpack.c.bf16 %v339, %v338
    %v347 = vpack.c.bf16 %v341, %v340
    %v348 = vpack.c.bf16 %v343, %v342
    %v349 = vpack.c.bf16 %v345, %v344
    %350 = vst [vmem:[#allocation2] sm:$0xff] %v346
    %351 = vst [vmem:[#allocation2 + $0x8] sm:$0xff] %v347
    %352 = vst [vmem:[#allocation2 + $0x10] sm:$0xff] %v348
    %353 = vst [vmem:[#allocation2 + $0x18] sm:$0xff] %v349
    %354 = vrot.lane.b32.xlu0 %v268, 16
    %v355 = vpop.permute.xlu0 %354
    %356 = vrot.lane.b32.xlu0 %v272, 16
    %v357 = vpop.permute.xlu0 %356
    %358 = vrot.lane.b32.xlu0 %v269, 16
    %v359 = vpop.permute.xlu0 %358
    %360 = vrot.lane.b32.xlu0 %v273, 16
    %v361 = vpop.permute.xlu0 %360
    %362 = vrot.lane.b32.xlu0 %v270, 16
    %v363 = vpop.permute.xlu0 %362
    %364 = vrot.lane.b32.xlu0 %v274, 16
    %v365 = vpop.permute.xlu0 %364
    %366 = vrot.lane.b32.xlu0 %v271, 16
    %v367 = vpop.permute.xlu0 %366
    %368 = vrot.lane.b32.xlu0 %v275, 16
    %v369 = vpop.permute.xlu0 %368
    %vm370 = vcmp.lt.s32.totalorder %v293, 16
    %v371 = vsel %vm370, %v363, %v367
    %v372 = vsel %vm370, %v365, %v369
    %v373 = vsel %vm370, %v359, %v363
    %v374 = vsel %vm370, %v361, %v365
    %v375 = vsel %vm370, %v355, %v359
    %v376 = vsel %vm370, %v357, %v361
    %v377 = vsel %vm370, %v367, %v355
    %v378 = vsel %vm370, %v369, %v357
    %v379 = vpack.c.bf16 %v375, %v377
    %v380 = vpack.c.bf16 %v371, %v373
    %v381 = vpack.c.bf16 %v376, %v378
    %v382 = vpack.c.bf16 %v372, %v374
    %s383 = scalar_lea.vmem %s1, 4
    %v384 = vld [vmem:[%s383] sm:$0xf]
    %386 = vst [vmem:[#allocation1] ss:$9 sm:$0xff] %v384
    %v387 = vld [vmem:[#allocation1] sm:$0xff]
    %v388 = vld [vmem:[#allocation1 + $0x9] sm:$0xff]
    %v389 = vld [vmem:[#allocation1 + $0x12] sm:$0xff]
    %v390 = vld [vmem:[#allocation1 + $0x1b] sm:$0xff]
    %v391 = vpack.i.b16 %v387, %v387
    %v393 = vperm.slane %v391, 0
    %v394 = vpack.i.b16 %v388, %v388
    %v396 = vperm.slane %v394, 0
    %v397 = vpack.i.b16 %v389, %v389
    %v399 = vperm.slane %v397, 0
    %v400 = vpack.i.b16 %v390, %v390
    %v402 = vperm.slane %v400, 0
    %v403 = vunpack.c.l.bf16 %v379
    %v404 = vunpack.c.h.bf16 %v379
    %v405 = vunpack.c.l.bf16 %v380
    %v406 = vunpack.c.h.bf16 %v380
    %v407 = vunpack.c.l.bf16 %v381
    %v408 = vunpack.c.h.bf16 %v381
    %v409 = vunpack.c.l.bf16 %v382
    %v410 = vunpack.c.h.bf16 %v382
    %v411 = vunpack.c.l.bf16 %v393
    %v412 = vunpack.c.l.bf16 %v396
    %v413 = vunpack.c.l.bf16 %v399
    %v414 = vunpack.c.l.bf16 %v402
    %v415 = vmul.f32 %v403, %v411
    %v416 = vmul.f32 %v404, %v412
    %v417 = vmul.f32 %v405, %v413
    %v418 = vmul.f32 %v406, %v414
    %v419 = vmul.f32 %v407, %v411
    %v420 = vmul.f32 %v408, %v412
    %v421 = vmul.f32 %v409, %v413
    %v422 = vmul.f32 %v410, %v414
    %v423 = vpack.c.bf16 %v416, %v415
    %v424 = vpack.c.bf16 %v418, %v417
    %v425 = vpack.c.bf16 %v420, %v419
    %v426 = vpack.c.bf16 %v422, %v421
    %427 = vst [vmem:[#allocation2 + $0x20] sm:$0xff] %v423
    %428 = vst [vmem:[#allocation2 + $0x28] sm:$0xff] %v424
    %429 = vst [vmem:[#allocation2 + $0x30] sm:$0xff] %v425
    %430 = vst [vmem:[#allocation2 + $0x38] sm:$0xff] %v426
    %431 = vrot.lane.b32.xlu0 %v268, 15
    %v432 = vpop.permute.xlu0 %431
    %433 = vrot.lane.b32.xlu0 %v272, 15
    %v434 = vpop.permute.xlu0 %433
    %435 = vrot.lane.b32.xlu0 %v269, 15
    %v436 = vpop.permute.xlu0 %435
    %437 = vrot.lane.b32.xlu0 %v273, 15
    %v438 = vpop.permute.xlu0 %437
    %439 = vrot.lane.b32.xlu0 %v270, 15
    %v440 = vpop.permute.xlu0 %439
    %441 = vrot.lane.b32.xlu0 %v274, 15
    %v442 = vpop.permute.xlu0 %441
    %443 = vrot.lane.b32.xlu0 %v271, 15
    %v444 = vpop.permute.xlu0 %443
    %445 = vrot.lane.b32.xlu0 %v275, 15
    %v446 = vpop.permute.xlu0 %445
    %vm447 = vcmp.lt.s32.totalorder %v293, 15
    %v448 = vsel %vm447, %v440, %v444
    %v449 = vsel %vm447, %v442, %v446
    %v450 = vsel %vm447, %v436, %v440
    %v451 = vsel %vm447, %v438, %v442
    %v452 = vsel %vm447, %v432, %v436
    %v453 = vsel %vm447, %v434, %v438
    %v454 = vsel %vm447, %v444, %v432
    %v455 = vsel %vm447, %v446, %v434
    %v456 = vpack.c.bf16 %v452, %v454
    %v457 = vpack.c.bf16 %v448, %v450
    %v458 = vpack.c.bf16 %v453, %v455
    %v459 = vpack.c.bf16 %v449, %v451
    %s460 = scalar_lea.vmem %s1, 8
    %v461 = vld [vmem:[%s460] sm:$0xf]
    %463 = vst [vmem:[#allocation1] ss:$9 sm:$0xff] %v461
    %v464 = vld [vmem:[#allocation1] sm:$0xff]
    %v465 = vld [vmem:[#allocation1 + $0x9] sm:$0xff]
    %v466 = vld [vmem:[#allocation1 + $0x12] sm:$0xff]
    %v467 = vld [vmem:[#allocation1 + $0x1b] sm:$0xff]
    %v468 = vpack.i.b16 %v464, %v464
    %v470 = vperm.slane %v468, 0
    %v471 = vpack.i.b16 %v465, %v465
    %v473 = vperm.slane %v471, 0
    %v474 = vpack.i.b16 %v466, %v466
    %v476 = vperm.slane %v474, 0
    %v477 = vpack.i.b16 %v467, %v467
    %v479 = vperm.slane %v477, 0
    %v480 = vunpack.c.l.bf16 %v456
    %v481 = vunpack.c.h.bf16 %v456
    %v482 = vunpack.c.l.bf16 %v457
    %v483 = vunpack.c.h.bf16 %v457
    %v484 = vunpack.c.l.bf16 %v458
    %v485 = vunpack.c.h.bf16 %v458
    %v486 = vunpack.c.l.bf16 %v459
    %v487 = vunpack.c.h.bf16 %v459
    %v488 = vunpack.c.l.bf16 %v470
    %v489 = vunpack.c.l.bf16 %v473
    %v490 = vunpack.c.l.bf16 %v476
    %v491 = vunpack.c.l.bf16 %v479
    %v492 = vmul.f32 %v480, %v488
    %v493 = vmul.f32 %v481, %v489
    %v494 = vmul.f32 %v482, %v490
    %v495 = vmul.f32 %v483, %v491
    %v496 = vmul.f32 %v484, %v488
    %v497 = vmul.f32 %v485, %v489
    %v498 = vmul.f32 %v486, %v490
    %v499 = vmul.f32 %v487, %v491
    %v500 = vpack.c.bf16 %v493, %v492
    %v501 = vpack.c.bf16 %v495, %v494
    %v502 = vpack.c.bf16 %v497, %v496
    %v503 = vpack.c.bf16 %v499, %v498
    %504 = vst [vmem:[#allocation2 + $0x40] sm:$0xff] %v500
    %505 = vst [vmem:[#allocation2 + $0x48] sm:$0xff] %v501
    %506 = vst [vmem:[#allocation2 + $0x50] sm:$0xff] %v502
    %507 = vst [vmem:[#allocation2 + $0x58] sm:$0xff] %v503
    %508 = vrot.lane.b32.xlu0 %v268, 1
    %v509 = vpop.permute.xlu0 %508
    %510 = vrot.lane.b32.xlu0 %v272, 1
    %v511 = vpop.permute.xlu0 %510
    %512 = vrot.lane.b32.xlu0 %v269, 1
    %v513 = vpop.permute.xlu0 %512
    %514 = vrot.lane.b32.xlu0 %v273, 1
    %v515 = vpop.permute.xlu0 %514
    %516 = vrot.lane.b32.xlu0 %v270, 1
    %v517 = vpop.permute.xlu0 %516
    %518 = vrot.lane.b32.xlu0 %v274, 1
    %v519 = vpop.permute.xlu0 %518
    %520 = vrot.lane.b32.xlu0 %v271, 1
    %v521 = vpop.permute.xlu0 %520
    %522 = vrot.lane.b32.xlu0 %v275, 1
    %v523 = vpop.permute.xlu0 %522
    %vm524 = vcmp.lt.s32.totalorder %v293, 1
    %v525 = vsel %vm524, %v517, %v521
    %v526 = vsel %vm524, %v519, %v523
    %v527 = vsel %vm524, %v513, %v517
    %v528 = vsel %vm524, %v515, %v519
    %v529 = vsel %vm524, %v509, %v513
    %v530 = vsel %vm524, %v511, %v515
    %v531 = vsel %vm524, %v521, %v509
    %v532 = vsel %vm524, %v523, %v511
    %v533 = vpack.c.bf16 %v529, %v531
    %v534 = vpack.c.bf16 %v525, %v527
    %v535 = vpack.c.bf16 %v530, %v532
    %v536 = vpack.c.bf16 %v526, %v528
    %s537 = scalar_lea.vmem %s1, 12
    %v538 = vld [vmem:[%s537] sm:$0xf]
    %540 = vst [vmem:[#allocation1] ss:$9 sm:$0xff] %v538
    %v541 = vld [vmem:[#allocation1] sm:$0xff]
    %v542 = vld [vmem:[#allocation1 + $0x9] sm:$0xff]
    %v543 = vld [vmem:[#allocation1 + $0x12] sm:$0xff]
    %v544 = vld [vmem:[#allocation1 + $0x1b] sm:$0xff]
    %v545 = vpack.i.b16 %v541, %v541
    %v547 = vperm.slane %v545, 0
    %v548 = vpack.i.b16 %v542, %v542
    %v550 = vperm.slane %v548, 0
    %v551 = vpack.i.b16 %v543, %v543
    %v553 = vperm.slane %v551, 0
    %v554 = vpack.i.b16 %v544, %v544
    %v556 = vperm.slane %v554, 0
    %v557 = vunpack.c.l.bf16 %v533
    %v558 = vunpack.c.h.bf16 %v533
    %v559 = vunpack.c.l.bf16 %v534
    %v560 = vunpack.c.h.bf16 %v534
    %v561 = vunpack.c.l.bf16 %v535
    %v562 = vunpack.c.h.bf16 %v535
    %v563 = vunpack.c.l.bf16 %v536
    %v564 = vunpack.c.h.bf16 %v536
    %v565 = vunpack.c.l.bf16 %v547
    %v566 = vunpack.c.l.bf16 %v550
    %v567 = vunpack.c.l.bf16 %v553
    %v568 = vunpack.c.l.bf16 %v556
    %v569 = vmul.f32 %v557, %v565
    %v570 = vmul.f32 %v558, %v566
    %v571 = vmul.f32 %v559, %v567
    %v572 = vmul.f32 %v560, %v568
    %v573 = vmul.f32 %v561, %v565
    %v574 = vmul.f32 %v562, %v566
    %v575 = vmul.f32 %v563, %v567
    %v576 = vmul.f32 %v564, %v568
    %v577 = vpack.c.bf16 %v570, %v569
    %v578 = vpack.c.bf16 %v572, %v571
    %v579 = vpack.c.bf16 %v574, %v573
    %v580 = vpack.c.bf16 %v576, %v575
    %581 = vst [vmem:[#allocation2 + $0x60] sm:$0xff] %v577
    %582 = vst [vmem:[#allocation2 + $0x68] sm:$0xff] %v578
    %583 = vst [vmem:[#allocation2 + $0x70] sm:$0xff] %v579
    %584 = vst [vmem:[#allocation2 + $0x78] sm:$0xff] %v580
    %v585 = vpack.c.bf16 %v269, %v268
    %v586 = vpack.c.bf16 %v271, %v270
    %v587 = vpack.c.bf16 %v273, %v272
    %v588 = vpack.c.bf16 %v275, %v274
    %589 = vst [vmem:[#allocation2 + $0x80] sm:$0xff] %v585
    %590 = vst [vmem:[#allocation2 + $0x88] sm:$0xff] %v586
    %591 = vst [vmem:[#allocation2 + $0x90] sm:$0xff] %v587
    %592 = vst [vmem:[#allocation2 + $0x98] sm:$0xff] %v588
    %593 = vrot.lane.b32.xlu0 %v268, 127
    %v594 = vpop.permute.xlu0 %593
    %595 = vrot.lane.b32.xlu0 %v272, 127
    %v596 = vpop.permute.xlu0 %595
    %597 = vrot.lane.b32.xlu0 %v269, 127
    %v598 = vpop.permute.xlu0 %597
    %599 = vrot.lane.b32.xlu0 %v273, 127
    %v600 = vpop.permute.xlu0 %599
    %601 = vrot.lane.b32.xlu0 %v270, 127
    %v602 = vpop.permute.xlu0 %601
    %603 = vrot.lane.b32.xlu0 %v274, 127
    %v604 = vpop.permute.xlu0 %603
    %605 = vrot.lane.b32.xlu0 %v271, 127
    %v606 = vpop.permute.xlu0 %605
    %607 = vrot.lane.b32.xlu0 %v275, 127
    %v608 = vpop.permute.xlu0 %607
    %vm609 = vcmp.lt.s32.totalorder %v293, 127
    %v610 = vsel %vm609, %v602, %v606
    %v611 = vsel %vm609, %v604, %v608
    %v612 = vsel %vm609, %v598, %v602
    %v613 = vsel %vm609, %v600, %v604
    %v614 = vsel %vm609, %v594, %v598
    %v615 = vsel %vm609, %v596, %v600
    %v616 = vsel %vm609, %v606, %v594
    %v617 = vsel %vm609, %v608, %v596
    %v618 = vpack.c.bf16 %v612, %v614
    %v619 = vpack.c.bf16 %v616, %v610
    %v620 = vpack.c.bf16 %v613, %v615
    %v621 = vpack.c.bf16 %v617, %v611
    %s622 = scalar_lea.vmem %s1, 20
    %v623 = vld [vmem:[%s622] sm:$0xf]
    %625 = vst [vmem:[#allocation1] ss:$9 sm:$0xff] %v623
    %v626 = vld [vmem:[#allocation1] sm:$0xff]
    %v627 = vld [vmem:[#allocation1 + $0x9] sm:$0xff]
    %v628 = vld [vmem:[#allocation1 + $0x12] sm:$0xff]
    %v629 = vld [vmem:[#allocation1 + $0x1b] sm:$0xff]
    %v630 = vpack.i.b16 %v626, %v626
    %v632 = vperm.slane %v630, 0
    %v633 = vpack.i.b16 %v627, %v627
    %v635 = vperm.slane %v633, 0
    %v636 = vpack.i.b16 %v628, %v628
    %v638 = vperm.slane %v636, 0
    %v639 = vpack.i.b16 %v629, %v629
    %v641 = vperm.slane %v639, 0
    %v642 = vunpack.c.l.bf16 %v618
    %v643 = vunpack.c.h.bf16 %v618
    %v644 = vunpack.c.l.bf16 %v619
    %v645 = vunpack.c.h.bf16 %v619
    %v646 = vunpack.c.l.bf16 %v620
    %v647 = vunpack.c.h.bf16 %v620
    %v648 = vunpack.c.l.bf16 %v621
    %v649 = vunpack.c.h.bf16 %v621
    %v650 = vunpack.c.l.bf16 %v632
    %v651 = vunpack.c.l.bf16 %v635
    %v652 = vunpack.c.l.bf16 %v638
    %v653 = vunpack.c.l.bf16 %v641
    %v654 = vmul.f32 %v642, %v650
    %v655 = vmul.f32 %v643, %v651
    %v656 = vmul.f32 %v644, %v652
    %v657 = vmul.f32 %v645, %v653
    %v658 = vmul.f32 %v646, %v650
    %v659 = vmul.f32 %v647, %v651
    %v660 = vmul.f32 %v648, %v652
    %v661 = vmul.f32 %v649, %v653
    %v662 = vpack.c.bf16 %v655, %v654
    %v663 = vpack.c.bf16 %v657, %v656
    %v664 = vpack.c.bf16 %v659, %v658
    %v665 = vpack.c.bf16 %v661, %v660
    %666 = vst [vmem:[#allocation2 + $0xa0] sm:$0xff] %v662
    %667 = vst [vmem:[#allocation2 + $0xa8] sm:$0xff] %v663
    %668 = vst [vmem:[#allocation2 + $0xb0] sm:$0xff] %v664
    %669 = vst [vmem:[#allocation2 + $0xb8] sm:$0xff] %v665
    %670 = vrot.lane.b32.xlu0 %v268, 113
    %v671 = vpop.permute.xlu0 %670
    %672 = vrot.lane.b32.xlu0 %v272, 113
    %v673 = vpop.permute.xlu0 %672
    %674 = vrot.lane.b32.xlu0 %v269, 113
    %v675 = vpop.permute.xlu0 %674
    %676 = vrot.lane.b32.xlu0 %v273, 113
    %v677 = vpop.permute.xlu0 %676
    %678 = vrot.lane.b32.xlu0 %v270, 113
    %v679 = vpop.permute.xlu0 %678
    %680 = vrot.lane.b32.xlu0 %v274, 113
    %v681 = vpop.permute.xlu0 %680
    %682 = vrot.lane.b32.xlu0 %v271, 113
    %v683 = vpop.permute.xlu0 %682
    %684 = vrot.lane.b32.xlu0 %v275, 113
    %v685 = vpop.permute.xlu0 %684
    %vm686 = vcmp.lt.s32.totalorder %v293, 113
    %v687 = vsel %vm686, %v679, %v683
    %v688 = vsel %vm686, %v681, %v685
    %v689 = vsel %vm686, %v675, %v679
    %v690 = vsel %vm686, %v677, %v681
    %v691 = vsel %vm686, %v671, %v675
    %v692 = vsel %vm686, %v673, %v677
    %v693 = vsel %vm686, %v683, %v671
    %v694 = vsel %vm686, %v685, %v673
    %v695 = vpack.c.bf16 %v689, %v691
    %v696 = vpack.c.bf16 %v693, %v687
    %v697 = vpack.c.bf16 %v690, %v692
    %v698 = vpack.c.bf16 %v694, %v688
    %s699 = scalar_lea.vmem %s1, 24
    %v700 = vld [vmem:[%s699] sm:$0xf]
    %702 = vst [vmem:[#allocation1] ss:$9 sm:$0xff] %v700
    %v703 = vld [vmem:[#allocation1] sm:$0xff]
    %v704 = vld [vmem:[#allocation1 + $0x9] sm:$0xff]
    %v705 = vld [vmem:[#allocation1 + $0x12] sm:$0xff]
    %v706 = vld [vmem:[#allocation1 + $0x1b] sm:$0xff]
    %v707 = vpack.i.b16 %v703, %v703
    %v709 = vperm.slane %v707, 0
    %v710 = vpack.i.b16 %v704, %v704
    %v712 = vperm.slane %v710, 0
    %v713 = vpack.i.b16 %v705, %v705
    %v715 = vperm.slane %v713, 0
    %v716 = vpack.i.b16 %v706, %v706
    %v718 = vperm.slane %v716, 0
    %v719 = vunpack.c.l.bf16 %v695
    %v720 = vunpack.c.h.bf16 %v695
    %v721 = vunpack.c.l.bf16 %v696
    %v722 = vunpack.c.h.bf16 %v696
    %v723 = vunpack.c.l.bf16 %v697
    %v724 = vunpack.c.h.bf16 %v697
    %v725 = vunpack.c.l.bf16 %v698
    %v726 = vunpack.c.h.bf16 %v698
    %v727 = vunpack.c.l.bf16 %v709
    %v728 = vunpack.c.l.bf16 %v712
    %v729 = vunpack.c.l.bf16 %v715
    %v730 = vunpack.c.l.bf16 %v718
    %v731 = vmul.f32 %v719, %v727
    %v732 = vmul.f32 %v720, %v728
    %v733 = vmul.f32 %v721, %v729
    %v734 = vmul.f32 %v722, %v730
    %v735 = vmul.f32 %v723, %v727
    %v736 = vmul.f32 %v724, %v728
    %v737 = vmul.f32 %v725, %v729
    %v738 = vmul.f32 %v726, %v730
    %v739 = vpack.c.bf16 %v732, %v731
    %v740 = vpack.c.bf16 %v734, %v733
    %v741 = vpack.c.bf16 %v736, %v735
    %v742 = vpack.c.bf16 %v738, %v737
    %743 = vst [vmem:[#allocation2 + $0xc0] sm:$0xff] %v739
    %744 = vst [vmem:[#allocation2 + $0xc8] sm:$0xff] %v740
    %745 = vst [vmem:[#allocation2 + $0xd0] sm:$0xff] %v741
    %746 = vst [vmem:[#allocation2 + $0xd8] sm:$0xff] %v742
    %747 = vrot.lane.b32.xlu0 %v268, 112
    %v748 = vpop.permute.xlu0 %747
    %749 = vrot.lane.b32.xlu0 %v272, 112
    %v750 = vpop.permute.xlu0 %749
    %751 = vrot.lane.b32.xlu0 %v269, 112
    %v752 = vpop.permute.xlu0 %751
    %753 = vrot.lane.b32.xlu0 %v273, 112
    %v754 = vpop.permute.xlu0 %753
    %755 = vrot.lane.b32.xlu0 %v270, 112
    %v756 = vpop.permute.xlu0 %755
    %757 = vrot.lane.b32.xlu0 %v274, 112
    %v758 = vpop.permute.xlu0 %757
    %759 = vrot.lane.b32.xlu0 %v271, 112
    %v760 = vpop.permute.xlu0 %759
    %761 = vrot.lane.b32.xlu0 %v275, 112
    %v762 = vpop.permute.xlu0 %761
    %vm763 = vcmp.lt.s32.totalorder %v293, 112
    %v764 = vsel %vm763, %v756, %v760
    %v765 = vsel %vm763, %v758, %v762
    %v766 = vsel %vm763, %v752, %v756
    %v767 = vsel %vm763, %v754, %v758
    %v768 = vsel %vm763, %v748, %v752
    %v769 = vsel %vm763, %v750, %v754
    %v770 = vsel %vm763, %v760, %v748
    %v771 = vsel %vm763, %v762, %v750
    %v772 = vpack.c.bf16 %v766, %v768
    %v773 = vpack.c.bf16 %v770, %v764
    %v774 = vpack.c.bf16 %v767, %v769
    %v775 = vpack.c.bf16 %v771, %v765
    %s776 = scalar_lea.vmem %s1, 28
    %v777 = vld [vmem:[%s776] sm:$0xf]
    %779 = vst [vmem:[#allocation1] ss:$9 sm:$0xff] %v777
    %v780 = vld [vmem:[#allocation1] sm:$0xff]
    %v781 = vld [vmem:[#allocation1 + $0x9] sm:$0xff]
    %v782 = vld [vmem:[#allocation1 + $0x12] sm:$0xff]
    %v783 = vld [vmem:[#allocation1 + $0x1b] sm:$0xff]
    %v784 = vpack.i.b16 %v780, %v780
    %v786 = vperm.slane %v784, 0
    %v787 = vpack.i.b16 %v781, %v781
    %v789 = vperm.slane %v787, 0
    %v790 = vpack.i.b16 %v782, %v782
    %v792 = vperm.slane %v790, 0
    %v793 = vpack.i.b16 %v783, %v783
    %v795 = vperm.slane %v793, 0
    %v796 = vunpack.c.l.bf16 %v772
    %v797 = vunpack.c.h.bf16 %v772
    %v798 = vunpack.c.l.bf16 %v773
    %v799 = vunpack.c.h.bf16 %v773
    %v800 = vunpack.c.l.bf16 %v774
    %v801 = vunpack.c.h.bf16 %v774
    %v802 = vunpack.c.l.bf16 %v775
    %v803 = vunpack.c.h.bf16 %v775
    %v804 = vunpack.c.l.bf16 %v786
    %v805 = vunpack.c.l.bf16 %v789
    %v806 = vunpack.c.l.bf16 %v792
    %v807 = vunpack.c.l.bf16 %v795
    %v808 = vmul.f32 %v796, %v804
    %v809 = vmul.f32 %v797, %v805
    %v810 = vmul.f32 %v798, %v806
    %v811 = vmul.f32 %v799, %v807
    %v812 = vmul.f32 %v800, %v804
    %v813 = vmul.f32 %v801, %v805
    %v814 = vmul.f32 %v802, %v806
    %v815 = vmul.f32 %v803, %v807
    %v816 = vpack.c.bf16 %v809, %v808
    %v817 = vpack.c.bf16 %v811, %v810
    %v818 = vpack.c.bf16 %v813, %v812
    %v819 = vpack.c.bf16 %v815, %v814
    %820 = vst [vmem:[#allocation2 + $0xe0] sm:$0xff] %v816
    %821 = vst [vmem:[#allocation2 + $0xe8] sm:$0xff] %v817
    %822 = vst [vmem:[#allocation2 + $0xf0] sm:$0xff] %v818
    %823 = vst [vmem:[#allocation2 + $0xf8] sm:$0xff] %v819
    %824 = vrot.lane.b32.xlu0 %v268, 111
    %v825 = vpop.permute.xlu0 %824
    %826 = vrot.lane.b32.xlu0 %v272, 111
    %v827 = vpop.permute.xlu0 %826
    %828 = vrot.lane.b32.xlu0 %v269, 111
    %v829 = vpop.permute.xlu0 %828
    %830 = vrot.lane.b32.xlu0 %v273, 111
    %v831 = vpop.permute.xlu0 %830
    %832 = vrot.lane.b32.xlu0 %v270, 111
    %v833 = vpop.permute.xlu0 %832
    %834 = vrot.lane.b32.xlu0 %v274, 111
    %v835 = vpop.permute.xlu0 %834
    %836 = vrot.lane.b32.xlu0 %v271, 111
    %v837 = vpop.permute.xlu0 %836
    %838 = vrot.lane.b32.xlu0 %v275, 111
    %v839 = vpop.permute.xlu0 %838
    %vm840 = vcmp.lt.s32.totalorder %v293, 111
    %v841 = vsel %vm840, %v833, %v837
    %v842 = vsel %vm840, %v835, %v839
    %v843 = vsel %vm840, %v829, %v833
    %v844 = vsel %vm840, %v831, %v835
    %v845 = vsel %vm840, %v825, %v829
    %v846 = vsel %vm840, %v827, %v831
    %v847 = vsel %vm840, %v837, %v825
    %v848 = vsel %vm840, %v839, %v827
    %v849 = vpack.c.bf16 %v843, %v845
    %v850 = vpack.c.bf16 %v847, %v841
    %v851 = vpack.c.bf16 %v844, %v846
    %v852 = vpack.c.bf16 %v848, %v842
    %s853 = scalar_lea.vmem %s1, 32
    %v854 = vld [vmem:[%s853] sm:$0xf]
    %856 = vst [vmem:[#allocation1] ss:$9 sm:$0xff] %v854
    %v857 = vld [vmem:[#allocation1] sm:$0xff]
    %v858 = vld [vmem:[#allocation1 + $0x9] sm:$0xff]
    %v859 = vld [vmem:[#allocation1 + $0x12] sm:$0xff]
    %v860 = vld [vmem:[#allocation1 + $0x1b] sm:$0xff]
    %v861 = vpack.i.b16 %v857, %v857
    %v863 = vperm.slane %v861, 0
    %v864 = vpack.i.b16 %v858, %v858
    %v866 = vperm.slane %v864, 0
    %v867 = vpack.i.b16 %v859, %v859
    %v869 = vperm.slane %v867, 0
    %v870 = vpack.i.b16 %v860, %v860
    %v872 = vperm.slane %v870, 0
    %v873 = vunpack.c.l.bf16 %v849
    %v874 = vunpack.c.h.bf16 %v849
    %v875 = vunpack.c.l.bf16 %v850
    %v876 = vunpack.c.h.bf16 %v850
    %v877 = vunpack.c.l.bf16 %v851
    %v878 = vunpack.c.h.bf16 %v851
    %v879 = vunpack.c.l.bf16 %v852
    %v880 = vunpack.c.h.bf16 %v852
    %v881 = vunpack.c.l.bf16 %v863
    %v882 = vunpack.c.l.bf16 %v866
    %v883 = vunpack.c.l.bf16 %v869
    %v884 = vunpack.c.l.bf16 %v872
    %v885 = vmul.f32 %v873, %v881
    %v886 = vmul.f32 %v874, %v882
    %v887 = vmul.f32 %v875, %v883
    %v888 = vmul.f32 %v876, %v884
    %v889 = vmul.f32 %v877, %v881
    %v890 = vmul.f32 %v878, %v882
    %v891 = vmul.f32 %v879, %v883
    %v892 = vmul.f32 %v880, %v884
    %v893 = vpack.c.bf16 %v886, %v885
    %v894 = vpack.c.bf16 %v888, %v887
    %v895 = vpack.c.bf16 %v890, %v889
    %v896 = vpack.c.bf16 %v892, %v891
    %897 = vst [vmem:[#allocation2 + $0x100] sm:$0xff] %v893
    %898 = vst [vmem:[#allocation2 + $0x108] sm:$0xff] %v894
    %899 = vst [vmem:[#allocation2 + $0x110] sm:$0xff] %v895
    %900 = vst [vmem:[#allocation2 + $0x118] sm:$0xff] %v896
    %v901 = vld [vmem:[%s6] sm:$0xff]
    %v902 = vld [vmem:[%s6 + $0x8] sm:$0xff]
    %v903 = vld [vmem:[#allocation2] sm:$0xff]
    %v904 = vld [vmem:[#allocation2 + $0x8] sm:$0xff]
    %v905 = vld [vmem:[#allocation2 + $0x10] sm:$0xff]
    %v906 = vld [vmem:[#allocation2 + $0x18] sm:$0xff]
    %v907 = vld [vmem:[#allocation2 + $0x20] sm:$0xff]
    %v908 = vld [vmem:[#allocation2 + $0x28] sm:$0xff]
    %v909 = vld [vmem:[#allocation2 + $0x30] sm:$0xff]
    %v910 = vld [vmem:[#allocation2 + $0x38] sm:$0xff]
    %v911 = vld [vmem:[#allocation2 + $0x40] sm:$0xff]
    %v912 = vld [vmem:[#allocation2 + $0x48] sm:$0xff]
    %v913 = vld [vmem:[#allocation2 + $0x50] sm:$0xff]
    %v914 = vld [vmem:[#allocation2 + $0x58] sm:$0xff]
    %v915 = vld [vmem:[#allocation2 + $0x60] sm:$0xff]
    %v916 = vld [vmem:[#allocation2 + $0x68] sm:$0xff]
    %v917 = vld [vmem:[#allocation2 + $0x70] sm:$0xff]
    %v918 = vld [vmem:[#allocation2 + $0x78] sm:$0xff]
    %v919 = vld [vmem:[#allocation2 + $0x80] sm:$0xff]
    %v920 = vld [vmem:[#allocation2 + $0x88] sm:$0xff]
    %v921 = vld [vmem:[#allocation2 + $0x90] sm:$0xff]
    %v922 = vld [vmem:[#allocation2 + $0x98] sm:$0xff]
    %v923 = vld [vmem:[#allocation2 + $0xa0] sm:$0xff]
    %v924 = vld [vmem:[#allocation2 + $0xa8] sm:$0xff]
    %v925 = vld [vmem:[#allocation2 + $0xb0] sm:$0xff]
    %v926 = vld [vmem:[#allocation2 + $0xb8] sm:$0xff]
    %v927 = vld [vmem:[#allocation2 + $0xc0] sm:$0xff]
    %v928 = vld [vmem:[#allocation2 + $0xc8] sm:$0xff]
    %v929 = vld [vmem:[#allocation2 + $0xd0] sm:$0xff]
    %v930 = vld [vmem:[#allocation2 + $0xd8] sm:$0xff]
    %v931 = vld [vmem:[#allocation2 + $0xe0] sm:$0xff]
    %v932 = vld [vmem:[#allocation2 + $0xe8] sm:$0xff]
    %v933 = vld [vmem:[#allocation2 + $0xf0] sm:$0xff]
    %v934 = vld [vmem:[#allocation2 + $0xf8] sm:$0xff]
    %v935 = vld [vmem:[#allocation2 + $0x100] sm:$0xff]
    %v936 = vld [vmem:[#allocation2 + $0x108] sm:$0xff]
    %v937 = vld [vmem:[#allocation2 + $0x110] sm:$0xff]
    %v938 = vld [vmem:[#allocation2 + $0x118] sm:$0xff]
    %v939 = vld [vmem:[%s7] sm:$0xff]
    %v940 = vld [vmem:[%s7 + $0x8] sm:$0xff]
    %942 = vset.pattern.permute.xlu0 0
    %943 = vperm.xlu0 %942, %v939
    %v944 = vpop.permute.xlu0 %943
    %947 = vset.pattern.permute.xlu0 0
    %948 = vperm.xlu0 %947, %v940
    %v949 = vpop.permute.xlu0 %948
    %v953 = vunpack.c.l.b16 %v901
    %v954 = vunpack.c.h.b16 %v901
    %v955 = vunpack.c.l.b16 %v902
    %v956 = vunpack.c.h.b16 %v902
    %v957 = vpack.c.b16 %v955, %v953
    %v958 = vpack.c.b16 %v956, %v954
    %v996 = vunpack.c.l.b16 %v903
    %v997 = vunpack.c.h.b16 %v903
    %v998 = vunpack.c.l.b16 %v904
    %v999 = vunpack.c.h.b16 %v904
    %v1000 = vunpack.c.l.b16 %v905
    %v1001 = vunpack.c.h.b16 %v905
    %v1002 = vunpack.c.l.b16 %v906
    %v1003 = vunpack.c.h.b16 %v906
    %v1004 = vunpack.c.l.b16 %v907
    %v1005 = vunpack.c.h.b16 %v907
    %v1006 = vunpack.c.l.b16 %v908
    %v1007 = vunpack.c.h.b16 %v908
    %v1008 = vunpack.c.l.b16 %v909
    %v1009 = vunpack.c.h.b16 %v909
    %v1010 = vunpack.c.l.b16 %v910
    %v1011 = vunpack.c.h.b16 %v910
    %v1012 = vunpack.c.l.b16 %v911
    %v1013 = vunpack.c.h.b16 %v911
    %v1014 = vunpack.c.l.b16 %v912
    %v1015 = vunpack.c.h.b16 %v912
    %v1016 = vunpack.c.l.b16 %v913
    %v1017 = vunpack.c.h.b16 %v913
    %v1018 = vunpack.c.l.b16 %v914
    %v1019 = vunpack.c.h.b16 %v914
    %v1020 = vunpack.c.l.b16 %v915
    %v1021 = vunpack.c.h.b16 %v915
    %v1022 = vunpack.c.l.b16 %v916
    %v1023 = vunpack.c.h.b16 %v916
    %v1024 = vunpack.c.l.b16 %v917
    %v1025 = vunpack.c.h.b16 %v917
    %v1026 = vunpack.c.l.b16 %v918
    %v1027 = vunpack.c.h.b16 %v918
    %v1028 = vunpack.c.l.b16 %v919
    %v1029 = vunpack.c.h.b16 %v919
    %v1030 = vunpack.c.l.b16 %v920
    %v1031 = vunpack.c.h.b16 %v920
    %v1032 = vunpack.c.l.b16 %v921
    %v1033 = vunpack.c.h.b16 %v921
    %v1034 = vunpack.c.l.b16 %v922
    %v1035 = vunpack.c.h.b16 %v922
    %v1036 = vunpack.c.l.b16 %v923
    %v1037 = vunpack.c.h.b16 %v923
    %v1038 = vunpack.c.l.b16 %v924
    %v1039 = vunpack.c.h.b16 %v924
    %v1040 = vunpack.c.l.b16 %v925
    %v1041 = vunpack.c.h.b16 %v925
    %v1042 = vunpack.c.l.b16 %v926
    %v1043 = vunpack.c.h.b16 %v926
    %v1044 = vunpack.c.l.b16 %v927
    %v1045 = vunpack.c.h.b16 %v927
    %v1046 = vunpack.c.l.b16 %v928
    %v1047 = vunpack.c.h.b16 %v928
    %v1048 = vunpack.c.l.b16 %v929
    %v1049 = vunpack.c.h.b16 %v929
    %v1050 = vunpack.c.l.b16 %v930
    %v1051 = vunpack.c.h.b16 %v930
    %v1052 = vunpack.c.l.b16 %v931
    %v1053 = vunpack.c.h.b16 %v931
    %v1054 = vunpack.c.l.b16 %v932
    %v1055 = vunpack.c.h.b16 %v932
    %v1056 = vunpack.c.l.b16 %v933
    %v1057 = vunpack.c.h.b16 %v933
    %v1058 = vunpack.c.l.b16 %v934
    %v1059 = vunpack.c.h.b16 %v934
    %v1060 = vunpack.c.l.b16 %v935
    %v1061 = vunpack.c.h.b16 %v935
    %v1062 = vunpack.c.l.b16 %v936
    %v1063 = vunpack.c.h.b16 %v936
    %v1064 = vunpack.c.l.b16 %v937
    %v1065 = vunpack.c.h.b16 %v937
    %v1066 = vunpack.c.l.b16 %v938
    %v1067 = vunpack.c.h.b16 %v938
    %v1068 = vpack.c.b16 %v1000, %v996
    %v1069 = vpack.c.b16 %v1001, %v997
    %v1070 = vpack.c.b16 %v1002, %v998
    %v1071 = vpack.c.b16 %v1003, %v999
    %v1072 = vpack.c.b16 %v1008, %v1004
    %v1073 = vpack.c.b16 %v1009, %v1005
    %v1074 = vpack.c.b16 %v1010, %v1006
    %v1075 = vpack.c.b16 %v1011, %v1007
    %v1076 = vpack.c.b16 %v1016, %v1012
    %v1077 = vpack.c.b16 %v1017, %v1013
    %v1078 = vpack.c.b16 %v1018, %v1014
    %v1079 = vpack.c.b16 %v1019, %v1015
    %v1080 = vpack.c.b16 %v1024, %v1020
    %v1081 = vpack.c.b16 %v1025, %v1021
    %v1082 = vpack.c.b16 %v1026, %v1022
    %v1083 = vpack.c.b16 %v1027, %v1023
    %v1084 = vpack.c.b16 %v1032, %v1028
    %v1085 = vpack.c.b16 %v1033, %v1029
    %v1086 = vpack.c.b16 %v1034, %v1030
    %v1087 = vpack.c.b16 %v1035, %v1031
    %v1088 = vpack.c.b16 %v1040, %v1036
    %v1089 = vpack.c.b16 %v1041, %v1037
    %v1090 = vpack.c.b16 %v1042, %v1038
    %v1091 = vpack.c.b16 %v1043, %v1039
    %v1092 = vpack.c.b16 %v1048, %v1044
    %v1093 = vpack.c.b16 %v1049, %v1045
    %v1094 = vpack.c.b16 %v1050, %v1046
    %v1095 = vpack.c.b16 %v1051, %v1047
    %v1096 = vpack.c.b16 %v1056, %v1052
    %v1097 = vpack.c.b16 %v1057, %v1053
    %v1098 = vpack.c.b16 %v1058, %v1054
    %v1099 = vpack.c.b16 %v1059, %v1055
    %v1100 = vpack.c.b16 %v1064, %v1060
    %v1101 = vpack.c.b16 %v1065, %v1061
    %v1102 = vpack.c.b16 %v1066, %v1062
    %v1103 = vpack.c.b16 %v1067, %v1063
    %vm1140 = vcmask 130048
    %v1142 = vsel %vm1140, %v958, 0
    %1144 = vmatpush.bf16.msra.mxu0 %v1096
    %1145 = vmatpush.bf16.msra.mxu0 %v1092
    %1146 = vmatpush.bf16.msra.mxu0 %v1088
    %1147 = vmatpush.bf16.msra.mxu0 %v1084
    %1148 = vmatpush.bf16.msra.mxu0 %v1080
    %1149 = vmatpush.bf16.msra.mxu0 %v1076
    %1150 = vmatpush.bf16.msra.mxu0 %v1072
    %1151 = vmatpush.bf16.msra.mxu0 %v1068
    %1152 = vmatmul.bf16.gmra.mxu0 %v957
    %v1153 = vpop.f32.mrf.mxu0
    %v1154 = vadd.f32 %v944, %v1153
    %v1155 = vpop.f32.mrf.mxu0
    %v1156 = vadd.f32 %v949, %v1155
    %1157 = vdwg.mxu0
    %1158 = vmatpush.bf16.msra.mxu0 0
    %1159 = vmatpush.bf16.msra.mxu0 0
    %1160 = vmatpush.bf16.msra.mxu0 0
    %1161 = vmatpush.bf16.msra.mxu0 0
    %1162 = vmatpush.bf16.msra.mxu0 0
    %1163 = vmatpush.bf16.msra.mxu0 0
    %1164 = vmatpush.bf16.msra.mxu0 0
    %1165 = vmatpush.bf16.msra.mxu0 %v1100
    %1166 = vmatmul.bf16.gmra.mxu0 %v1142
    %v1167 = vpop.f32.mrf.mxu0
    %v1168 = vadd.f32 %v1154, %v1167
    %v1169 = vpop.f32.mrf.mxu0
    %v1170 = vadd.f32 %v1156, %v1169
    %1171 = vdwg.mxu0
    %1172 = vmatpush.bf16.msra.mxu0 %v1097
    %1173 = vmatpush.bf16.msra.mxu0 %v1093
    %1174 = vmatpush.bf16.msra.mxu0 %v1089
    %1175 = vmatpush.bf16.msra.mxu0 %v1085
    %1176 = vmatpush.bf16.msra.mxu0 %v1081
    %1177 = vmatpush.bf16.msra.mxu0 %v1077
    %1178 = vmatpush.bf16.msra.mxu0 %v1073
    %1179 = vmatpush.bf16.msra.mxu0 %v1069
    %1180 = vmatmul.bf16.gmra.mxu0 %v957
    %v1181 = vpop.f32.mrf.mxu0
    %v1182 = vadd.f32 %v944, %v1181
    %v1183 = vpop.f32.mrf.mxu0
    %v1184 = vadd.f32 %v949, %v1183
    %1185 = vdwg.mxu0
    %1186 = vmatpush.bf16.msra.mxu0 0
    %1187 = vmatpush.bf16.msra.mxu0 0
    %1188 = vmatpush.bf16.msra.mxu0 0
    %1189 = vmatpush.bf16.msra.mxu0 0
    %1190 = vmatpush.bf16.msra.mxu0 0
    %1191 = vmatpush.bf16.msra.mxu0 0
    %1192 = vmatpush.bf16.msra.mxu0 0
    %1193 = vmatpush.bf16.msra.mxu0 %v1101
    %1194 = vmatmul.bf16.gmra.mxu0 %v1142
    %v1195 = vpop.f32.mrf.mxu0
    %v1196 = vadd.f32 %v1182, %v1195
    %v1197 = vpop.f32.mrf.mxu0
    %v1198 = vadd.f32 %v1184, %v1197
    %1199 = vdwg.mxu0
    %1200 = vmatpush.bf16.msra.mxu0 %v1098
    %1201 = vmatpush.bf16.msra.mxu0 %v1094
    %1202 = vmatpush.bf16.msra.mxu0 %v1090
    %1203 = vmatpush.bf16.msra.mxu0 %v1086
    %1204 = vmatpush.bf16.msra.mxu0 %v1082
    %1205 = vmatpush.bf16.msra.mxu0 %v1078
    %1206 = vmatpush.bf16.msra.mxu0 %v1074
    %1207 = vmatpush.bf16.msra.mxu0 %v1070
    %1208 = vmatmul.bf16.gmra.mxu0 %v957
    %v1209 = vpop.f32.mrf.mxu0
    %v1210 = vadd.f32 %v944, %v1209
    %v1211 = vpop.f32.mrf.mxu0
    %v1212 = vadd.f32 %v949, %v1211
    %1213 = vdwg.mxu0
    %1214 = vmatpush.bf16.msra.mxu0 0
    %1215 = vmatpush.bf16.msra.mxu0 0
    %1216 = vmatpush.bf16.msra.mxu0 0
    %1217 = vmatpush.bf16.msra.mxu0 0
    %1218 = vmatpush.bf16.msra.mxu0 0
    %1219 = vmatpush.bf16.msra.mxu0 0
    %1220 = vmatpush.bf16.msra.mxu0 0
    %1221 = vmatpush.bf16.msra.mxu0 %v1102
    %1222 = vmatmul.bf16.gmra.mxu0 %v1142
    %v1223 = vpop.f32.mrf.mxu0
    %v1224 = vadd.f32 %v1210, %v1223
    %v1225 = vpop.f32.mrf.mxu0
    %v1226 = vadd.f32 %v1212, %v1225
    %1227 = vdwg.mxu0
    %1228 = vmatpush.bf16.msra.mxu0 %v1099
    %1229 = vmatpush.bf16.msra.mxu0 %v1095
    %1230 = vmatpush.bf16.msra.mxu0 %v1091
    %1231 = vmatpush.bf16.msra.mxu0 %v1087
    %1232 = vmatpush.bf16.msra.mxu0 %v1083
    %1233 = vmatpush.bf16.msra.mxu0 %v1079
    %1234 = vmatpush.bf16.msra.mxu0 %v1075
    %1235 = vmatpush.bf16.msra.mxu0 %v1071
    %1236 = vmatmul.bf16.gmra.mxu0 %v957
    %v1237 = vpop.f32.mrf.mxu0
    %v1238 = vadd.f32 %v944, %v1237
    %v1239 = vpop.f32.mrf.mxu0
    %v1240 = vadd.f32 %v949, %v1239
    %1241 = vdwg.mxu0
    %1242 = vmatpush.bf16.msra.mxu0 0
    %1243 = vmatpush.bf16.msra.mxu0 0
    %1244 = vmatpush.bf16.msra.mxu0 0
    %1245 = vmatpush.bf16.msra.mxu0 0
    %1246 = vmatpush.bf16.msra.mxu0 0
    %1247 = vmatpush.bf16.msra.mxu0 0
    %1248 = vmatpush.bf16.msra.mxu0 0
    %1249 = vmatpush.bf16.msra.mxu0 %v1103
    %1250 = vmatmul.bf16.gmra.mxu0 %v1142
    %v1251 = vpop.f32.mrf.mxu0
    %v1252 = vadd.f32 %v1238, %v1251
    %v1253 = vpop.f32.mrf.mxu0
    %v1254 = vadd.f32 %v1240, %v1253
    %1255 = vdwg.mxu0
    %v1256 = vmax.f32 %v1168, 0.0
    %v1257 = vmax.f32 %v1196, 0.0
    %v1258 = vmax.f32 %v1224, 0.0
    %v1259 = vmax.f32 %v1252, 0.0
    %v1260 = vmax.f32 %v1170, 0.0
    %v1261 = vmax.f32 %v1198, 0.0
    %v1262 = vmax.f32 %v1226, 0.0
    %v1263 = vmax.f32 %v1254, 0.0
    %v1264 = vld [vmem:[%s8] sm:$0xf]
    %v1265 = vld [vmem:[%s8 + $0x4] sm:$0xf]
    %v1266 = vld [vmem:[%s8 + $0x8] sm:$0xf]
    %v1267 = vld [vmem:[%s8 + $0xc] sm:$0xf]
    %v1268 = vld [vmem:[%s8 + $0x10] sm:$0xf]
    %v1269 = vld [vmem:[%s8 + $0x14] sm:$0xf]
    %v1270 = vld [vmem:[%s8 + $0x18] sm:$0xf]
    %v1271 = vld [vmem:[%s8 + $0x1c] sm:$0xf]
    %v1272 = vpack.c.bf16 %v1260, %v1256
    %v1273 = vpack.c.bf16 %v1261, %v1257
    %v1274 = vpack.c.bf16 %v1262, %v1258
    %v1275 = vpack.c.bf16 %v1263, %v1259
    %v1276 = vld [vmem:[%s9] sm:$0xff]
    %v1277 = vld [vmem:[%s9 + $0x8] sm:$0xff]
    %v1278 = vld [vmem:[%s9 + $0x10] sm:$0xff]
    %v1279 = vld [vmem:[%s9 + $0x18] sm:$0xff]
    %v1280 = vld [vmem:[%s9 + $0x20] sm:$0xff]
    %v1281 = vld [vmem:[%s9 + $0x28] sm:$0xff]
    %v1282 = vld [vmem:[%s9 + $0x30] sm:$0xff]
    %v1283 = vld [vmem:[%s9 + $0x38] sm:$0xff]
    %1285 = vset.pattern.permute.xlu0 0
    %1286 = vperm.xlu0 %1285, %v1276
    %v1287 = vpop.permute.xlu0 %1286
    %1290 = vset.pattern.permute.xlu0 0
    %1291 = vperm.xlu0 %1290, %v1277
    %v1292 = vpop.permute.xlu0 %1291
    %1295 = vset.pattern.permute.xlu0 0
    %1296 = vperm.xlu0 %1295, %v1278
    %v1297 = vpop.permute.xlu0 %1296
    %1300 = vset.pattern.permute.xlu0 0
    %1301 = vperm.xlu0 %1300, %v1279
    %v1302 = vpop.permute.xlu0 %1301
    %1305 = vset.pattern.permute.xlu0 0
    %1306 = vperm.xlu0 %1305, %v1280
    %v1307 = vpop.permute.xlu0 %1306
    %1310 = vset.pattern.permute.xlu0 0
    %1311 = vperm.xlu0 %1310, %v1281
    %v1312 = vpop.permute.xlu0 %1311
    %1315 = vset.pattern.permute.xlu0 0
    %1316 = vperm.xlu0 %1315, %v1282
    %v1317 = vpop.permute.xlu0 %1316
    %1320 = vset.pattern.permute.xlu0 0
    %1321 = vperm.xlu0 %1320, %v1283
    %v1322 = vpop.permute.xlu0 %1321
    %v1332 = vunpack.c.l.b16 %v1264
    %v1333 = vunpack.c.l.b16 %v1265
    %v1334 = vunpack.c.l.b16 %v1266
    %v1335 = vunpack.c.l.b16 %v1267
    %v1336 = vunpack.c.l.b16 %v1268
    %v1337 = vunpack.c.l.b16 %v1269
    %v1338 = vunpack.c.l.b16 %v1270
    %v1339 = vunpack.c.l.b16 %v1271
    %v1340 = vpack.c.b16 %v1333, %v1332
    %v1341 = vpack.c.b16 %v1335, %v1334
    %v1342 = vpack.c.b16 %v1337, %v1336
    %v1343 = vpack.c.b16 %v1339, %v1338
    %v1345 = vsel %vm1140, %v1340, 0
    %v1348 = vsel %vm1140, %v1341, 0
    %v1351 = vsel %vm1140, %v1342, 0
    %v1354 = vsel %vm1140, %v1343, 0
    %1356 = vmatpush.bf16.msra.mxu0 0
    %1357 = vmatpush.bf16.msra.mxu0 0
    %1358 = vmatpush.bf16.msra.mxu0 0
    %1359 = vmatpush.bf16.msra.mxu0 0
    %1360 = vmatpush.bf16.msra.mxu0 0
    %1361 = vmatpush.bf16.msra.mxu0 0
    %1362 = vmatpush.bf16.msra.mxu0 0
    %1363 = vmatpush.bf16.msra.mxu0 %v1272
    %1364 = vmatmul.bf16.gmra.mxu0 %v1345
    %v1365 = vpop.f32.mrf.mxu0
    %v1366 = vadd.f32 %v1287, %v1365
    %v1367 = vpop.f32.mrf.mxu0
    %v1368 = vadd.f32 %v1292, %v1367
    %1369 = vmatmul.bf16.gmra.mxu0 %v1348
    %v1370 = vpop.f32.mrf.mxu0
    %v1371 = vadd.f32 %v1297, %v1370
    %v1372 = vpop.f32.mrf.mxu0
    %v1373 = vadd.f32 %v1302, %v1372
    %1374 = vmatmul.bf16.gmra.mxu0 %v1351
    %v1375 = vpop.f32.mrf.mxu0
    %v1376 = vadd.f32 %v1307, %v1375
    %v1377 = vpop.f32.mrf.mxu0
    %v1378 = vadd.f32 %v1312, %v1377
    %1379 = vmatmul.bf16.gmra.mxu0 %v1354
    %v1380 = vpop.f32.mrf.mxu0
    %v1381 = vadd.f32 %v1317, %v1380
    %v1382 = vpop.f32.mrf.mxu0
    %v1383 = vadd.f32 %v1322, %v1382
    %1384 = vdwg.mxu0
    %1385 = vmatpush.bf16.msra.mxu0 0
    %1386 = vmatpush.bf16.msra.mxu0 0
    %1387 = vmatpush.bf16.msra.mxu0 0
    %1388 = vmatpush.bf16.msra.mxu0 0
    %1389 = vmatpush.bf16.msra.mxu0 0
    %1390 = vmatpush.bf16.msra.mxu0 0
    %1391 = vmatpush.bf16.msra.mxu0 0
    %1392 = vmatpush.bf16.msra.mxu0 %v1273
    %1393 = vmatmul.bf16.gmra.mxu0 %v1345
    %v1394 = vpop.f32.mrf.mxu0
    %v1395 = vadd.f32 %v1287, %v1394
    %v1396 = vpop.f32.mrf.mxu0
    %v1397 = vadd.f32 %v1292, %v1396
    %1398 = vmatmul.bf16.gmra.mxu0 %v1348
    %v1399 = vpop.f32.mrf.mxu0
    %v1400 = vadd.f32 %v1297, %v1399
    %v1401 = vpop.f32.mrf.mxu0
    %v1402 = vadd.f32 %v1302, %v1401
    %1403 = vmatmul.bf16.gmra.mxu0 %v1351
    %v1404 = vpop.f32.mrf.mxu0
    %v1405 = vadd.f32 %v1307, %v1404
    %v1406 = vpop.f32.mrf.mxu0
    %v1407 = vadd.f32 %v1312, %v1406
    %1408 = vmatmul.bf16.gmra.mxu0 %v1354
    %v1409 = vpop.f32.mrf.mxu0
    %v1410 = vadd.f32 %v1317, %v1409
    %v1411 = vpop.f32.mrf.mxu0
    %v1412 = vadd.f32 %v1322, %v1411
    %1413 = vdwg.mxu0
    %1414 = vmatpush.bf16.msra.mxu0 0
    %1415 = vmatpush.bf16.msra.mxu0 0
    %1416 = vmatpush.bf16.msra.mxu0 0
    %1417 = vmatpush.bf16.msra.mxu0 0
    %1418 = vmatpush.bf16.msra.mxu0 0
    %1419 = vmatpush.bf16.msra.mxu0 0
    %1420 = vmatpush.bf16.msra.mxu0 0
    %1421 = vmatpush.bf16.msra.mxu0 %v1274
    %1422 = vmatmul.bf16.gmra.mxu0 %v1345
    %v1423 = vpop.f32.mrf.mxu0
    %v1424 = vadd.f32 %v1287, %v1423
    %v1425 = vpop.f32.mrf.mxu0
    %v1426 = vadd.f32 %v1292, %v1425
    %1427 = vmatmul.bf16.gmra.mxu0 %v1348
    %v1428 = vpop.f32.mrf.mxu0
    %v1429 = vadd.f32 %v1297, %v1428
    %v1430 = vpop.f32.mrf.mxu0
    %v1431 = vadd.f32 %v1302, %v1430
    %1432 = vmatmul.bf16.gmra.mxu0 %v1351
    %v1433 = vpop.f32.mrf.mxu0
    %v1434 = vadd.f32 %v1307, %v1433
    %v1435 = vpop.f32.mrf.mxu0
    %v1436 = vadd.f32 %v1312, %v1435
    %1437 = vmatmul.bf16.gmra.mxu0 %v1354
    %v1438 = vpop.f32.mrf.mxu0
    %v1439 = vadd.f32 %v1317, %v1438
    %v1440 = vpop.f32.mrf.mxu0
    %v1441 = vadd.f32 %v1322, %v1440
    %1442 = vdwg.mxu0
    %1443 = vmatpush.bf16.msra.mxu0 0
    %1444 = vmatpush.bf16.msra.mxu0 0
    %1445 = vmatpush.bf16.msra.mxu0 0
    %1446 = vmatpush.bf16.msra.mxu0 0
    %1447 = vmatpush.bf16.msra.mxu0 0
    %1448 = vmatpush.bf16.msra.mxu0 0
    %1449 = vmatpush.bf16.msra.mxu0 0
    %1450 = vmatpush.bf16.msra.mxu0 %v1275
    %1451 = vmatmul.bf16.gmra.mxu0 %v1345
    %v1452 = vpop.f32.mrf.mxu0
    %v1453 = vadd.f32 %v1287, %v1452
    %v1454 = vpop.f32.mrf.mxu0
    %v1455 = vadd.f32 %v1292, %v1454
    %1456 = vmatmul.bf16.gmra.mxu0 %v1348
    %v1457 = vpop.f32.mrf.mxu0
    %v1458 = vadd.f32 %v1297, %v1457
    %v1459 = vpop.f32.mrf.mxu0
    %v1460 = vadd.f32 %v1302, %v1459
    %1461 = vmatmul.bf16.gmra.mxu0 %v1351
    %v1462 = vpop.f32.mrf.mxu0
    %v1463 = vadd.f32 %v1307, %v1462
    %v1464 = vpop.f32.mrf.mxu0
    %v1465 = vadd.f32 %v1312, %v1464
    %1466 = vmatmul.bf16.gmra.mxu0 %v1354
    %v1467 = vpop.f32.mrf.mxu0
    %v1468 = vadd.f32 %v1317, %v1467
    %v1469 = vpop.f32.mrf.mxu0
    %v1470 = vadd.f32 %v1322, %v1469
    %1471 = vdwg.mxu0
    %v1472 = vadd.f32 %v1366, %v77
    %v1473 = vadd.f32 %v1395, %v78
    %v1474 = vadd.f32 %v1424, %v79
    %v1475 = vadd.f32 %v1453, %v80
    %v1476 = vadd.f32 %v1368, %v81
    %v1477 = vadd.f32 %v1397, %v82
    %v1478 = vadd.f32 %v1426, %v83
    %v1479 = vadd.f32 %v1455, %v84
    %v1480 = vadd.f32 %v1371, %v85
    %v1481 = vadd.f32 %v1400, %v86
    %v1482 = vadd.f32 %v1429, %v87
    %v1483 = vadd.f32 %v1458, %v88
    %v1484 = vadd.f32 %v1373, %v89
    %v1485 = vadd.f32 %v1402, %v90
    %v1486 = vadd.f32 %v1431, %v91
    %v1487 = vadd.f32 %v1460, %v92
    %v1488 = vadd.f32 %v1376, %v93
    %v1489 = vadd.f32 %v1405, %v94
    %v1490 = vadd.f32 %v1434, %v95
    %v1491 = vadd.f32 %v1463, %v96
    %v1492 = vadd.f32 %v1378, %v97
    %v1493 = vadd.f32 %v1407, %v98
    %v1494 = vadd.f32 %v1436, %v99
    %v1495 = vadd.f32 %v1465, %v100
    %v1496 = vadd.f32 %v1381, %v101
    %v1497 = vadd.f32 %v1410, %v102
    %v1498 = vadd.f32 %v1439, %v103
    %v1499 = vadd.f32 %v1468, %v104
    %v1500 = vadd.f32 %v1383, %v105
    %v1501 = vadd.f32 %v1412, %v106
    %v1502 = vadd.f32 %v1441, %v107
    %v1503 = vadd.f32 %v1470, %v108
    %v1504 = vpack.c.bf16 %v1476, %v1472
    %v1505 = vpack.c.bf16 %v1477, %v1473
    %v1506 = vpack.c.bf16 %v1478, %v1474
    %v1507 = vpack.c.bf16 %v1479, %v1475
    %v1508 = vpack.c.bf16 %v1484, %v1480
    %v1509 = vpack.c.bf16 %v1485, %v1481
    %v1510 = vpack.c.bf16 %v1486, %v1482
    %v1511 = vpack.c.bf16 %v1487, %v1483
    %v1512 = vpack.c.bf16 %v1492, %v1488
    %v1513 = vpack.c.bf16 %v1493, %v1489
    %v1514 = vpack.c.bf16 %v1494, %v1490
    %v1515 = vpack.c.bf16 %v1495, %v1491
    %v1516 = vpack.c.bf16 %v1500, %v1496
    %v1517 = vpack.c.bf16 %v1501, %v1497
    %v1518 = vpack.c.bf16 %v1502, %v1498
    %v1519 = vpack.c.bf16 %v1503, %v1499
    %v1520 = vld [vmem:[%s10] sm:$0xf]
    %v1521 = vld [vmem:[%s10 + $0x4] sm:$0xf]
    %v1522 = vld [vmem:[%s11] sm:$0xff]
    %v1523 = vld [vmem:[%s11 + $0x8] sm:$0xff]
    %1525 = vset.pattern.permute.xlu0 0
    %1526 = vperm.xlu0 %1525, %v1522
    %v1527 = vpop.permute.xlu0 %1526
    %1530 = vset.pattern.permute.xlu0 0
    %1531 = vperm.xlu0 %1530, %v1523
    %v1532 = vpop.permute.xlu0 %1531
    %v1536 = vunpack.c.l.b16 %v1520
    %v1537 = vunpack.c.l.b16 %v1521
    %v1538 = vpack.c.b16 %v1537, %v1536
    %v1540 = vsel %vm208, %v1538, 0
    %1542 = vmatpush.bf16.msra.mxu0 0
    %1543 = vmatpush.bf16.msra.mxu0 0
    %1544 = vmatpush.bf16.msra.mxu0 0
    %1545 = vmatpush.bf16.msra.mxu0 0
    %1546 = vmatpush.bf16.msra.mxu0 %v1516
    %1547 = vmatpush.bf16.msra.mxu0 %v1512
    %1548 = vmatpush.bf16.msra.mxu0 %v1508
    %1549 = vmatpush.bf16.msra.mxu0 %v1504
    %1550 = vmatmul.bf16.gmra.mxu0 %v1540
    %v1551 = vpop.f32.mrf.mxu0
    %v1552 = vadd.f32 %v1527, %v1551
    %v1553 = vpop.f32.mrf.mxu0
    %v1554 = vadd.f32 %v1532, %v1553
    %1555 = vdwg.mxu0
    %1556 = vmatpush.bf16.msra.mxu0 0
    %1557 = vmatpush.bf16.msra.mxu0 0
    %1558 = vmatpush.bf16.msra.mxu0 0
    %1559 = vmatpush.bf16.msra.mxu0 0
    %1560 = vmatpush.bf16.msra.mxu0 %v1517
    %1561 = vmatpush.bf16.msra.mxu0 %v1513
    %1562 = vmatpush.bf16.msra.mxu0 %v1509
    %1563 = vmatpush.bf16.msra.mxu0 %v1505
    %1564 = vmatmul.bf16.gmra.mxu0 %v1540
    %v1565 = vpop.f32.mrf.mxu0
    %v1566 = vadd.f32 %v1527, %v1565
    %v1567 = vpop.f32.mrf.mxu0
    %v1568 = vadd.f32 %v1532, %v1567
    %1569 = vdwg.mxu0
    %1570 = vmatpush.bf16.msra.mxu0 0
    %1571 = vmatpush.bf16.msra.mxu0 0
    %1572 = vmatpush.bf16.msra.mxu0 0
    %1573 = vmatpush.bf16.msra.mxu0 0
    %1574 = vmatpush.bf16.msra.mxu0 %v1518
    %1575 = vmatpush.bf16.msra.mxu0 %v1514
    %1576 = vmatpush.bf16.msra.mxu0 %v1510
    %1577 = vmatpush.bf16.msra.mxu0 %v1506
    %1578 = vmatmul.bf16.gmra.mxu0 %v1540
    %v1579 = vpop.f32.mrf.mxu0
    %v1580 = vadd.f32 %v1527, %v1579
    %v1581 = vpop.f32.mrf.mxu0
    %v1582 = vadd.f32 %v1532, %v1581
    %1583 = vdwg.mxu0
    %1584 = vmatpush.bf16.msra.mxu0 0
    %1585 = vmatpush.bf16.msra.mxu0 0
    %1586 = vmatpush.bf16.msra.mxu0 0
    %1587 = vmatpush.bf16.msra.mxu0 0
    %1588 = vmatpush.bf16.msra.mxu0 %v1519
    %1589 = vmatpush.bf16.msra.mxu0 %v1515
    %1590 = vmatpush.bf16.msra.mxu0 %v1511
    %1591 = vmatpush.bf16.msra.mxu0 %v1507
    %1592 = vmatmul.bf16.gmra.mxu0 %v1540
    %v1593 = vpop.f32.mrf.mxu0
    %v1594 = vadd.f32 %v1527, %v1593
    %v1595 = vpop.f32.mrf.mxu0
    %v1596 = vadd.f32 %v1532, %v1595
    %1597 = vdwg.mxu0
    %v1598 = vmax.f32 %v1552, 0.0
    %v1599 = vmax.f32 %v1566, 0.0
    %v1600 = vmax.f32 %v1580, 0.0
    %v1601 = vmax.f32 %v1594, 0.0
    %v1602 = vmax.f32 %v1554, 0.0
    %v1603 = vmax.f32 %v1568, 0.0
    %v1604 = vmax.f32 %v1582, 0.0
    %v1605 = vmax.f32 %v1596, 0.0
    %v1606 = vld [vmem:[%s12] sm:$0xf]
    %v1607 = vld [vmem:[%s12 + $0x4] sm:$0xf]
    %v1608 = vld [vmem:[%s12 + $0x8] sm:$0xf]
    %v1609 = vld [vmem:[%s12 + $0xc] sm:$0xf]
    %v1610 = vld [vmem:[%s12 + $0x10] sm:$0xf]
    %v1611 = vld [vmem:[%s12 + $0x14] sm:$0xf]
    %v1612 = vld [vmem:[%s12 + $0x18] sm:$0xf]
    %v1613 = vld [vmem:[%s12 + $0x1c] sm:$0xf]
    %v1614 = vpack.c.bf16 %v1602, %v1598
    %v1615 = vpack.c.bf16 %v1603, %v1599
    %v1616 = vpack.c.bf16 %v1604, %v1600
    %v1617 = vpack.c.bf16 %v1605, %v1601
    %v1618 = vld [vmem:[%s13] sm:$0xff]
    %v1619 = vld [vmem:[%s13 + $0x8] sm:$0xff]
    %v1620 = vld [vmem:[%s13 + $0x10] sm:$0xff]
    %v1621 = vld [vmem:[%s13 + $0x18] sm:$0xff]
    %v1622 = vld [vmem:[%s13 + $0x20] sm:$0xff]
    %v1623 = vld [vmem:[%s13 + $0x28] sm:$0xff]
    %v1624 = vld [vmem:[%s13 + $0x30] sm:$0xff]
    %v1625 = vld [vmem:[%s13 + $0x38] sm:$0xff]
    %1627 = vset.pattern.permute.xlu0 0
    %1628 = vperm.xlu0 %1627, %v1618
    %v1629 = vpop.permute.xlu0 %1628
    %1632 = vset.pattern.permute.xlu0 0
    %1633 = vperm.xlu0 %1632, %v1619
    %v1634 = vpop.permute.xlu0 %1633
    %1637 = vset.pattern.permute.xlu0 0
    %1638 = vperm.xlu0 %1637, %v1620
    %v1639 = vpop.permute.xlu0 %1638
    %1642 = vset.pattern.permute.xlu0 0
    %1643 = vperm.xlu0 %1642, %v1621
    %v1644 = vpop.permute.xlu0 %1643
    %1647 = vset.pattern.permute.xlu0 0
    %1648 = vperm.xlu0 %1647, %v1622
    %v1649 = vpop.permute.xlu0 %1648
    %1652 = vset.pattern.permute.xlu0 0
    %1653 = vperm.xlu0 %1652, %v1623
    %v1654 = vpop.permute.xlu0 %1653
    %1657 = vset.pattern.permute.xlu0 0
    %1658 = vperm.xlu0 %1657, %v1624
    %v1659 = vpop.permute.xlu0 %1658
    %1662 = vset.pattern.permute.xlu0 0
    %1663 = vperm.xlu0 %1662, %v1625
    %v1664 = vpop.permute.xlu0 %1663
    %v1674 = vunpack.c.l.b16 %v1606
    %v1675 = vunpack.c.l.b16 %v1607
    %v1676 = vunpack.c.l.b16 %v1608
    %v1677 = vunpack.c.l.b16 %v1609
    %v1678 = vunpack.c.l.b16 %v1610
    %v1679 = vunpack.c.l.b16 %v1611
    %v1680 = vunpack.c.l.b16 %v1612
    %v1681 = vunpack.c.l.b16 %v1613
    %v1682 = vpack.c.b16 %v1675, %v1674
    %v1683 = vpack.c.b16 %v1677, %v1676
    %v1684 = vpack.c.b16 %v1679, %v1678
    %v1685 = vpack.c.b16 %v1681, %v1680
    %v1687 = vsel %vm1140, %v1682, 0
    %v1690 = vsel %vm1140, %v1683, 0
    %v1693 = vsel %vm1140, %v1684, 0
    %v1696 = vsel %vm1140, %v1685, 0
    %1698 = vmatpush.bf16.msra.mxu0 0
    %1699 = vmatpush.bf16.msra.mxu0 0
    %1700 = vmatpush.bf16.msra.mxu0 0
    %1701 = vmatpush.bf16.msra.mxu0 0
    %1702 = vmatpush.bf16.msra.mxu0 0
    %1703 = vmatpush.bf16.msra.mxu0 0
    %1704 = vmatpush.bf16.msra.mxu0 0
    %1705 = vmatpush.bf16.msra.mxu0 %v1614
    %1706 = vmatmul.bf16.gmra.mxu0 %v1687
    %v1707 = vpop.f32.mrf.mxu0
    %v1708 = vadd.f32 %v1629, %v1707
    %v1709 = vpop.f32.mrf.mxu0
    %v1710 = vadd.f32 %v1634, %v1709
    %1711 = vmatmul.bf16.gmra.mxu0 %v1690
    %v1712 = vpop.f32.mrf.mxu0
    %v1713 = vadd.f32 %v1639, %v1712
    %v1714 = vpop.f32.mrf.mxu0
    %v1715 = vadd.f32 %v1644, %v1714
    %1716 = vmatmul.bf16.gmra.mxu0 %v1693
    %v1717 = vpop.f32.mrf.mxu0
    %v1718 = vadd.f32 %v1649, %v1717
    %v1719 = vpop.f32.mrf.mxu0
    %v1720 = vadd.f32 %v1654, %v1719
    %1721 = vmatmul.bf16.gmra.mxu0 %v1696
    %v1722 = vpop.f32.mrf.mxu0
    %v1723 = vadd.f32 %v1659, %v1722
    %v1724 = vpop.f32.mrf.mxu0
    %v1725 = vadd.f32 %v1664, %v1724
    %1726 = vdwg.mxu0
    %1727 = vmatpush.bf16.msra.mxu0 0
    %1728 = vmatpush.bf16.msra.mxu0 0
    %1729 = vmatpush.bf16.msra.mxu0 0
    %1730 = vmatpush.bf16.msra.mxu0 0
    %1731 = vmatpush.bf16.msra.mxu0 0
    %1732 = vmatpush.bf16.msra.mxu0 0
    %1733 = vmatpush.bf16.msra.mxu0 0
    %1734 = vmatpush.bf16.msra.mxu0 %v1615
    %1735 = vmatmul.bf16.gmra.mxu0 %v1687
    %v1736 = vpop.f32.mrf.mxu0
    %v1737 = vadd.f32 %v1629, %v1736
    %v1738 = vpop.f32.mrf.mxu0
    %v1739 = vadd.f32 %v1634, %v1738
    %1740 = vmatmul.bf16.gmra.mxu0 %v1690
    %v1741 = vpop.f32.mrf.mxu0
    %v1742 = vadd.f32 %v1639, %v1741
    %v1743 = vpop.f32.mrf.mxu0
    %v1744 = vadd.f32 %v1644, %v1743
    %1745 = vmatmul.bf16.gmra.mxu0 %v1693
    %v1746 = vpop.f32.mrf.mxu0
    %v1747 = vadd.f32 %v1649, %v1746
    %v1748 = vpop.f32.mrf.mxu0
    %v1749 = vadd.f32 %v1654, %v1748
    %1750 = vmatmul.bf16.gmra.mxu0 %v1696
    %v1751 = vpop.f32.mrf.mxu0
    %v1752 = vadd.f32 %v1659, %v1751
    %v1753 = vpop.f32.mrf.mxu0
    %v1754 = vadd.f32 %v1664, %v1753
    %1755 = vdwg.mxu0
    %1756 = vmatpush.bf16.msra.mxu0 0
    %1757 = vmatpush.bf16.msra.mxu0 0
    %1758 = vmatpush.bf16.msra.mxu0 0
    %1759 = vmatpush.bf16.msra.mxu0 0
    %1760 = vmatpush.bf16.msra.mxu0 0
    %1761 = vmatpush.bf16.msra.mxu0 0
    %1762 = vmatpush.bf16.msra.mxu0 0
    %1763 = vmatpush.bf16.msra.mxu0 %v1616
    %1764 = vmatmul.bf16.gmra.mxu0 %v1687
    %v1765 = vpop.f32.mrf.mxu0
    %v1766 = vadd.f32 %v1629, %v1765
    %v1767 = vpop.f32.mrf.mxu0
    %v1768 = vadd.f32 %v1634, %v1767
    %1769 = vmatmul.bf16.gmra.mxu0 %v1690
    %v1770 = vpop.f32.mrf.mxu0
    %v1771 = vadd.f32 %v1639, %v1770
    %v1772 = vpop.f32.mrf.mxu0
    %v1773 = vadd.f32 %v1644, %v1772
    %1774 = vmatmul.bf16.gmra.mxu0 %v1693
    %v1775 = vpop.f32.mrf.mxu0
    %v1776 = vadd.f32 %v1649, %v1775
    %v1777 = vpop.f32.mrf.mxu0
    %v1778 = vadd.f32 %v1654, %v1777
    %1779 = vmatmul.bf16.gmra.mxu0 %v1696
    %v1780 = vpop.f32.mrf.mxu0
    %v1781 = vadd.f32 %v1659, %v1780
    %v1782 = vpop.f32.mrf.mxu0
    %v1783 = vadd.f32 %v1664, %v1782
    %1784 = vdwg.mxu0
    %1785 = vmatpush.bf16.msra.mxu0 0
    %1786 = vmatpush.bf16.msra.mxu0 0
    %1787 = vmatpush.bf16.msra.mxu0 0
    %1788 = vmatpush.bf16.msra.mxu0 0
    %1789 = vmatpush.bf16.msra.mxu0 0
    %1790 = vmatpush.bf16.msra.mxu0 0
    %1791 = vmatpush.bf16.msra.mxu0 0
    %1792 = vmatpush.bf16.msra.mxu0 %v1617
    %1793 = vmatmul.bf16.gmra.mxu0 %v1687
    %v1794 = vpop.f32.mrf.mxu0
    %v1795 = vadd.f32 %v1629, %v1794
    %v1796 = vpop.f32.mrf.mxu0
    %v1797 = vadd.f32 %v1634, %v1796
    %1798 = vmatmul.bf16.gmra.mxu0 %v1690
    %v1799 = vpop.f32.mrf.mxu0
    %v1800 = vadd.f32 %v1639, %v1799
    %v1801 = vpop.f32.mrf.mxu0
    %v1802 = vadd.f32 %v1644, %v1801
    %1803 = vmatmul.bf16.gmra.mxu0 %v1693
    %v1804 = vpop.f32.mrf.mxu0
    %v1805 = vadd.f32 %v1649, %v1804
    %v1806 = vpop.f32.mrf.mxu0
    %v1807 = vadd.f32 %v1654, %v1806
    %1808 = vmatmul.bf16.gmra.mxu0 %v1696
    %v1809 = vpop.f32.mrf.mxu0
    %v1810 = vadd.f32 %v1659, %v1809
    %v1811 = vpop.f32.mrf.mxu0
    %v1812 = vadd.f32 %v1664, %v1811
    %1813 = vdwg.mxu0
    %v1814 = vld [vmem:[%s2] sm:$0xf]
    %v1815 = vld [vmem:[%s2 + $0x4] sm:$0xf]
    %v1816 = vld [vmem:[%s2 + $0x8] sm:$0xf]
    %v1817 = vld [vmem:[%s2 + $0xc] sm:$0xf]
    %v1818 = vld [vmem:[%s2 + $0x10] sm:$0xf]
    %v1819 = vld [vmem:[%s2 + $0x14] sm:$0xf]
    %v1820 = vld [vmem:[%s2 + $0x18] sm:$0xf]
    %v1821 = vld [vmem:[%s2 + $0x1c] sm:$0xf]
    %v1822 = vld [vmem:[%s2 + $0x20] sm:$0xf]
    %v1823 = vld [vmem:[%s2 + $0x24] sm:$0xf]
    %v1824 = vld [vmem:[%s2 + $0x28] sm:$0xf]
    %v1825 = vld [vmem:[%s2 + $0x2c] sm:$0xf]
    %v1826 = vld [vmem:[%s2 + $0x30] sm:$0xf]
    %v1827 = vld [vmem:[%s2 + $0x34] sm:$0xf]
    %v1828 = vld [vmem:[%s2 + $0x38] sm:$0xf]
    %v1829 = vld [vmem:[%s2 + $0x3c] sm:$0xf]
    %v1830 = vld [vmem:[%s2 + $0x40] sm:$0xf]
    %v1831 = vld [vmem:[%s2 + $0x44] sm:$0xf]
    %v1832 = vld [vmem:[%s2 + $0x48] sm:$0xf]
    %v1833 = vld [vmem:[%s2 + $0x4c] sm:$0xf]
    %v1834 = vld [vmem:[%s2 + $0x50] sm:$0xf]
    %v1835 = vld [vmem:[%s2 + $0x54] sm:$0xf]
    %v1836 = vld [vmem:[%s2 + $0x58] sm:$0xf]
    %v1837 = vld [vmem:[%s2 + $0x5c] sm:$0xf]
    %v1838 = vld [vmem:[%s2 + $0x60] sm:$0xf]
    %v1839 = vld [vmem:[%s2 + $0x64] sm:$0xf]
    %v1840 = vld [vmem:[%s2 + $0x68] sm:$0xf]
    %v1841 = vld [vmem:[%s2 + $0x6c] sm:$0xf]
    %v1842 = vld [vmem:[%s2 + $0x70] sm:$0xf]
    %v1843 = vld [vmem:[%s2 + $0x74] sm:$0xf]
    %v1844 = vld [vmem:[%s2 + $0x78] sm:$0xf]
    %v1845 = vld [vmem:[%s2 + $0x7c] sm:$0xf]
    %v1846 = vld [vmem:[%s2 + $0x80] sm:$0xf]
    %v1847 = vld [vmem:[%s2 + $0x84] sm:$0xf]
    %v1848 = vld [vmem:[%s2 + $0x88] sm:$0xf]
    %v1849 = vld [vmem:[%s2 + $0x8c] sm:$0xf]
    %v1850 = vld [vmem:[%s2 + $0x90] sm:$0xf]
    %v1851 = vld [vmem:[%s2 + $0x94] sm:$0xf]
    %v1852 = vld [vmem:[%s2 + $0x98] sm:$0xf]
    %v1853 = vld [vmem:[%s2 + $0x9c] sm:$0xf]
    %v1854 = vld [vmem:[%s2 + $0xa0] sm:$0xf]
    %v1855 = vld [vmem:[%s2 + $0xa4] sm:$0xf]
    %v1856 = vld [vmem:[%s2 + $0xa8] sm:$0xf]
    %v1857 = vld [vmem:[%s2 + $0xac] sm:$0xf]
    %v1858 = vld [vmem:[%s2 + $0xb0] sm:$0xf]
    %v1859 = vld [vmem:[%s2 + $0xb4] sm:$0xf]
    %v1860 = vld [vmem:[%s2 + $0xb8] sm:$0xf]
    %v1861 = vld [vmem:[%s2 + $0xbc] sm:$0xf]
    %v1862 = vld [vmem:[%s2 + $0xc0] sm:$0xf]
    %v1863 = vld [vmem:[%s2 + $0xc4] sm:$0xf]
    %v1864 = vld [vmem:[%s2 + $0xc8] sm:$0xf]
    %v1865 = vld [vmem:[%s2 + $0xcc] sm:$0xf]
    %v1866 = vld [vmem:[%s2 + $0xd0] sm:$0xf]
    %v1867 = vld [vmem:[%s2 + $0xd4] sm:$0xf]
    %v1868 = vld [vmem:[%s2 + $0xd8] sm:$0xf]
    %v1869 = vld [vmem:[%s2 + $0xdc] sm:$0xf]
    %v1870 = vld [vmem:[%s2 + $0xe0] sm:$0xf]
    %v1871 = vld [vmem:[%s2 + $0xe4] sm:$0xf]
    %v1872 = vld [vmem:[%s2 + $0xe8] sm:$0xf]
    %v1873 = vld [vmem:[%s2 + $0xec] sm:$0xf]
    %v1874 = vld [vmem:[%s2 + $0xf0] sm:$0xf]
    %v1875 = vld [vmem:[%s2 + $0xf4] sm:$0xf]
    %v1876 = vld [vmem:[%s2 + $0xf8] sm:$0xf]
    %v1877 = vld [vmem:[%s2 + $0xfc] sm:$0xf]
    %v1942 = vunpack.c.l.b16 %v1814
    %v1943 = vunpack.c.l.b16 %v1815
    %v1944 = vunpack.c.l.b16 %v1816
    %v1945 = vunpack.c.l.b16 %v1817
    %v1946 = vunpack.c.l.b16 %v1818
    %v1947 = vunpack.c.l.b16 %v1819
    %v1948 = vunpack.c.l.b16 %v1820
    %v1949 = vunpack.c.l.b16 %v1821
    %v1950 = vunpack.c.l.b16 %v1822
    %v1951 = vunpack.c.l.b16 %v1823
    %v1952 = vunpack.c.l.b16 %v1824
    %v1953 = vunpack.c.l.b16 %v1825
    %v1954 = vunpack.c.l.b16 %v1826
    %v1955 = vunpack.c.l.b16 %v1827
    %v1956 = vunpack.c.l.b16 %v1828
    %v1957 = vunpack.c.l.b16 %v1829
    %v1958 = vunpack.c.l.b16 %v1830
    %v1959 = vunpack.c.l.b16 %v1831
    %v1960 = vunpack.c.l.b16 %v1832
    %v1961 = vunpack.c.l.b16 %v1833
    %v1962 = vunpack.c.l.b16 %v1834
    %v1963 = vunpack.c.l.b16 %v1835
    %v1964 = vunpack.c.l.b16 %v1836
    %v1965 = vunpack.c.l.b16 %v1837
    %v1966 = vunpack.c.l.b16 %v1838
    %v1967 = vunpack.c.l.b16 %v1839
    %v1968 = vunpack.c.l.b16 %v1840
    %v1969 = vunpack.c.l.b16 %v1841
    %v1970 = vunpack.c.l.b16 %v1842
    %v1971 = vunpack.c.l.b16 %v1843
    %v1972 = vunpack.c.l.b16 %v1844
    %v1973 = vunpack.c.l.b16 %v1845
    %v1974 = vunpack.c.l.b16 %v1846
    %v1975 = vunpack.c.l.b16 %v1847
    %v1976 = vunpack.c.l.b16 %v1848
    %v1977 = vunpack.c.l.b16 %v1849
    %v1978 = vunpack.c.l.b16 %v1850
    %v1979 = vunpack.c.l.b16 %v1851
    %v1980 = vunpack.c.l.b16 %v1852
    %v1981 = vunpack.c.l.b16 %v1853
    %v1982 = vunpack.c.l.b16 %v1854
    %v1983 = vunpack.c.l.b16 %v1855
    %v1984 = vunpack.c.l.b16 %v1856
    %v1985 = vunpack.c.l.b16 %v1857
    %v1986 = vunpack.c.l.b16 %v1858
    %v1987 = vunpack.c.l.b16 %v1859
    %v1988 = vunpack.c.l.b16 %v1860
    %v1989 = vunpack.c.l.b16 %v1861
    %v1990 = vunpack.c.l.b16 %v1862
    %v1991 = vunpack.c.l.b16 %v1863
    %v1992 = vunpack.c.l.b16 %v1864
    %v1993 = vunpack.c.l.b16 %v1865
    %v1994 = vunpack.c.l.b16 %v1866
    %v1995 = vunpack.c.l.b16 %v1867
    %v1996 = vunpack.c.l.b16 %v1868
    %v1997 = vunpack.c.l.b16 %v1869
    %v1998 = vunpack.c.l.b16 %v1870
    %v1999 = vunpack.c.l.b16 %v1871
    %v2000 = vunpack.c.l.b16 %v1872
    %v2001 = vunpack.c.l.b16 %v1873
    %v2002 = vunpack.c.l.b16 %v1874
    %v2003 = vunpack.c.l.b16 %v1875
    %v2004 = vunpack.c.l.b16 %v1876
    %v2005 = vunpack.c.l.b16 %v1877
    %v2006 = vpack.c.b16 %v1943, %v1942
    %v2007 = vpack.c.b16 %v1945, %v1944
    %v2008 = vpack.c.b16 %v1947, %v1946
    %v2009 = vpack.c.b16 %v1949, %v1948
    %v2010 = vpack.c.b16 %v1951, %v1950
    %v2011 = vpack.c.b16 %v1953, %v1952
    %v2012 = vpack.c.b16 %v1955, %v1954
    %v2013 = vpack.c.b16 %v1957, %v1956
    %v2014 = vpack.c.b16 %v1959, %v1958
    %v2015 = vpack.c.b16 %v1961, %v1960
    %v2016 = vpack.c.b16 %v1963, %v1962
    %v2017 = vpack.c.b16 %v1965, %v1964
    %v2018 = vpack.c.b16 %v1967, %v1966
    %v2019 = vpack.c.b16 %v1969, %v1968
    %v2020 = vpack.c.b16 %v1971, %v1970
    %v2021 = vpack.c.b16 %v1973, %v1972
    %v2022 = vpack.c.b16 %v1975, %v1974
    %v2023 = vpack.c.b16 %v1977, %v1976
    %v2024 = vpack.c.b16 %v1979, %v1978
    %v2025 = vpack.c.b16 %v1981, %v1980
    %v2026 = vpack.c.b16 %v1983, %v1982
    %v2027 = vpack.c.b16 %v1985, %v1984
    %v2028 = vpack.c.b16 %v1987, %v1986
    %v2029 = vpack.c.b16 %v1989, %v1988
    %v2030 = vpack.c.b16 %v1991, %v1990
    %v2031 = vpack.c.b16 %v1993, %v1992
    %v2032 = vpack.c.b16 %v1995, %v1994
    %v2033 = vpack.c.b16 %v1997, %v1996
    %v2034 = vpack.c.b16 %v1999, %v1998
    %v2035 = vpack.c.b16 %v2001, %v2000
    %v2036 = vpack.c.b16 %v2003, %v2002
    %v2037 = vpack.c.b16 %v2005, %v2004
    %2070 = vmatpush.bf16.msra.mxu0 %v2013
    %2071 = vmatpush.bf16.msra.mxu0 %v2012
    %2072 = vmatpush.bf16.msra.mxu0 %v2011
    %2073 = vmatpush.bf16.msra.mxu0 %v2010
    %2074 = vmatpush.bf16.msra.mxu0 %v2009
    %2075 = vmatpush.bf16.msra.mxu0 %v2008
    %2076 = vmatpush.bf16.msra.mxu0 %v2007
    %2077 = vmatpush.bf16.msra.mxu0 %v2006
    %2078 = vmatmul.bf16.gmra.mxu0 %v1504
    %v2079 = vpop.f32.mrf.mxu0
    %v2080 = vadd.f32 0.0, %v2079
    %v2081 = vpop.f32.mrf.mxu0
    %v2082 = vadd.f32 0.0, %v2081
    %2083 = vmatmul.bf16.gmra.mxu0 %v1508
    %v2084 = vpop.f32.mrf.mxu0
    %v2085 = vadd.f32 0.0, %v2084
    %v2086 = vpop.f32.mrf.mxu0
    %v2087 = vadd.f32 0.0, %v2086
    %2088 = vmatmul.bf16.gmra.mxu0 %v1512
    %v2089 = vpop.f32.mrf.mxu0
    %v2090 = vadd.f32 0.0, %v2089
    %v2091 = vpop.f32.mrf.mxu0
    %v2092 = vadd.f32 0.0, %v2091
    %2093 = vmatmul.bf16.gmra.mxu0 %v1516
    %v2094 = vpop.f32.mrf.mxu0
    %v2095 = vadd.f32 0.0, %v2094
    %v2096 = vpop.f32.mrf.mxu0
    %v2097 = vadd.f32 0.0, %v2096
    %2098 = vdwg.mxu0
    %2099 = vmatpush.bf16.msra.mxu0 %v2021
    %2100 = vmatpush.bf16.msra.mxu0 %v2020
    %2101 = vmatpush.bf16.msra.mxu0 %v2019
    %2102 = vmatpush.bf16.msra.mxu0 %v2018
    %2103 = vmatpush.bf16.msra.mxu0 %v2017
    %2104 = vmatpush.bf16.msra.mxu0 %v2016
    %2105 = vmatpush.bf16.msra.mxu0 %v2015
    %2106 = vmatpush.bf16.msra.mxu0 %v2014
    %2107 = vmatmul.bf16.gmra.mxu0 %v1505
    %v2108 = vpop.f32.mrf.mxu0
    %v2109 = vadd.f32 %v2080, %v2108
    %v2110 = vpop.f32.mrf.mxu0
    %v2111 = vadd.f32 %v2082, %v2110
    %2112 = vmatmul.bf16.gmra.mxu0 %v1509
    %v2113 = vpop.f32.mrf.mxu0
    %v2114 = vadd.f32 %v2085, %v2113
    %v2115 = vpop.f32.mrf.mxu0
    %v2116 = vadd.f32 %v2087, %v2115
    %2117 = vmatmul.bf16.gmra.mxu0 %v1513
    %v2118 = vpop.f32.mrf.mxu0
    %v2119 = vadd.f32 %v2090, %v2118
    %v2120 = vpop.f32.mrf.mxu0
    %v2121 = vadd.f32 %v2092, %v2120
    %2122 = vmatmul.bf16.gmra.mxu0 %v1517
    %v2123 = vpop.f32.mrf.mxu0
    %v2124 = vadd.f32 %v2095, %v2123
    %v2125 = vpop.f32.mrf.mxu0
    %v2126 = vadd.f32 %v2097, %v2125
    %2127 = vdwg.mxu0
    %2128 = vmatpush.bf16.msra.mxu0 %v2029
    %2129 = vmatpush.bf16.msra.mxu0 %v2028
    %2130 = vmatpush.bf16.msra.mxu0 %v2027
    %2131 = vmatpush.bf16.msra.mxu0 %v2026
    %2132 = vmatpush.bf16.msra.mxu0 %v2025
    %2133 = vmatpush.bf16.msra.mxu0 %v2024
    %2134 = vmatpush.bf16.msra.mxu0 %v2023
    %2135 = vmatpush.bf16.msra.mxu0 %v2022
    %2136 = vmatmul.bf16.gmra.mxu0 %v1506
    %v2137 = vpop.f32.mrf.mxu0
    %v2138 = vadd.f32 %v2109, %v2137
    %v2139 = vpop.f32.mrf.mxu0
    %v2140 = vadd.f32 %v2111, %v2139
    %2141 = vmatmul.bf16.gmra.mxu0 %v1510
    %v2142 = vpop.f32.mrf.mxu0
    %v2143 = vadd.f32 %v2114, %v2142
    %v2144 = vpop.f32.mrf.mxu0
    %v2145 = vadd.f32 %v2116, %v2144
    %2146 = vmatmul.bf16.gmra.mxu0 %v1514
    %v2147 = vpop.f32.mrf.mxu0
    %v2148 = vadd.f32 %v2119, %v2147
    %v2149 = vpop.f32.mrf.mxu0
    %v2150 = vadd.f32 %v2121, %v2149
    %2151 = vmatmul.bf16.gmra.mxu0 %v1518
    %v2152 = vpop.f32.mrf.mxu0
    %v2153 = vadd.f32 %v2124, %v2152
    %v2154 = vpop.f32.mrf.mxu0
    %v2155 = vadd.f32 %v2126, %v2154
    %2156 = vdwg.mxu0
    %2157 = vmatpush.bf16.msra.mxu0 %v2037
    %2158 = vmatpush.bf16.msra.mxu0 %v2036
    %2159 = vmatpush.bf16.msra.mxu0 %v2035
    %2160 = vmatpush.bf16.msra.mxu0 %v2034
    %2161 = vmatpush.bf16.msra.mxu0 %v2033
    %2162 = vmatpush.bf16.msra.mxu0 %v2032
    %2163 = vmatpush.bf16.msra.mxu0 %v2031
    %2164 = vmatpush.bf16.msra.mxu0 %v2030
    %2165 = vmatmul.bf16.gmra.mxu0 %v1507
    %v2166 = vpop.f32.mrf.mxu0
    %v2167 = vadd.f32 %v2138, %v2166
    %v2168 = vpop.f32.mrf.mxu0
    %v2169 = vadd.f32 %v2140, %v2168
    %2170 = vmatmul.bf16.gmra.mxu0 %v1511
    %v2171 = vpop.f32.mrf.mxu0
    %v2172 = vadd.f32 %v2143, %v2171
    %v2173 = vpop.f32.mrf.mxu0
    %v2174 = vadd.f32 %v2145, %v2173
    %2175 = vmatmul.bf16.gmra.mxu0 %v1515
    %v2176 = vpop.f32.mrf.mxu0
    %v2177 = vadd.f32 %v2148, %v2176
    %v2178 = vpop.f32.mrf.mxu0
    %v2179 = vadd.f32 %v2150, %v2178
    %2180 = vmatmul.bf16.gmra.mxu0 %v1519
    %v2181 = vpop.f32.mrf.mxu0
    %v2182 = vadd.f32 %v2153, %v2181
    %v2183 = vpop.f32.mrf.mxu0
    %v2184 = vadd.f32 %v2155, %v2183
    %2185 = vdwg.mxu0
    %v2186 = vmul.f32 %v2167, 0.00390625
    %v2187 = vmul.f32 %v2169, 0.00390625
    %v2188 = vmul.f32 %v2172, 0.00390625
    %v2189 = vmul.f32 %v2174, 0.00390625
    %v2190 = vmul.f32 %v2177, 0.00390625
    %v2191 = vmul.f32 %v2179, 0.00390625
    %v2192 = vmul.f32 %v2182, 0.00390625
    %v2193 = vmul.f32 %v2184, 0.00390625
    %v2194 = vld [vmem:[%s14] sm:$0xf]
    %v2195 = vld [vmem:[%s14 + $0x4] sm:$0xf]
    %v2196 = vpack.c.bf16 %v2187, %v2186
    %v2197 = vpack.c.bf16 %v2189, %v2188
    %v2198 = vpack.c.bf16 %v2191, %v2190
    %v2199 = vpack.c.bf16 %v2193, %v2192
    %v2200 = vld [vmem:[%s15] sm:$0xff]
    %v2201 = vld [vmem:[%s15 + $0x8] sm:$0xff]
    %2203 = vset.pattern.permute.xlu0 0
    %2204 = vperm.xlu0 %2203, %v2200
    %v2205 = vpop.permute.xlu0 %2204
    %2208 = vset.pattern.permute.xlu0 0
    %2209 = vperm.xlu0 %2208, %v2201
    %v2210 = vpop.permute.xlu0 %2209
    %v2214 = vunpack.c.l.b16 %v2194
    %v2215 = vunpack.c.l.b16 %v2195
    %v2216 = vpack.c.b16 %v2215, %v2214
    %v2218 = vsel %vm208, %v2216, 0
    %2220 = vmatpush.bf16.msra.mxu0 0
    %2221 = vmatpush.bf16.msra.mxu0 0
    %2222 = vmatpush.bf16.msra.mxu0 0
    %2223 = vmatpush.bf16.msra.mxu0 0
    %2224 = vmatpush.bf16.msra.mxu0 %v2199
    %2225 = vmatpush.bf16.msra.mxu0 %v2198
    %2226 = vmatpush.bf16.msra.mxu0 %v2197
    %2227 = vmatpush.bf16.msra.mxu0 %v2196
    %2228 = vmatmul.bf16.gmra.mxu0 %v2218
    %v2229 = vpop.f32.mrf.mxu0
    %v2230 = vadd.f32 %v2205, %v2229
    %v2231 = vpop.f32.mrf.mxu0
    %v2232 = vadd.f32 %v2210, %v2231
    %2233 = vdwg.mxu0
    %v2234 = vmax.f32 %v2230, 0.0
    %v2235 = vmax.f32 %v2232, 0.0
    %v2236 = vld [vmem:[%s16] sm:$0xf]
    %v2237 = vld [vmem:[%s16 + $0x4] sm:$0xf]
    %v2238 = vld [vmem:[%s16 + $0x8] sm:$0xf]
    %v2239 = vld [vmem:[%s16 + $0xc] sm:$0xf]
    %v2240 = vld [vmem:[%s16 + $0x10] sm:$0xf]
    %v2241 = vld [vmem:[%s16 + $0x14] sm:$0xf]
    %v2242 = vld [vmem:[%s16 + $0x18] sm:$0xf]
    %v2243 = vld [vmem:[%s16 + $0x1c] sm:$0xf]
    %v2244 = vpack.c.bf16 %v2235, %v2234
    %v2245 = vld [vmem:[%s17] sm:$0xff]
    %v2246 = vld [vmem:[%s17 + $0x8] sm:$0xff]
    %v2247 = vld [vmem:[%s17 + $0x10] sm:$0xff]
    %v2248 = vld [vmem:[%s17 + $0x18] sm:$0xff]
    %v2249 = vld [vmem:[%s17 + $0x20] sm:$0xff]
    %v2250 = vld [vmem:[%s17 + $0x28] sm:$0xff]
    %v2251 = vld [vmem:[%s17 + $0x30] sm:$0xff]
    %v2252 = vld [vmem:[%s17 + $0x38] sm:$0xff]
    %2254 = vset.pattern.permute.xlu0 0
    %2255 = vperm.xlu0 %2254, %v2245
    %v2256 = vpop.permute.xlu0 %2255
    %2259 = vset.pattern.permute.xlu0 0
    %2260 = vperm.xlu0 %2259, %v2246
    %v2261 = vpop.permute.xlu0 %2260
    %2264 = vset.pattern.permute.xlu0 0
    %2265 = vperm.xlu0 %2264, %v2247
    %v2266 = vpop.permute.xlu0 %2265
    %2269 = vset.pattern.permute.xlu0 0
    %2270 = vperm.xlu0 %2269, %v2248
    %v2271 = vpop.permute.xlu0 %2270
    %2274 = vset.pattern.permute.xlu0 0
    %2275 = vperm.xlu0 %2274, %v2249
    %v2276 = vpop.permute.xlu0 %2275
    %2279 = vset.pattern.permute.xlu0 0
    %2280 = vperm.xlu0 %2279, %v2250
    %v2281 = vpop.permute.xlu0 %2280
    %2284 = vset.pattern.permute.xlu0 0
    %2285 = vperm.xlu0 %2284, %v2251
    %v2286 = vpop.permute.xlu0 %2285
    %2289 = vset.pattern.permute.xlu0 0
    %2290 = vperm.xlu0 %2289, %v2252
    %v2291 = vpop.permute.xlu0 %2290
    %v2301 = vunpack.c.l.b16 %v2236
    %v2302 = vunpack.c.l.b16 %v2237
    %v2303 = vunpack.c.l.b16 %v2238
    %v2304 = vunpack.c.l.b16 %v2239
    %v2305 = vunpack.c.l.b16 %v2240
    %v2306 = vunpack.c.l.b16 %v2241
    %v2307 = vunpack.c.l.b16 %v2242
    %v2308 = vunpack.c.l.b16 %v2243
    %v2309 = vpack.c.b16 %v2302, %v2301
    %v2310 = vpack.c.b16 %v2304, %v2303
    %v2311 = vpack.c.b16 %v2306, %v2305
    %v2312 = vpack.c.b16 %v2308, %v2307
    %v2314 = vsel %vm1140, %v2309, 0
    %v2317 = vsel %vm1140, %v2310, 0
    %v2320 = vsel %vm1140, %v2311, 0
    %v2323 = vsel %vm1140, %v2312, 0
    %2325 = vmatpush.bf16.msra.mxu0 0
    %2326 = vmatpush.bf16.msra.mxu0 0
    %2327 = vmatpush.bf16.msra.mxu0 0
    %2328 = vmatpush.bf16.msra.mxu0 0
    %2329 = vmatpush.bf16.msra.mxu0 0
    %2330 = vmatpush.bf16.msra.mxu0 0
    %2331 = vmatpush.bf16.msra.mxu0 0
    %2332 = vmatpush.bf16.msra.mxu0 %v2244
    %2333 = vmatmul.bf16.gmra.mxu0 %v2314
    %v2334 = vpop.f32.mrf.mxu0
    %v2335 = vadd.f32 %v2256, %v2334
    %v2336 = vpop.f32.mrf.mxu0
    %v2337 = vadd.f32 %v2261, %v2336
    %2338 = vmatmul.bf16.gmra.mxu0 %v2317
    %v2339 = vpop.f32.mrf.mxu0
    %v2340 = vadd.f32 %v2266, %v2339
    %v2341 = vpop.f32.mrf.mxu0
    %v2342 = vadd.f32 %v2271, %v2341
    %2343 = vmatmul.bf16.gmra.mxu0 %v2320
    %v2344 = vpop.f32.mrf.mxu0
    %v2345 = vadd.f32 %v2276, %v2344
    %v2346 = vpop.f32.mrf.mxu0
    %v2347 = vadd.f32 %v2281, %v2346
    %2348 = vmatmul.bf16.gmra.mxu0 %v2323
    %v2349 = vpop.f32.mrf.mxu0
    %v2350 = vadd.f32 %v2286, %v2349
    %v2351 = vpop.f32.mrf.mxu0
    %v2352 = vadd.f32 %v2291, %v2351
    %2353 = vdwg.mxu0
    %v2354 = vpack.c.bf16 %v2337, %v2335
    %v2355 = vpack.c.bf16 %v2342, %v2340
    %v2356 = vpack.c.bf16 %v2347, %v2345
    %v2357 = vpack.c.bf16 %v2352, %v2350
    %v2358 = vld [vmem:[%s3] sm:$0xf]
    %2360 = vst [vmem:[#allocation1] ss:$9 sm:$0xff] %v2358
    %v2361 = vld [vmem:[#allocation1] sm:$0xff]
    %v2362 = vld [vmem:[#allocation1 + $0x9] sm:$0xff]
    %v2363 = vld [vmem:[#allocation1 + $0x12] sm:$0xff]
    %v2364 = vld [vmem:[#allocation1 + $0x1b] sm:$0xff]
    %vm2365 = vcmask 15360
    %v2367 = vsel %vm2365, %v2354, 0
    %v2370 = vsel %vm2365, %v2355, 0
    %v2373 = vsel %vm2365, %v2356, 0
    %v2376 = vsel %vm2365, %v2357, 0
    %vm2378 = vcmask 1040384
    %v2379 = vsel %vm2378, %v2361, 0
    %v2381 = vsel %vm2378, %v2362, 0
    %v2383 = vsel %vm2378, %v2363, 0
    %v2385 = vsel %vm2378, %v2364, 0
    %2387 = vmatpush.bf16.msra.mxu0 0
    %2388 = vmatpush.bf16.msra.mxu0 0
    %2389 = vmatpush.bf16.msra.mxu0 0
    %2390 = vmatpush.bf16.msra.mxu0 0
    %2391 = vmatpush.bf16.msra.mxu0 0
    %2392 = vmatpush.bf16.msra.mxu0 0
    %2393 = vmatpush.bf16.msra.mxu0 0
    %2394 = vmatpush.bf16.msra.mxu0 %v2379
    %2395 = vmatmul.bf16.gmra.mxu0 %v2367
    %v2396 = vpop.f32.mrf.mxu0
    %v2397 = vadd.f32 0.0, %v2396
    %v2398 = vpop.f32.mrf.mxu0
    %v2399 = vadd.f32 0.0, %v2398
    %2400 = vmatmul.bf16.gmra.mxu0 %v2370
    %v2401 = vpop.f32.mrf.mxu0
    %v2402 = vadd.f32 0.0, %v2401
    %v2403 = vpop.f32.mrf.mxu0
    %v2404 = vadd.f32 0.0, %v2403
    %2405 = vmatmul.bf16.gmra.mxu0 %v2373
    %v2406 = vpop.f32.mrf.mxu0
    %v2407 = vadd.f32 0.0, %v2406
    %v2408 = vpop.f32.mrf.mxu0
    %v2409 = vadd.f32 0.0, %v2408
    %2410 = vmatmul.bf16.gmra.mxu0 %v2376
    %v2411 = vpop.f32.mrf.mxu0
    %v2412 = vadd.f32 0.0, %v2411
    %v2413 = vpop.f32.mrf.mxu0
    %v2414 = vadd.f32 0.0, %v2413
    %2415 = vdwg.mxu0
    %2416 = vmatpush.bf16.msra.mxu0 0
    %2417 = vmatpush.bf16.msra.mxu0 0
    %2418 = vmatpush.bf16.msra.mxu0 0
    %2419 = vmatpush.bf16.msra.mxu0 0
    %2420 = vmatpush.bf16.msra.mxu0 0
    %2421 = vmatpush.bf16.msra.mxu0 0
    %2422 = vmatpush.bf16.msra.mxu0 0
    %2423 = vmatpush.bf16.msra.mxu0 %v2381
    %2424 = vmatmul.bf16.gmra.mxu0 %v2367
    %v2425 = vpop.f32.mrf.mxu0
    %v2426 = vadd.f32 0.0, %v2425
    %v2427 = vpop.f32.mrf.mxu0
    %v2428 = vadd.f32 0.0, %v2427
    %2429 = vmatmul.bf16.gmra.mxu0 %v2370
    %v2430 = vpop.f32.mrf.mxu0
    %v2431 = vadd.f32 0.0, %v2430
    %v2432 = vpop.f32.mrf.mxu0
    %v2433 = vadd.f32 0.0, %v2432
    %2434 = vmatmul.bf16.gmra.mxu0 %v2373
    %v2435 = vpop.f32.mrf.mxu0
    %v2436 = vadd.f32 0.0, %v2435
    %v2437 = vpop.f32.mrf.mxu0
    %v2438 = vadd.f32 0.0, %v2437
    %2439 = vmatmul.bf16.gmra.mxu0 %v2376
    %v2440 = vpop.f32.mrf.mxu0
    %v2441 = vadd.f32 0.0, %v2440
    %v2442 = vpop.f32.mrf.mxu0
    %v2443 = vadd.f32 0.0, %v2442
    %2444 = vdwg.mxu0
    %2445 = vmatpush.bf16.msra.mxu0 0
    %2446 = vmatpush.bf16.msra.mxu0 0
    %2447 = vmatpush.bf16.msra.mxu0 0
    %2448 = vmatpush.bf16.msra.mxu0 0
    %2449 = vmatpush.bf16.msra.mxu0 0
    %2450 = vmatpush.bf16.msra.mxu0 0
    %2451 = vmatpush.bf16.msra.mxu0 0
    %2452 = vmatpush.bf16.msra.mxu0 %v2383
    %2453 = vmatmul.bf16.gmra.mxu0 %v2367
    %v2454 = vpop.f32.mrf.mxu0
    %v2455 = vadd.f32 0.0, %v2454
    %v2456 = vpop.f32.mrf.mxu0
    %v2457 = vadd.f32 0.0, %v2456
    %2458 = vmatmul.bf16.gmra.mxu0 %v2370
    %v2459 = vpop.f32.mrf.mxu0
    %v2460 = vadd.f32 0.0, %v2459
    %v2461 = vpop.f32.mrf.mxu0
    %v2462 = vadd.f32 0.0, %v2461
    %2463 = vmatmul.bf16.gmra.mxu0 %v2373
    %v2464 = vpop.f32.mrf.mxu0
    %v2465 = vadd.f32 0.0, %v2464
    %v2466 = vpop.f32.mrf.mxu0
    %v2467 = vadd.f32 0.0, %v2466
    %2468 = vmatmul.bf16.gmra.mxu0 %v2376
    %v2469 = vpop.f32.mrf.mxu0
    %v2470 = vadd.f32 0.0, %v2469
    %v2471 = vpop.f32.mrf.mxu0
    %v2472 = vadd.f32 0.0, %v2471
    %2473 = vdwg.mxu0
    %2474 = vmatpush.bf16.msra.mxu0 0
    %2475 = vmatpush.bf16.msra.mxu0 0
    %2476 = vmatpush.bf16.msra.mxu0 0
    %2477 = vmatpush.bf16.msra.mxu0 0
    %2478 = vmatpush.bf16.msra.mxu0 0
    %2479 = vmatpush.bf16.msra.mxu0 0
    %2480 = vmatpush.bf16.msra.mxu0 0
    %2481 = vmatpush.bf16.msra.mxu0 %v2385
    %2482 = vmatmul.bf16.gmra.mxu0 %v2367
    %v2483 = vpop.f32.mrf.mxu0
    %v2484 = vadd.f32 0.0, %v2483
    %v2485 = vpop.f32.mrf.mxu0
    %v2486 = vadd.f32 0.0, %v2485
    %2487 = vmatmul.bf16.gmra.mxu0 %v2370
    %v2488 = vpop.f32.mrf.mxu0
    %v2489 = vadd.f32 0.0, %v2488
    %v2490 = vpop.f32.mrf.mxu0
    %v2491 = vadd.f32 0.0, %v2490
    %2492 = vmatmul.bf16.gmra.mxu0 %v2373
    %v2493 = vpop.f32.mrf.mxu0
    %v2494 = vadd.f32 0.0, %v2493
    %v2495 = vpop.f32.mrf.mxu0
    %v2496 = vadd.f32 0.0, %v2495
    %2497 = vmatmul.bf16.gmra.mxu0 %v2376
    %v2498 = vpop.f32.mrf.mxu0
    %v2499 = vadd.f32 0.0, %v2498
    %v2500 = vpop.f32.mrf.mxu0
    %v2501 = vadd.f32 0.0, %v2500
    %2502 = vdwg.mxu0
    %v2503 = vadd.f32 %v1708, %v2397
    %v2504 = vadd.f32 %v1737, %v2426
    %v2505 = vadd.f32 %v1766, %v2455
    %v2506 = vadd.f32 %v1795, %v2484
    %v2507 = vadd.f32 %v1710, %v2399
    %v2508 = vadd.f32 %v1739, %v2428
    %v2509 = vadd.f32 %v1768, %v2457
    %v2510 = vadd.f32 %v1797, %v2486
    %v2511 = vadd.f32 %v1713, %v2402
    %v2512 = vadd.f32 %v1742, %v2431
    %v2513 = vadd.f32 %v1771, %v2460
    %v2514 = vadd.f32 %v1800, %v2489
    %v2515 = vadd.f32 %v1715, %v2404
    %v2516 = vadd.f32 %v1744, %v2433
    %v2517 = vadd.f32 %v1773, %v2462
    %v2518 = vadd.f32 %v1802, %v2491
    %v2519 = vadd.f32 %v1718, %v2407
    %v2520 = vadd.f32 %v1747, %v2436
    %v2521 = vadd.f32 %v1776, %v2465
    %v2522 = vadd.f32 %v1805, %v2494
    %v2523 = vadd.f32 %v1720, %v2409
    %v2524 = vadd.f32 %v1749, %v2438
    %v2525 = vadd.f32 %v1778, %v2467
    %v2526 = vadd.f32 %v1807, %v2496
    %v2527 = vadd.f32 %v1723, %v2412
    %v2528 = vadd.f32 %v1752, %v2441
    %v2529 = vadd.f32 %v1781, %v2470
    %v2530 = vadd.f32 %v1810, %v2499
    %v2531 = vadd.f32 %v1725, %v2414
    %v2532 = vadd.f32 %v1754, %v2443
    %v2533 = vadd.f32 %v1783, %v2472
    %v2534 = vadd.f32 %v1812, %v2501
    %v2535 = vsub.f32 0.0, %v2503
    %v2536 = vsub.f32 0.0, %v2504
    %v2537 = vsub.f32 0.0, %v2505
    %v2538 = vsub.f32 0.0, %v2506
    %v2539 = vsub.f32 0.0, %v2507
    %v2540 = vsub.f32 0.0, %v2508
    %v2541 = vsub.f32 0.0, %v2509
    %v2542 = vsub.f32 0.0, %v2510
    %v2543 = vsub.f32 0.0, %v2511
    %v2544 = vsub.f32 0.0, %v2512
    %v2545 = vsub.f32 0.0, %v2513
    %v2546 = vsub.f32 0.0, %v2514
    %v2547 = vsub.f32 0.0, %v2515
    %v2548 = vsub.f32 0.0, %v2516
    %v2549 = vsub.f32 0.0, %v2517
    %v2550 = vsub.f32 0.0, %v2518
    %v2551 = vsub.f32 0.0, %v2519
    %v2552 = vsub.f32 0.0, %v2520
    %v2553 = vsub.f32 0.0, %v2521
    %v2554 = vsub.f32 0.0, %v2522
    %v2555 = vsub.f32 0.0, %v2523
    %v2556 = vsub.f32 0.0, %v2524
    %v2557 = vsub.f32 0.0, %v2525
    %v2558 = vsub.f32 0.0, %v2526
    %v2559 = vsub.f32 0.0, %v2527
    %v2560 = vsub.f32 0.0, %v2528
    %v2561 = vsub.f32 0.0, %v2529
    %v2562 = vsub.f32 0.0, %v2530
    %v2563 = vsub.f32 0.0, %v2531
    %v2564 = vsub.f32 0.0, %v2532
    %v2565 = vsub.f32 0.0, %v2533
    %v2566 = vsub.f32 0.0, %v2534
    %v2567 = vmul.f32 %v2535, 1.442695
    %v2568 = vpow.pop %v2567
    %v2569 = vmul.f32 %v2536, 1.442695
    %v2570 = vpow.pop %v2569
    %v2571 = vmul.f32 %v2537, 1.442695
    %v2572 = vpow.pop %v2571
    %v2573 = vmul.f32 %v2538, 1.442695
    %v2574 = vpow.pop %v2573
    %v2575 = vmul.f32 %v2539, 1.442695
    %v2576 = vpow.pop %v2575
    %v2577 = vmul.f32 %v2540, 1.442695
    %v2578 = vpow.pop %v2577
    %v2579 = vmul.f32 %v2541, 1.442695
    %v2580 = vpow.pop %v2579
    %v2581 = vmul.f32 %v2542, 1.442695
    %v2582 = vpow.pop %v2581
    %v2583 = vmul.f32 %v2543, 1.442695
    %v2584 = vpow.pop %v2583
    %v2585 = vmul.f32 %v2544, 1.442695
    %v2586 = vpow.pop %v2585
    %v2587 = vmul.f32 %v2545, 1.442695
    %v2588 = vpow.pop %v2587
    %v2589 = vmul.f32 %v2546, 1.442695
    %v2590 = vpow.pop %v2589
    %v2591 = vmul.f32 %v2547, 1.442695
    %v2592 = vpow.pop %v2591
    %v2593 = vmul.f32 %v2548, 1.442695
    %v2594 = vpow.pop %v2593
    %v2595 = vmul.f32 %v2549, 1.442695
    %v2596 = vpow.pop %v2595
    %v2597 = vmul.f32 %v2550, 1.442695
    %v2598 = vpow.pop %v2597
    %v2599 = vmul.f32 %v2551, 1.442695
    %v2600 = vpow.pop %v2599
    %v2601 = vmul.f32 %v2552, 1.442695
    %v2602 = vpow.pop %v2601
    %v2603 = vmul.f32 %v2553, 1.442695
    %v2604 = vpow.pop %v2603
    %v2605 = vmul.f32 %v2554, 1.442695
    %v2606 = vpow.pop %v2605
    %v2607 = vmul.f32 %v2555, 1.442695
    %v2608 = vpow.pop %v2607
    %v2609 = vmul.f32 %v2556, 1.442695
    %v2610 = vpow.pop %v2609
    %v2611 = vmul.f32 %v2557, 1.442695
    %v2612 = vpow.pop %v2611
    %v2613 = vmul.f32 %v2558, 1.442695
    %v2614 = vpow.pop %v2613
    %v2615 = vmul.f32 %v2559, 1.442695
    %v2616 = vpow.pop %v2615
    %v2617 = vmul.f32 %v2560, 1.442695
    %v2618 = vpow.pop %v2617
    %v2619 = vmul.f32 %v2561, 1.442695
    %v2620 = vpow.pop %v2619
    %v2621 = vmul.f32 %v2562, 1.442695
    %v2622 = vpow.pop %v2621
    %v2623 = vmul.f32 %v2563, 1.442695
    %v2624 = vpow.pop %v2623
    %v2625 = vmul.f32 %v2564, 1.442695
    %v2626 = vpow.pop %v2625
    %v2627 = vmul.f32 %v2565, 1.442695
    %v2628 = vpow.pop %v2627
    %v2629 = vmul.f32 %v2566, 1.442695
    %v2630 = vpow.pop %v2629
    %v2631 = vadd.f32 %v2568, 1.0
    %v2632 = vadd.f32 %v2570, 1.0
    %v2633 = vadd.f32 %v2572, 1.0
    %v2634 = vadd.f32 %v2574, 1.0
    %v2635 = vadd.f32 %v2576, 1.0
    %v2636 = vadd.f32 %v2578, 1.0
    %v2637 = vadd.f32 %v2580, 1.0
    %v2638 = vadd.f32 %v2582, 1.0
    %v2639 = vadd.f32 %v2584, 1.0
    %v2640 = vadd.f32 %v2586, 1.0
    %v2641 = vadd.f32 %v2588, 1.0
    %v2642 = vadd.f32 %v2590, 1.0
    %v2643 = vadd.f32 %v2592, 1.0
    %v2644 = vadd.f32 %v2594, 1.0
    %v2645 = vadd.f32 %v2596, 1.0
    %v2646 = vadd.f32 %v2598, 1.0
    %v2647 = vadd.f32 %v2600, 1.0
    %v2648 = vadd.f32 %v2602, 1.0
    %v2649 = vadd.f32 %v2604, 1.0
    %v2650 = vadd.f32 %v2606, 1.0
    %v2651 = vadd.f32 %v2608, 1.0
    %v2652 = vadd.f32 %v2610, 1.0
    %v2653 = vadd.f32 %v2612, 1.0
    %v2654 = vadd.f32 %v2614, 1.0
    %v2655 = vadd.f32 %v2616, 1.0
    %v2656 = vadd.f32 %v2618, 1.0
    %v2657 = vadd.f32 %v2620, 1.0
    %v2658 = vadd.f32 %v2622, 1.0
    %v2659 = vadd.f32 %v2624, 1.0
    %v2660 = vadd.f32 %v2626, 1.0
    %v2661 = vadd.f32 %v2628, 1.0
    %v2662 = vadd.f32 %v2630, 1.0
    %v2663 = vrcp.pop %v2631
    %v2664 = vrcp.pop %v2632
    %v2665 = vrcp.pop %v2633
    %v2666 = vrcp.pop %v2634
    %v2667 = vrcp.pop %v2635
    %v2668 = vrcp.pop %v2636
    %v2669 = vrcp.pop %v2637
    %v2670 = vrcp.pop %v2638
    %v2671 = vrcp.pop %v2639
    %v2672 = vrcp.pop %v2640
    %v2673 = vrcp.pop %v2641
    %v2674 = vrcp.pop %v2642
    %v2675 = vrcp.pop %v2643
    %v2676 = vrcp.pop %v2644
    %v2677 = vrcp.pop %v2645
    %v2678 = vrcp.pop %v2646
    %v2679 = vrcp.pop %v2647
    %v2680 = vrcp.pop %v2648
    %v2681 = vrcp.pop %v2649
    %v2682 = vrcp.pop %v2650
    %v2683 = vrcp.pop %v2651
    %v2684 = vrcp.pop %v2652
    %v2685 = vrcp.pop %v2653
    %v2686 = vrcp.pop %v2654
    %v2687 = vrcp.pop %v2655
    %v2688 = vrcp.pop %v2656
    %v2689 = vrcp.pop %v2657
    %v2690 = vrcp.pop %v2658
    %v2691 = vrcp.pop %v2659
    %v2692 = vrcp.pop %v2660
    %v2693 = vrcp.pop %v2661
    %v2694 = vrcp.pop %v2662
    %v2695 = vsub.f32 %v1366, %v77
    %v2696 = vsub.f32 %v1395, %v78
    %v2697 = vsub.f32 %v1424, %v79
    %v2698 = vsub.f32 %v1453, %v80
    %v2699 = vsub.f32 %v1368, %v81
    %v2700 = vsub.f32 %v1397, %v82
    %v2701 = vsub.f32 %v1426, %v83
    %v2702 = vsub.f32 %v1455, %v84
    %v2703 = vsub.f32 %v1371, %v85
    %v2704 = vsub.f32 %v1400, %v86
    %v2705 = vsub.f32 %v1429, %v87
    %v2706 = vsub.f32 %v1458, %v88
    %v2707 = vsub.f32 %v1373, %v89
    %v2708 = vsub.f32 %v1402, %v90
    %v2709 = vsub.f32 %v1431, %v91
    %v2710 = vsub.f32 %v1460, %v92
    %v2711 = vsub.f32 %v1376, %v93
    %v2712 = vsub.f32 %v1405, %v94
    %v2713 = vsub.f32 %v1434, %v95
    %v2714 = vsub.f32 %v1463, %v96
    %v2715 = vsub.f32 %v1378, %v97
    %v2716 = vsub.f32 %v1407, %v98
    %v2717 = vsub.f32 %v1436, %v99
    %v2718 = vsub.f32 %v1465, %v100
    %v2719 = vsub.f32 %v1381, %v101
    %v2720 = vsub.f32 %v1410, %v102
    %v2721 = vsub.f32 %v1439, %v103
    %v2722 = vsub.f32 %v1468, %v104
    %v2723 = vsub.f32 %v1383, %v105
    %v2724 = vsub.f32 %v1412, %v106
    %v2725 = vsub.f32 %v1441, %v107
    %v2726 = vsub.f32 %v1470, %v108
    %v2727 = vmul.f32 %v2663, %v2695
    %v2728 = vmul.f32 %v2664, %v2696
    %v2729 = vmul.f32 %v2665, %v2697
    %v2730 = vmul.f32 %v2666, %v2698
    %v2731 = vmul.f32 %v2667, %v2699
    %v2732 = vmul.f32 %v2668, %v2700
    %v2733 = vmul.f32 %v2669, %v2701
    %v2734 = vmul.f32 %v2670, %v2702
    %v2735 = vmul.f32 %v2671, %v2703
    %v2736 = vmul.f32 %v2672, %v2704
    %v2737 = vmul.f32 %v2673, %v2705
    %v2738 = vmul.f32 %v2674, %v2706
    %v2739 = vmul.f32 %v2675, %v2707
    %v2740 = vmul.f32 %v2676, %v2708
    %v2741 = vmul.f32 %v2677, %v2709
    %v2742 = vmul.f32 %v2678, %v2710
    %v2743 = vmul.f32 %v2679, %v2711
    %v2744 = vmul.f32 %v2680, %v2712
    %v2745 = vmul.f32 %v2681, %v2713
    %v2746 = vmul.f32 %v2682, %v2714
    %v2747 = vmul.f32 %v2683, %v2715
    %v2748 = vmul.f32 %v2684, %v2716
    %v2749 = vmul.f32 %v2685, %v2717
    %v2750 = vmul.f32 %v2686, %v2718
    %v2751 = vmul.f32 %v2687, %v2719
    %v2752 = vmul.f32 %v2688, %v2720
    %v2753 = vmul.f32 %v2689, %v2721
    %v2754 = vmul.f32 %v2690, %v2722
    %v2755 = vmul.f32 %v2691, %v2723
    %v2756 = vmul.f32 %v2692, %v2724
    %v2757 = vmul.f32 %v2693, %v2725
    %v2758 = vmul.f32 %v2694, %v2726
    %v2759 = vadd.f32 %v77, %v2727
    %v2760 = vadd.f32 %v78, %v2728
    %v2761 = vadd.f32 %v79, %v2729
    %v2762 = vadd.f32 %v80, %v2730
    %v2763 = vadd.f32 %v81, %v2731
    %v2764 = vadd.f32 %v82, %v2732
    %v2765 = vadd.f32 %v83, %v2733
    %v2766 = vadd.f32 %v84, %v2734
    %v2767 = vadd.f32 %v85, %v2735
    %v2768 = vadd.f32 %v86, %v2736
    %v2769 = vadd.f32 %v87, %v2737
    %v2770 = vadd.f32 %v88, %v2738
    %v2771 = vadd.f32 %v89, %v2739
    %v2772 = vadd.f32 %v90, %v2740
    %v2773 = vadd.f32 %v91, %v2741
    %v2774 = vadd.f32 %v92, %v2742
    %v2775 = vadd.f32 %v93, %v2743
    %v2776 = vadd.f32 %v94, %v2744
    %v2777 = vadd.f32 %v95, %v2745
    %v2778 = vadd.f32 %v96, %v2746
    %v2779 = vadd.f32 %v97, %v2747
    %v2780 = vadd.f32 %v98, %v2748
    %v2781 = vadd.f32 %v99, %v2749
    %v2782 = vadd.f32 %v100, %v2750
    %v2783 = vadd.f32 %v101, %v2751
    %v2784 = vadd.f32 %v102, %v2752
    %v2785 = vadd.f32 %v103, %v2753
    %v2786 = vadd.f32 %v104, %v2754
    %v2787 = vadd.f32 %v105, %v2755
    %v2788 = vadd.f32 %v106, %v2756
    %v2789 = vadd.f32 %v107, %v2757
    %v2790 = vadd.f32 %v108, %v2758
    %v2791 = vmul.f32 %v2759, 2.0
    %v2792 = vmul.f32 %v2760, 2.0
    %v2793 = vmul.f32 %v2761, 2.0
    %v2794 = vmul.f32 %v2762, 2.0
    %v2795 = vmul.f32 %v2763, 2.0
    %v2796 = vmul.f32 %v2764, 2.0
    %v2797 = vmul.f32 %v2765, 2.0
    %v2798 = vmul.f32 %v2766, 2.0
    %v2799 = vmul.f32 %v2767, 2.0
    %v2800 = vmul.f32 %v2768, 2.0
    %v2801 = vmul.f32 %v2769, 2.0
    %v2802 = vmul.f32 %v2770, 2.0
    %v2803 = vmul.f32 %v2771, 2.0
    %v2804 = vmul.f32 %v2772, 2.0
    %v2805 = vmul.f32 %v2773, 2.0
    %v2806 = vmul.f32 %v2774, 2.0
    %v2807 = vmul.f32 %v2775, 2.0
    %v2808 = vmul.f32 %v2776, 2.0
    %v2809 = vmul.f32 %v2777, 2.0
    %v2810 = vmul.f32 %v2778, 2.0
    %v2811 = vmul.f32 %v2779, 2.0
    %v2812 = vmul.f32 %v2780, 2.0
    %v2813 = vmul.f32 %v2781, 2.0
    %v2814 = vmul.f32 %v2782, 2.0
    %v2815 = vmul.f32 %v2783, 2.0
    %v2816 = vmul.f32 %v2784, 2.0
    %v2817 = vmul.f32 %v2785, 2.0
    %v2818 = vmul.f32 %v2786, 2.0
    %v2819 = vmul.f32 %v2787, 2.0
    %v2820 = vmul.f32 %v2788, 2.0
    %v2821 = vmul.f32 %v2789, 2.0
    %v2822 = vmul.f32 %v2790, 2.0
    %v2823 = vmax.f32 %v2791, 0.0
    %v2824 = vmax.f32 %v2792, 0.0
    %v2825 = vmax.f32 %v2793, 0.0
    %v2826 = vmax.f32 %v2794, 0.0
    %v2827 = vmax.f32 %v2795, 0.0
    %v2828 = vmax.f32 %v2796, 0.0
    %v2829 = vmax.f32 %v2797, 0.0
    %v2830 = vmax.f32 %v2798, 0.0
    %v2831 = vmax.f32 %v2799, 0.0
    %v2832 = vmax.f32 %v2800, 0.0
    %v2833 = vmax.f32 %v2801, 0.0
    %v2834 = vmax.f32 %v2802, 0.0
    %v2835 = vmax.f32 %v2803, 0.0
    %v2836 = vmax.f32 %v2804, 0.0
    %v2837 = vmax.f32 %v2805, 0.0
    %v2838 = vmax.f32 %v2806, 0.0
    %v2839 = vmax.f32 %v2807, 0.0
    %v2840 = vmax.f32 %v2808, 0.0
    %v2841 = vmax.f32 %v2809, 0.0
    %v2842 = vmax.f32 %v2810, 0.0
    %v2843 = vmax.f32 %v2811, 0.0
    %v2844 = vmax.f32 %v2812, 0.0
    %v2845 = vmax.f32 %v2813, 0.0
    %v2846 = vmax.f32 %v2814, 0.0
    %v2847 = vmax.f32 %v2815, 0.0
    %v2848 = vmax.f32 %v2816, 0.0
    %v2849 = vmax.f32 %v2817, 0.0
    %v2850 = vmax.f32 %v2818, 0.0
    %v2851 = vmax.f32 %v2819, 0.0
    %v2852 = vmax.f32 %v2820, 0.0
    %v2853 = vmax.f32 %v2821, 0.0
    %v2854 = vmax.f32 %v2822, 0.0
    %2855 = vst [vmem:[#allocation3] sm:$0xff] %v2823
    %2856 = vst [vmem:[#allocation3 + $0x8] sm:$0xff] %v2824
    %2857 = vst [vmem:[#allocation3 + $0x10] sm:$0xff] %v2825
    %2858 = vst [vmem:[#allocation3 + $0x18] sm:$0xff] %v2826
    %2859 = vst [vmem:[#allocation3 + $0x20] sm:$0xff] %v2827
    %2860 = vst [vmem:[#allocation3 + $0x28] sm:$0xff] %v2828
    %2861 = vst [vmem:[#allocation3 + $0x30] sm:$0xff] %v2829
    %2862 = vst [vmem:[#allocation3 + $0x38] sm:$0xff] %v2830
    %2863 = vst [vmem:[#allocation3 + $0x40] sm:$0xff] %v2831
    %2864 = vst [vmem:[#allocation3 + $0x48] sm:$0xff] %v2832
    %2865 = vst [vmem:[#allocation3 + $0x50] sm:$0xff] %v2833
    %2866 = vst [vmem:[#allocation3 + $0x58] sm:$0xff] %v2834
    %2867 = vst [vmem:[#allocation3 + $0x60] sm:$0xff] %v2835
    %2868 = vst [vmem:[#allocation3 + $0x68] sm:$0xff] %v2836
    %2869 = vst [vmem:[#allocation3 + $0x70] sm:$0xff] %v2837
    %2870 = vst [vmem:[#allocation3 + $0x78] sm:$0xff] %v2838
    %2871 = vst [vmem:[#allocation3 + $0x80] sm:$0xff] %v2839
    %2872 = vst [vmem:[#allocation3 + $0x88] sm:$0xff] %v2840
    %2873 = vst [vmem:[#allocation3 + $0x90] sm:$0xff] %v2841
    %2874 = vst [vmem:[#allocation3 + $0x98] sm:$0xff] %v2842
    %2875 = vst [vmem:[#allocation3 + $0xa0] sm:$0xff] %v2843
    %2876 = vst [vmem:[#allocation3 + $0xa8] sm:$0xff] %v2844
    %2877 = vst [vmem:[#allocation3 + $0xb0] sm:$0xff] %v2845
    %2878 = vst [vmem:[#allocation3 + $0xb8] sm:$0xff] %v2846
    %2879 = vst [vmem:[#allocation3 + $0xc0] sm:$0xff] %v2847
    %2880 = vst [vmem:[#allocation3 + $0xc8] sm:$0xff] %v2848
    %2881 = vst [vmem:[#allocation3 + $0xd0] sm:$0xff] %v2849
    %2882 = vst [vmem:[#allocation3 + $0xd8] sm:$0xff] %v2850
    %2883 = vst [vmem:[#allocation3 + $0xe0] sm:$0xff] %v2851
    %2884 = vst [vmem:[#allocation3 + $0xe8] sm:$0xff] %v2852
    %2885 = vst [vmem:[#allocation3 + $0xf0] sm:$0xff] %v2853
    %2886 = vst [vmem:[#allocation3 + $0xf8] sm:$0xff] %v2854
    // Predicated region
    $region74: #{tpu_custom_call.1} parent=1 // pred_check
      _
    $region75: #{tpu_custom_call.1} parent=1 // pred_check_branch
      %2888 = sbr.rel (0) target = $region77
    $region76: #{tpu_custom_call.1} parent=1 // pred_region
      %2890 = vsyncadd [#allocation4], 0
      %s2891 = sshll.u32 [#allocation3], 4
      %s2892 = int_to_ptr.vmem [resolvable:$true] %s2891
      %s2893 = sshll.u32 %s18, 4
      %s2894 = int_to_ptr.hbm [resolvable:$true] %s2893
      %2899 = dma.vmem_to_hbm [thread:$0]  %s2892, 4096, %s2894, [#allocation4], 512, 512, 32
    $region77: #{tpu_custom_call.1} parent=1 // pred_fallthru
      _
    // Predicated region
    $region78: #{tpu_custom_call.1} parent=1 // pred_check
      _
    $region79: #{tpu_custom_call.1} parent=1 // pred_check_branch
      %2901 = sbr.rel (0) target = $region81
    $region80: #{tpu_custom_call.1} parent=1 // pred_region
      %2903 = dma.done [#allocation4], 4096
    $region81: #{tpu_custom_call.1} parent=1 // pred_fallthru
      _
    %2904 = vsyncpa [#allocation4], 1

</llo_original>
